<compile_context>
chip_gen: v5e
topology: v5e:2x2
jax: 0.10.0
libtpu: 0.0.40
codegen_flags: <defaults>
</compile_context>

<pallas_src>
import functools

import jax
import jax.numpy as jnp
from jax.experimental import pallas as pl
from jax.experimental.pallas import tpu as pltpu

# ----------------------------- config -----------------------------
IMG = 64
PATCH = 32
CHANS = 3
HIDDEN = 128
HEADS = 4
MLP = 256
LAYERS = 2
NUM_PATCHES = (IMG // PATCH) * (IMG // PATCH)   # 4
SEQ = NUM_PATCHES + 1                            # 5 (with class token)
EPS = 1e-6                                       # torchvision ViT LayerNorm eps
PATCH_K_TILE = 1024                              # contraction tile for conv_proj matmul

WEIGHT_NAMES = ("ln1_w", "ln1_b", "wq", "bq", "wk", "bk", "wv", "bv",
                "wo", "bo", "ln2_w", "ln2_b", "w1", "b1", "w2", "b2")


# ------------------------- in-kernel helpers -------------------------
def _erf(x):
    # TODO(synk): exact torch.erf replaced by Abramowitz–Stegun 7.1.26 approximation
    # (max abs err ~1.5e-7) since erf is not a Mosaic primitive.
    a1, a2, a3, a4, a5 = 0.254829592, -0.284496736, 1.421413741, -1.453152027, 1.061405429
    p = 0.3275911
    sgn = jnp.where(x >= 0.0, 1.0, -1.0)
    ax = jnp.abs(x)
    t = 1.0 / (1.0 + p * ax)
    poly = ((((a5 * t + a4) * t + a3) * t + a2) * t + a1) * t
    return sgn * (1.0 - poly * jnp.exp(-ax * ax))


def _gelu_exact(x):
    # nn.GELU() default (erf-based), matching torchvision MLPBlock.
    return 0.5 * x * (1.0 + _erf(x * 0.70710678118654752))


def _layernorm(x, w, b, eps=EPS):
    mu = jnp.mean(x, axis=-1, keepdims=True)
    var = jnp.mean((x - mu) ** 2, axis=-1, keepdims=True)
    return (x - mu) * jax.lax.rsqrt(var + eps) * w + b


# ------------------------------ kernels ------------------------------
def patch_embed_kernel(x_ref, w_ref, b_ref, o_ref, acc_ref):
    # Tiled over the K = C*P*P contraction; f32 accumulator, bf16 MXU inputs.
    @pl.when(pl.program_id(0) == 0)
    def _():
        acc_ref[...] = jnp.zeros_like(acc_ref)

    acc_ref[...] += jnp.dot(x_ref[...], w_ref[...], preferred_element_type=jnp.float32)

    @pl.when(pl.program_id(0) == pl.num_programs(0) - 1)
    def _():
        o_ref[...] = (acc_ref[...] + b_ref[...]).astype(o_ref.dtype)


def encoder_stack_kernel(x_ref, ln1w_ref, ln1b_ref, wq_ref, bq_ref, wk_ref, bk_ref,
                         wv_ref, bv_ref, wo_ref, bo_ref, ln2w_ref, ln2b_ref,
                         w1_ref, b1_ref, w2_ref, b2_ref, lnfw_ref, lnfb_ref,
                         o_ref, x_state, *, num_heads):
    l = pl.program_id(1)
    n_layers = pl.num_programs(1)

    # Load the residual stream into VMEM scratch once per batch element.
    @pl.when(l == 0)
    def _():
        x_state[...] = x_ref[...]

    x = x_state[...]                                  # [S, D] f32 residual stream
    S, D = x.shape
    dh = D // num_heads
    scale = 1.0 / float(dh) ** 0.5

    # ---- multi-head self-attention block (pre-LN) ----
    h = _layernorm(x, ln1w_ref[...], ln1b_ref[...])   # f32 stats
    hb = jnp.broadcast_to(h.astype(jnp.bfloat16)[None], (num_heads, S, D))

    # Head-major projections: one batched einsum per Q/K/V, K = D contraction depth,
    # Q/K/V emitted directly as [H, S, dh] (no intra-lane per-head slicing).
    q = jnp.einsum("hsd,hde->hse", hb, wq_ref[...],
                   preferred_element_type=jnp.float32) + bq_ref[...]
    k = jnp.einsum("hsd,hde->hse", hb, wk_ref[...],
                   preferred_element_type=jnp.float32) + bk_ref[...]
    v = jnp.einsum("hsd,hde->hse", hb, wv_ref[...],
                   preferred_element_type=jnp.float32) + bv_ref[...]
    q = q * scale

    # Batched scores / softmax / A·V over all heads at once (f32 softmax math).
    s = jnp.einsum("hqd,hkd->hqk", q.astype(jnp.bfloat16), k.astype(jnp.bfloat16),
                   preferred_element_type=jnp.float32)
    s = s - jnp.max(s, axis=-1, keepdims=True)
    e = jnp.exp(s)
    p = e * pl.reciprocal(jnp.sum(e, axis=-1, keepdims=True), approx=True)
    o = jnp.einsum("hqk,hkd->hqd", p.astype(jnp.bfloat16), v.astype(jnp.bfloat16),
                   preferred_element_type=jnp.float32)          # [H, S, dh]

    # Concat heads (cheap leading-dim indexing) -> ONE [S,D]x[D,D] output projection.
    o_cat = jnp.concatenate([o[i] for i in range(num_heads)], axis=-1)   # [S, D]
    attn = jnp.dot(o_cat.astype(jnp.bfloat16), wo_ref[...],
                   preferred_element_type=jnp.float32) + bo_ref[...]
    x = x + attn

    # ---- MLP block (pre-LN) ----
    h2 = _layernorm(x, ln2w_ref[...], ln2b_ref[...])
    m = jnp.dot(h2.astype(jnp.bfloat16), w1_ref[...],
                preferred_element_type=jnp.float32) + b1_ref[...]
    m = _gelu_exact(m)
    m = jnp.dot(m.astype(jnp.bfloat16), w2_ref[...],
                preferred_element_type=jnp.float32) + b2_ref[...]
    x = x + m
    x_state[...] = x

    # Final LayerNorm + CLS pooling fused into the last layer step; only [1, D] leaves.
    @pl.when(l == n_layers - 1)
    def _():
        cls = x[0:1, :]
        o_ref[...] = _layernorm(cls, lnfw_ref[...], lnfb_ref[...]).astype(o_ref.dtype)


# ---------------------------- wrappers ----------------------------
def patch_embed(flat_patches, w, b):
    # flat_patches: [N, K] bf16 (K = C*P*P, flattened in (C, kh, kw) Conv2d order).
    N, K = flat_patches.shape
    D = w.shape[1]
    tk = min(PATCH_K_TILE, K)
    assert K % tk == 0
    return pl.pallas_call(
        patch_embed_kernel,
        out_shape=jax.ShapeDtypeStruct((N, D), jnp.float32),
        grid=(K // tk,),
        in_specs=[
            pl.BlockSpec((N, tk), lambda kk: (0, kk)),
            pl.BlockSpec((tk, D), lambda kk: (kk, 0)),
            pl.BlockSpec((1, D), lambda kk: (0, 0)),
        ],
        out_specs=pl.BlockSpec((N, D), lambda kk: (0, 0)),
        scratch_shapes=[pltpu.VMEM((N, D), jnp.float32)],
        compiler_params=pltpu.CompilerParams(dimension_semantics=("arbitrary",)),
    )(flat_patches, w, b)


def encoder_stack(seq, layer_params, lnf_w, lnf_b, num_heads=HEADS):
    # One pallas_call for all encoder layers + final LN + CLS pooling.
    B, S, D = seq.shape
    L = layer_params["wq"].shape[0]
    weights = [layer_params[name] for name in WEIGHT_NAMES]

    def layer_spec(p):
        nd = p.ndim
        return pl.BlockSpec((None,) + tuple(p.shape[1:]),
                            lambda b, l: (l,) + (0,) * (nd - 1))

    in_specs = [pl.BlockSpec((None, S, D), lambda b, l: (b, 0, 0))]   # x: fixed per batch
    in_specs += [layer_spec(p) for p in weights]                       # layer-indexed weights
    in_specs += [pl.BlockSpec((1, D), lambda b, l: (0, 0)),            # final LN weight
                 pl.BlockSpec((1, D), lambda b, l: (0, 0))]            # final LN bias

    pooled = pl.pallas_call(
        functools.partial(encoder_stack_kernel, num_heads=num_heads),
        out_shape=jax.ShapeDtypeStruct((B, 1, D), jnp.float32),
        grid=(B, L),
        in_specs=in_specs,
        out_specs=pl.BlockSpec((None, 1, D), lambda b, l: (b, 0, 0)),
        scratch_shapes=[pltpu.VMEM((S, D), jnp.float32)],              # resident residual
        compiler_params=pltpu.CompilerParams(
            dimension_semantics=("parallel", "arbitrary")),
    )(seq, *weights, lnf_w, lnf_b)
    return pooled.reshape(B, D)


def extract_patches(x, patch):
    # x: [B, C, H, W] -> [B, Np, C*P*P], matching Conv2d(kernel=stride=P) im2col order.
    B, C, H, W = x.shape
    x = x.reshape(B, C, H // patch, patch, W // patch, patch)
    x = x.transpose(0, 2, 4, 1, 3, 5)
    return x.reshape(B, (H // patch) * (W // patch), C * patch * patch)


def vit_forward(x, params):
    B = x.shape[0]
    patches = extract_patches(x, PATCH)                                   # [B, Np, K]
    flat = patches.reshape(B * NUM_PATCHES, -1).astype(jnp.bfloat16)
    emb = patch_embed(flat, params["conv_w"], params["conv_b"])           # [B*Np, D] f32
    emb = emb.reshape(B, NUM_PATCHES, HIDDEN)
    cls = jnp.broadcast_to(params["cls_token"], (B, 1, HIDDEN))
    seq = jnp.concatenate([cls, emb], axis=1) + params["pos_emb"]         # [B, S, D]
    return encoder_stack(seq, params["layers"], params["lnf_w"], params["lnf_b"])


# ------------------------- deterministic params -------------------------
def _qkv_head_major(qkv_w, qkv_b, num_heads):
    # qkv_w: [D, 3D] column-major ([:, :D]=Q, [:, D:2D]=K, [:, 2D:]=V), head h in
    # columns [h*dh:(h+1)*dh] of each block (same packing as nn.MultiheadAttention).
    D = qkv_w.shape[0]
    dh = D // num_heads

    def cvt_w(w):   # [D, D] -> [H, D, dh]
        return w.reshape(D, num_heads, dh).transpose(1, 0, 2)

    def cvt_b(b):   # [D] -> [H, 1, dh]
        return b.reshape(num_heads, 1, dh)

    wq, wk, wv = qkv_w[:, :D], qkv_w[:, D:2 * D], qkv_w[:, 2 * D:]
    bq, bk, bv = qkv_b[:D], qkv_b[D:2 * D], qkv_b[2 * D:]
    return (cvt_w(wq), cvt_w(wk), cvt_w(wv)), (cvt_b(bq), cvt_b(bk), cvt_b(bv))


def init_params(key):
    def nrm(k, shape, std=0.02):
        return std * jax.random.normal(k, shape, jnp.float32)

    keys = iter(jax.random.split(key, 4 + 4 * LAYERS))
    per_layer = {name: [] for name in WEIGHT_NAMES}
    for _ in range(LAYERS):
        qkv_w = nrm(next(keys), (HIDDEN, 3 * HIDDEN))
        qkv_b = jnp.zeros((3 * HIDDEN,), jnp.float32)
        (wq, wk, wv), (bq, bk, bv) = _qkv_head_major(qkv_w, qkv_b, HEADS)
        vals = dict(
            ln1_w=jnp.ones((1, HIDDEN), jnp.float32),
            ln1_b=jnp.zeros((1, HIDDEN), jnp.float32),
            wq=wq.astype(jnp.bfloat16), bq=bq,
            wk=wk.astype(jnp.bfloat16), bk=bk,
            wv=wv.astype(jnp.bfloat16), bv=bv,
            wo=nrm(next(keys), (HIDDEN, HIDDEN)).astype(jnp.bfloat16),
            bo=jnp.zeros((1, HIDDEN), jnp.float32),
            ln2_w=jnp.ones((1, HIDDEN), jnp.float32),
            ln2_b=jnp.zeros((1, HIDDEN), jnp.float32),
            w1=nrm(next(keys), (HIDDEN, MLP)).astype(jnp.bfloat16),
            b1=jnp.zeros((1, MLP), jnp.float32),
            w2=nrm(next(keys), (MLP, HIDDEN)).astype(jnp.bfloat16),
            b2=jnp.zeros((1, HIDDEN), jnp.float32),
        )
        for name, v in vals.items():
            per_layer[name].append(v)

    params = {
        "conv_w": nrm(next(keys), (CHANS * PATCH * PATCH, HIDDEN)).astype(jnp.bfloat16),
        "conv_b": jnp.zeros((1, HIDDEN), jnp.float32),
        "cls_token": jnp.zeros((1, 1, HIDDEN), jnp.float32),
        "pos_emb": nrm(next(keys), (1, SEQ, HIDDEN)),
        "lnf_w": jnp.ones((1, HIDDEN), jnp.float32),
        "lnf_b": jnp.zeros((1, HIDDEN), jnp.float32),
        "layers": {name: jnp.stack(v, axis=0) for name, v in per_layer.items()},
    }
    return params


if __name__ == "__main__":
    key = jax.random.PRNGKey(0)
    kx, kp = jax.random.split(key)
    x = jax.random.normal(kx, (2, CHANS, IMG, IMG), jnp.float32)   # NCHW like PyTorch
    params = init_params(kp)

    fwd = jax.jit(lambda inp: vit_forward(inp, params))
    out = fwd(x)
    jax.block_until_ready(out)
    assert out.shape == (2, HIDDEN) and out.dtype == jnp.float32
    assert bool(jnp.all(jnp.isfinite(out)))
    print("KERNEL_OK")
</pallas_src>

<mosaic_0001>
module attributes {stable_mosaic.version = 11 : i64} {
  func.func @patch_embed_kernel(%arg0: i32, %arg1: memref<8x1024xbf16, #tpu.memory_space<vmem>>, %arg2: memref<1024x128xbf16, #tpu.memory_space<vmem>>, %arg3: memref<1x128xf32, #tpu.memory_space<vmem>>, %arg4: memref<8x128xf32, #tpu.memory_space<vmem>>, %arg5: memref<8x128xf32, #tpu.memory_space<vmem>>) attributes {dimension_semantics = [#tpu.dimension_semantics<arbitrary>], iteration_bounds = array<i64: 3>, scalar_prefetch = 0 : i64, scratch_operands = 1 : i64, tpu.core_type = #tpu.core_type<tc>, window_params = [{transform_indices = @transform_0, window_bounds = array<i64: 8, 1024>}, {transform_indices = @transform_1, window_bounds = array<i64: 1024, 128>}, {pipeline_mode = #tpu.pipeline_mode<synchronous>, transform_indices = @transform_2, window_bounds = array<i64: 1, 128>}, {pipeline_mode = #tpu.pipeline_mode<synchronous>, transform_indices = @transform_3, window_bounds = array<i64: 8, 128>}]} {
    %c0_i32 = arith.constant 0 : i32
    %0 = arith.cmpi eq, %arg0, %c0_i32 : i32
    %1 = arith.extui %0 : i1 to i32
    %c0_i32_0 = arith.constant 0 : i32
    %2 = arith.cmpi ne, %1, %c0_i32_0 : i32
    scf.if %2 {
      %cst_9 = arith.constant 0.000000e+00 : f32
      %12 = vector.broadcast %cst_9 : f32 to vector<8x128xf32>
      %c0_10 = arith.constant 0 : index
      %c0_11 = arith.constant 0 : index
      %13 = vector.load %arg5[%c0_10, %c0_11] : memref<8x128xf32, #tpu.memory_space<vmem>>, vector<8x128xf32>
      tpu.vector_store %arg5[%c0_10, %c0_11], %12 {strides = array<i32>} : memref<8x128xf32, #tpu.memory_space<vmem>>, vector<8x128xf32>,
    } else {
    }
    %c0 = arith.constant 0 : index
    %c0_1 = arith.constant 0 : index
    %3 = vector.load %arg5[%c0, %c0_1] : memref<8x128xf32, #tpu.memory_space<vmem>>, vector<8x128xf32>
    %c0_2 = arith.constant 0 : index
    %c0_3 = arith.constant 0 : index
    %4 = vector.load %arg1[%c0_2, %c0_3] : memref<8x1024xbf16, #tpu.memory_space<vmem>>, vector<8x1024xbf16>
    %c0_4 = arith.constant 0 : index
    %c0_5 = arith.constant 0 : index
    %5 = vector.load %arg2[%c0_4, %c0_5] : memref<1024x128xbf16, #tpu.memory_space<vmem>>, vector<1024x128xbf16>
    %cst = arith.constant dense<0.000000e+00> : vector<8x128xf32>
    %6 = tpu.matmul %4, %5, %cst {dimension_numbers = #tpu.dot_dimension_numbers<[1], [0], [0], [1], [0, 0, 1, 1], [], []>} : vector<8x1024xbf16>, vector<1024x128xbf16>, vector<8x128xf32> -> vector<8x128xf32>
    %7 = arith.addf %3, %6 : vector<8x128xf32>
    %c0_6 = arith.constant 0 : index
    %c0_7 = arith.constant 0 : index
    %8 = vector.load %arg5[%c0_6, %c0_7] : memref<8x128xf32, #tpu.memory_space<vmem>>, vector<8x128xf32>
    tpu.vector_store %arg5[%c0_6, %c0_7], %7 {strides = array<i32>} : memref<8x128xf32, #tpu.memory_space<vmem>>, vector<8x128xf32>,
    %c2_i32 = arith.constant 2 : i32
    %9 = arith.cmpi eq, %arg0, %c2_i32 : i32
    %10 = arith.extui %9 : i1 to i32
    %c0_i32_8 = arith.constant 0 : i32
    %11 = arith.cmpi ne, %10, %c0_i32_8 : i32
    scf.if %11 {
      %c0_9 = arith.constant 0 : index
      %c0_10 = arith.constant 0 : index
      %12 = vector.load %arg5[%c0_9, %c0_10] : memref<8x128xf32, #tpu.memory_space<vmem>>, vector<8x128xf32>
      %c0_11 = arith.constant 0 : index
      %c0_12 = arith.constant 0 : index
      %13 = vector.load %arg3[%c0_11, %c0_12] : memref<1x128xf32, #tpu.memory_space<vmem>>, vector<1x128xf32>
      %14 = vector.broadcast %13 : vector<1x128xf32> to vector<8x128xf32>
      %15 = arith.addf %12, %14 : vector<8x128xf32>
      %c0_13 = arith.constant 0 : index
      %c0_14 = arith.constant 0 : index
      %16 = vector.load %arg4[%c0_13, %c0_14] : memref<8x128xf32, #tpu.memory_space<vmem>>, vector<8x128xf32>
      tpu.vector_store %arg4[%c0_13, %c0_14], %15 {strides = array<i32>} : memref<8x128xf32, #tpu.memory_space<vmem>>, vector<8x128xf32>,
    } else {
    }
    return
  }
  func.func @transform_0(%arg0: i32) -> (i32, i32) {
    %c0_i32 = arith.constant 0 : i32
    %c0_i32_0 = arith.constant 0 : i32
    return %c0_i32, %arg0 : i32, i32
  }
  func.func @transform_1(%arg0: i32) -> (i32, i32) {
    %c0_i32 = arith.constant 0 : i32
    %c0_i32_0 = arith.constant 0 : i32
    return %arg0, %c0_i32 : i32, i32
  }
  func.func @transform_2(%arg0: i32) -> (i32, i32) {
    %c0_i32 = arith.constant 0 : i32
    %c0_i32_0 = arith.constant 0 : i32
    %c0_i32_1 = arith.constant 0 : i32
    return %c0_i32, %c0_i32_0 : i32, i32
  }
  func.func @transform_3(%arg0: i32) -> (i32, i32) {
    %c0_i32 = arith.constant 0 : i32
    %c0_i32_0 = arith.constant 0 : i32
    %c0_i32_1 = arith.constant 0 : i32
    return %c0_i32, %c0_i32_0 : i32, i32
  }
}

module attributes {stable_mosaic.version = 11 : i64} {
  func.func @encoder_stack_kernel(%arg0: i32, %arg1: i32, %arg2: memref<1x5x128xf32, #tpu.memory_space<vmem>>, %arg3: memref<1x1x128xf32, #tpu.memory_space<vmem>>, %arg4: memref<1x1x128xf32, #tpu.memory_space<vmem>>, %arg5: memref<1x4x128x32xbf16, #tpu.memory_space<vmem>>, %arg6: memref<1x4x1x32xf32, #tpu.memory_space<vmem>>, %arg7: memref<1x4x128x32xbf16, #tpu.memory_space<vmem>>, %arg8: memref<1x4x1x32xf32, #tpu.memory_space<vmem>>, %arg9: memref<1x4x128x32xbf16, #tpu.memory_space<vmem>>, %arg10: memref<1x4x1x32xf32, #tpu.memory_space<vmem>>, %arg11: memref<1x128x128xbf16, #tpu.memory_space<vmem>>, %arg12: memref<1x1x128xf32, #tpu.memory_space<vmem>>, %arg13: memref<1x1x128xf32, #tpu.memory_space<vmem>>, %arg14: memref<1x1x128xf32, #tpu.memory_space<vmem>>, %arg15: memref<1x128x256xbf16, #tpu.memory_space<vmem>>, %arg16: memref<1x1x256xf32, #tpu.memory_space<vmem>>, %arg17: memref<1x256x128xbf16, #tpu.memory_space<vmem>>, %arg18: memref<1x1x128xf32, #tpu.memory_space<vmem>>, %arg19: memref<1x128xf32, #tpu.memory_space<vmem>>, %arg20: memref<1x128xf32, #tpu.memory_space<vmem>>, %arg21: memref<1x1x128xf32, #tpu.memory_space<vmem>>, %arg22: memref<5x128xf32, #tpu.memory_space<vmem>>) attributes {dimension_semantics = [#tpu.dimension_semantics<parallel>, #tpu.dimension_semantics<arbitrary>], iteration_bounds = array<i64: 2, 2>, scalar_prefetch = 0 : i64, scratch_operands = 1 : i64, tpu.core_type = #tpu.core_type<tc>, window_params = [{transform_indices = @transform_0, window_bounds = array<i64: 1, 5, 128>}, {transform_indices = @transform_1, window_bounds = array<i64: 1, 1, 128>}, {transform_indices = @transform_2, window_bounds = array<i64: 1, 1, 128>}, {transform_indices = @transform_3, window_bounds = array<i64: 1, 4, 128, 32>}, {transform_indices = @transform_4, window_bounds = array<i64: 1, 4, 1, 32>}, {transform_indices = @transform_5, window_bounds = array<i64: 1, 4, 128, 32>}, {transform_indices = @transform_6, window_bounds = array<i64: 1, 4, 1, 32>}, {transform_indices = @transform_7, window_bounds = array<i64: 1, 4, 128, 32>}, {transform_indices = @transform_8, window_bounds = array<i64: 1, 4, 1, 32>}, {transform_indices = @transform_9, window_bounds = array<i64: 1, 128, 128>}, {transform_indices = @transform_10, window_bounds = array<i64: 1, 1, 128>}, {transform_indices = @transform_11, window_bounds = array<i64: 1, 1, 128>}, {transform_indices = @transform_12, window_bounds = array<i64: 1, 1, 128>}, {transform_indices = @transform_13, window_bounds = array<i64: 1, 128, 256>}, {transform_indices = @transform_14, window_bounds = array<i64: 1, 1, 256>}, {transform_indices = @transform_15, window_bounds = array<i64: 1, 256, 128>}, {transform_indices = @transform_16, window_bounds = array<i64: 1, 1, 128>}, {pipeline_mode = #tpu.pipeline_mode<synchronous>, transform_indices = @transform_17, window_bounds = array<i64: 1, 128>}, {pipeline_mode = #tpu.pipeline_mode<synchronous>, transform_indices = @transform_18, window_bounds = array<i64: 1, 128>}, {transform_indices = @transform_19, window_bounds = array<i64: 1, 1, 128>}]} {
    %c0_i32 = arith.constant 0 : i32
    %0 = arith.cmpi eq, %arg1, %c0_i32 : i32
    %1 = arith.extui %0 : i1 to i32
    %c0_i32_0 = arith.constant 0 : i32
    %2 = arith.cmpi ne, %1, %c0_i32_0 : i32
    scf.if %2 {
      %c0_95 = arith.constant 0 : index
      %c0_96 = arith.constant 0 : index
      %c0_97 = arith.constant 0 : index
      %179 = vector.load %arg2[%c0_95, %c0_96, %c0_97] : memref<1x5x128xf32, #tpu.memory_space<vmem>>, vector<1x5x128xf32>
      %180 = vector.shape_cast %179 : vector<1x5x128xf32> to vector<5x128xf32>
      %c0_98 = arith.constant 0 : index
      %c0_99 = arith.constant 0 : index
      %181 = vector.load %arg22[%c0_98, %c0_99] : memref<5x128xf32, #tpu.memory_space<vmem>>, vector<5x128xf32>
      tpu.vector_store %arg22[%c0_98, %c0_99], %180 {strides = array<i32>} : memref<5x128xf32, #tpu.memory_space<vmem>>, vector<5x128xf32>,
    } else {
    }
    %c0 = arith.constant 0 : index
    %c0_1 = arith.constant 0 : index
    %3 = vector.load %arg22[%c0, %c0_1] : memref<5x128xf32, #tpu.memory_space<vmem>>, vector<5x128xf32>
    %c0_2 = arith.constant 0 : index
    %c0_3 = arith.constant 0 : index
    %c0_4 = arith.constant 0 : index
    %4 = vector.load %arg3[%c0_2, %c0_3, %c0_4] : memref<1x1x128xf32, #tpu.memory_space<vmem>>, vector<1x1x128xf32>
    %5 = vector.shape_cast %4 : vector<1x1x128xf32> to vector<1x128xf32>
    %c0_5 = arith.constant 0 : index
    %c0_6 = arith.constant 0 : index
    %c0_7 = arith.constant 0 : index
    %6 = vector.load %arg4[%c0_5, %c0_6, %c0_7] : memref<1x1x128xf32, #tpu.memory_space<vmem>>, vector<1x1x128xf32>
    %7 = vector.shape_cast %6 : vector<1x1x128xf32> to vector<1x128xf32>
    %cst = arith.constant dense<0.000000e+00> : vector<5xf32>
    %8 = vector.multi_reduction <add>, %3, %cst [1] : vector<5x128xf32> to vector<5xf32>
    %9 = vector.shape_cast %8 : vector<5xf32> to vector<5x1xf32>
    %cst_8 = arith.constant 1.280000e+02 : f32
    %10 = vector.broadcast %cst_8 : f32 to vector<5x1xf32>
    %11 = arith.divf %9, %10 : vector<5x1xf32>
    %12 = vector.broadcast %11 : vector<5x1xf32> to vector<5x128xf32>
    %13 = arith.subf %3, %12 : vector<5x128xf32>
    %14 = arith.mulf %13, %13 : vector<5x128xf32>
    %cst_9 = arith.constant dense<0.000000e+00> : vector<5xf32>
    %15 = vector.multi_reduction <add>, %14, %cst_9 [1] : vector<5x128xf32> to vector<5xf32>
    %16 = vector.shape_cast %15 : vector<5xf32> to vector<5x1xf32>
    %cst_10 = arith.constant 1.280000e+02 : f32
    %17 = vector.broadcast %cst_10 : f32 to vector<5x1xf32>
    %18 = arith.divf %16, %17 : vector<5x1xf32>
    %19 = vector.broadcast %11 : vector<5x1xf32> to vector<5x128xf32>
    %20 = arith.subf %3, %19 : vector<5x128xf32>
    %cst_11 = arith.constant 9.99999997E-7 : f32
    %21 = vector.broadcast %cst_11 : f32 to vector<5x1xf32>
    %22 = arith.addf %18, %21 : vector<5x1xf32>
    %23 = math.rsqrt %22 : vector<5x1xf32>
    %24 = vector.broadcast %23 : vector<5x1xf32> to vector<5x128xf32>
    %25 = arith.mulf %20, %24 : vector<5x128xf32>
    %26 = vector.broadcast %5 : vector<1x128xf32> to vector<5x128xf32>
    %27 = arith.mulf %25, %26 : vector<5x128xf32>
    %28 = vector.broadcast %7 : vector<1x128xf32> to vector<5x128xf32>
    %29 = arith.addf %27, %28 : vector<5x128xf32>
    %30 = arith.truncf %29 : vector<5x128xf32> to vector<5x128xbf16>
    %31 = vector.shape_cast %30 : vector<5x128xbf16> to vector<1x5x128xbf16>
    %32 = vector.shape_cast %31 : vector<1x5x128xbf16> to vector<1x5x128xbf16>
    %33 = vector.broadcast %32 : vector<1x5x128xbf16> to vector<4x5x128xbf16>
    %c0_12 = arith.constant 0 : index
    %c0_13 = arith.constant 0 : index
    %c0_14 = arith.constant 0 : index
    %c0_15 = arith.constant 0 : index
    %34 = vector.load %arg5[%c0_12, %c0_13, %c0_14, %c0_15] : memref<1x4x128x32xbf16, #tpu.memory_space<vmem>>, vector<1x4x128x32xbf16>
    %35 = vector.shape_cast %34 : vector<1x4x128x32xbf16> to vector<4x128x32xbf16>
    "tpu.trace_start"() <{level = 10 : i32, message = "hsd,hde->hse"}> : () -> ()
    %cst_16 = arith.constant dense<0.000000e+00> : vector<4x5x32xf32>
    %36 = tpu.matmul %33, %35, %cst_16 {dimension_numbers = #tpu.dot_dimension_numbers<[2], [1], [1], [2], [0, 0, 0, 1, 1, 2], [0], [0]>} : vector<4x5x128xbf16>, vector<4x128x32xbf16>, vector<4x5x32xf32> -> vector<4x5x32xf32>
    "tpu.trace_stop"() : () -> ()
    %c0_17 = arith.constant 0 : index
    %c0_18 = arith.constant 0 : index
    %c0_19 = arith.constant 0 : index
    %c0_20 = arith.constant 0 : index
    %37 = vector.load %arg6[%c0_17, %c0_18, %c0_19, %c0_20] : memref<1x4x1x32xf32, #tpu.memory_space<vmem>>, vector<1x4x1x32xf32>
    %38 = vector.shape_cast %37 : vector<1x4x1x32xf32> to vector<4x1x32xf32>
    %39 = vector.broadcast %38 : vector<4x1x32xf32> to vector<4x5x32xf32>
    %40 = arith.addf %36, %39 : vector<4x5x32xf32>
    %c0_21 = arith.constant 0 : index
    %c0_22 = arith.constant 0 : index
    %c0_23 = arith.constant 0 : index
    %c0_24 = arith.constant 0 : index
    %41 = vector.load %arg7[%c0_21, %c0_22, %c0_23, %c0_24] : memref<1x4x128x32xbf16, #tpu.memory_space<vmem>>, vector<1x4x128x32xbf16>
    %42 = vector.shape_cast %41 : vector<1x4x128x32xbf16> to vector<4x128x32xbf16>
    "tpu.trace_start"() <{level = 10 : i32, message = "hsd,hde->hse"}> : () -> ()
    %cst_25 = arith.constant dense<0.000000e+00> : vector<4x5x32xf32>
    %43 = tpu.matmul %33, %42, %cst_25 {dimension_numbers = #tpu.dot_dimension_numbers<[2], [1], [1], [2], [0, 0, 0, 1, 1, 2], [0], [0]>} : vector<4x5x128xbf16>, vector<4x128x32xbf16>, vector<4x5x32xf32> -> vector<4x5x32xf32>
    "tpu.trace_stop"() : () -> ()
    %c0_26 = arith.constant 0 : index
    %c0_27 = arith.constant 0 : index
    %c0_28 = arith.constant 0 : index
    %c0_29 = arith.constant 0 : index
    %44 = vector.load %arg8[%c0_26, %c0_27, %c0_28, %c0_29] : memref<1x4x1x32xf32, #tpu.memory_space<vmem>>, vector<1x4x1x32xf32>
    %45 = vector.shape_cast %44 : vector<1x4x1x32xf32> to vector<4x1x32xf32>
    %46 = vector.broadcast %45 : vector<4x1x32xf32> to vector<4x5x32xf32>
    %47 = arith.addf %43, %46 : vector<4x5x32xf32>
    %c0_30 = arith.constant 0 : index
    %c0_31 = arith.constant 0 : index
    %c0_32 = arith.constant 0 : index
    %c0_33 = arith.constant 0 : index
    %48 = vector.load %arg9[%c0_30, %c0_31, %c0_32, %c0_33] : memref<1x4x128x32xbf16, #tpu.memory_space<vmem>>, vector<1x4x128x32xbf16>
    %49 = vector.shape_cast %48 : vector<1x4x128x32xbf16> to vector<4x128x32xbf16>
    "tpu.trace_start"() <{level = 10 : i32, message = "hsd,hde->hse"}> : () -> ()
    %cst_34 = arith.constant dense<0.000000e+00> : vector<4x5x32xf32>
    %50 = tpu.matmul %33, %49, %cst_34 {dimension_numbers = #tpu.dot_dimension_numbers<[2], [1], [1], [2], [0, 0, 0, 1, 1, 2], [0], [0]>} : vector<4x5x128xbf16>, vector<4x128x32xbf16>, vector<4x5x32xf32> -> vector<4x5x32xf32>
    "tpu.trace_stop"() : () -> ()
    %c0_35 = arith.constant 0 : index
    %c0_36 = arith.constant 0 : index
    %c0_37 = arith.constant 0 : index
    %c0_38 = arith.constant 0 : index
    %51 = vector.load %arg10[%c0_35, %c0_36, %c0_37, %c0_38] : memref<1x4x1x32xf32, #tpu.memory_space<vmem>>, vector<1x4x1x32xf32>
    %52 = vector.shape_cast %51 : vector<1x4x1x32xf32> to vector<4x1x32xf32>
    %53 = vector.broadcast %52 : vector<4x1x32xf32> to vector<4x5x32xf32>
    %54 = arith.addf %50, %53 : vector<4x5x32xf32>
    %cst_39 = arith.constant 0.176776692 : f32
    %55 = vector.broadcast %cst_39 : f32 to vector<4x5x32xf32>
    %56 = arith.mulf %40, %55 : vector<4x5x32xf32>
    %57 = arith.truncf %56 : vector<4x5x32xf32> to vector<4x5x32xbf16>
    %58 = arith.truncf %47 : vector<4x5x32xf32> to vector<4x5x32xbf16>
    "tpu.trace_start"() <{level = 10 : i32, message = "hqd,hkd->hqk"}> : () -> ()
    %cst_40 = arith.constant dense<0.000000e+00> : vector<4x5x5xf32>
    %59 = tpu.matmul %57, %58, %cst_40 {dimension_numbers = #tpu.dot_dimension_numbers<[2], [2], [1], [1], [0, 0, 0, 1, 1, 1], [0], [0]>} : vector<4x5x32xbf16>, vector<4x5x32xbf16>, vector<4x5x5xf32> -> vector<4x5x5xf32>
    "tpu.trace_stop"() : () -> ()
    %cst_41 = arith.constant dense<0xFF800000> : vector<4x5xf32>
    %60 = vector.multi_reduction <maximumf>, %59, %cst_41 [2] : vector<4x5x5xf32> to vector<4x5xf32>
    %61 = vector.shape_cast %60 : vector<4x5xf32> to vector<4x5x1xf32>
    %62 = vector.broadcast %61 : vector<4x5x1xf32> to vector<4x5x5xf32>
    %63 = arith.subf %59, %62 : vector<4x5x5xf32>
    %64 = math.exp %63 : vector<4x5x5xf32>
    %cst_42 = arith.constant dense<0.000000e+00> : vector<4x5xf32>
    %65 = vector.multi_reduction <add>, %64, %cst_42 [2] : vector<4x5x5xf32> to vector<4x5xf32>
    %66 = vector.shape_cast %65 : vector<4x5xf32> to vector<4x5x1xf32>
    %67 = tpu.reciprocal %66 {approx = true} : vector<4x5x1xf32> -> vector<4x5x1xf32>
    %68 = vector.broadcast %67 : vector<4x5x1xf32> to vector<4x5x5xf32>
    %69 = arith.mulf %64, %68 : vector<4x5x5xf32>
    %70 = arith.truncf %69 : vector<4x5x5xf32> to vector<4x5x5xbf16>
    %71 = arith.truncf %54 : vector<4x5x32xf32> to vector<4x5x32xbf16>
    "tpu.trace_start"() <{level = 10 : i32, message = "hqk,hkd->hqd"}> : () -> ()
    %cst_43 = arith.constant dense<0.000000e+00> : vector<4x5x32xf32>
    %72 = tpu.matmul %70, %71, %cst_43 {dimension_numbers = #tpu.dot_dimension_numbers<[2], [1], [1], [2], [0, 0, 0, 1, 1, 2], [0], [0]>} : vector<4x5x5xbf16>, vector<4x5x32xbf16>, vector<4x5x32xf32> -> vector<4x5x32xf32>
    "tpu.trace_stop"() : () -> ()
    %73 = vector.extract_strided_slice %72 {offsets = [0, 0, 0], sizes = [1, 5, 32], strides = [1, 1, 1]} : vector<4x5x32xf32> to vector<1x5x32xf32>
    %74 = vector.shape_cast %73 : vector<1x5x32xf32> to vector<5x32xf32>
    %75 = vector.extract_strided_slice %72 {offsets = [1, 0, 0], sizes = [1, 5, 32], strides = [1, 1, 1]} : vector<4x5x32xf32> to vector<1x5x32xf32>
    %76 = vector.shape_cast %75 : vector<1x5x32xf32> to vector<5x32xf32>
    %77 = vector.extract_strided_slice %72 {offsets = [2, 0, 0], sizes = [1, 5, 32], strides = [1, 1, 1]} : vector<4x5x32xf32> to vector<1x5x32xf32>
    %78 = vector.shape_cast %77 : vector<1x5x32xf32> to vector<5x32xf32>
    %79 = vector.extract_strided_slice %72 {offsets = [3, 0, 0], sizes = [1, 5, 32], strides = [1, 1, 1]} : vector<4x5x32xf32> to vector<1x5x32xf32>
    %80 = vector.shape_cast %79 : vector<1x5x32xf32> to vector<5x32xf32>
    %81 = tpu.concatenate %74, %76, %78, %80 in 1 : vector<5x32xf32>, vector<5x32xf32>, vector<5x32xf32>, vector<5x32xf32> -> vector<5x128xf32>
    %82 = arith.truncf %81 : vector<5x128xf32> to vector<5x128xbf16>
    %c0_44 = arith.constant 0 : index
    %c0_45 = arith.constant 0 : index
    %c0_46 = arith.constant 0 : index
    %83 = vector.load %arg11[%c0_44, %c0_45, %c0_46] : memref<1x128x128xbf16, #tpu.memory_space<vmem>>, vector<1x128x128xbf16>
    %84 = vector.shape_cast %83 : vector<1x128x128xbf16> to vector<128x128xbf16>
    %cst_47 = arith.constant dense<0.000000e+00> : vector<5x128xf32>
    %85 = tpu.matmul %82, %84, %cst_47 {dimension_numbers = #tpu.dot_dimension_numbers<[1], [0], [0], [1], [0, 0, 1, 1], [], []>} : vector<5x128xbf16>, vector<128x128xbf16>, vector<5x128xf32> -> vector<5x128xf32>
    %c0_48 = arith.constant 0 : index
    %c0_49 = arith.constant 0 : index
    %c0_50 = arith.constant 0 : index
    %86 = vector.load %arg12[%c0_48, %c0_49, %c0_50] : memref<1x1x128xf32, #tpu.memory_space<vmem>>, vector<1x1x128xf32>
    %87 = vector.shape_cast %86 : vector<1x1x128xf32> to vector<1x128xf32>
    %88 = vector.broadcast %87 : vector<1x128xf32> to vector<5x128xf32>
    %89 = arith.addf %85, %88 : vector<5x128xf32>
    %90 = arith.addf %3, %89 : vector<5x128xf32>
    %c0_51 = arith.constant 0 : index
    %c0_52 = arith.constant 0 : index
    %c0_53 = arith.constant 0 : index
    %91 = vector.load %arg13[%c0_51, %c0_52, %c0_53] : memref<1x1x128xf32, #tpu.memory_space<vmem>>, vector<1x1x128xf32>
    %92 = vector.shape_cast %91 : vector<1x1x128xf32> to vector<1x128xf32>
    %c0_54 = arith.constant 0 : index
    %c0_55 = arith.constant 0 : index
    %c0_56 = arith.constant 0 : index
    %93 = vector.load %arg14[%c0_54, %c0_55, %c0_56] : memref<1x1x128xf32, #tpu.memory_space<vmem>>, vector<1x1x128xf32>
    %94 = vector.shape_cast %93 : vector<1x1x128xf32> to vector<1x128xf32>
    %cst_57 = arith.constant dense<0.000000e+00> : vector<5xf32>
    %95 = vector.multi_reduction <add>, %90, %cst_57 [1] : vector<5x128xf32> to vector<5xf32>
    %96 = vector.shape_cast %95 : vector<5xf32> to vector<5x1xf32>
    %cst_58 = arith.constant 1.280000e+02 : f32
    %97 = vector.broadcast %cst_58 : f32 to vector<5x1xf32>
    %98 = arith.divf %96, %97 : vector<5x1xf32>
    %99 = vector.broadcast %98 : vector<5x1xf32> to vector<5x128xf32>
    %100 = arith.subf %90, %99 : vector<5x128xf32>
    %101 = arith.mulf %100, %100 : vector<5x128xf32>
    %cst_59 = arith.constant dense<0.000000e+00> : vector<5xf32>
    %102 = vector.multi_reduction <add>, %101, %cst_59 [1] : vector<5x128xf32> to vector<5xf32>
    %103 = vector.shape_cast %102 : vector<5xf32> to vector<5x1xf32>
    %cst_60 = arith.constant 1.280000e+02 : f32
    %104 = vector.broadcast %cst_60 : f32 to vector<5x1xf32>
    %105 = arith.divf %103, %104 : vector<5x1xf32>
    %106 = vector.broadcast %98 : vector<5x1xf32> to vector<5x128xf32>
    %107 = arith.subf %90, %106 : vector<5x128xf32>
    %cst_61 = arith.constant 9.99999997E-7 : f32
    %108 = vector.broadcast %cst_61 : f32 to vector<5x1xf32>
    %109 = arith.addf %105, %108 : vector<5x1xf32>
    %110 = math.rsqrt %109 : vector<5x1xf32>
    %111 = vector.broadcast %110 : vector<5x1xf32> to vector<5x128xf32>
    %112 = arith.mulf %107, %111 : vector<5x128xf32>
    %113 = vector.broadcast %92 : vector<1x128xf32> to vector<5x128xf32>
    %114 = arith.mulf %112, %113 : vector<5x128xf32>
    %115 = vector.broadcast %94 : vector<1x128xf32> to vector<5x128xf32>
    %116 = arith.addf %114, %115 : vector<5x128xf32>
    %117 = arith.truncf %116 : vector<5x128xf32> to vector<5x128xbf16>
    %c0_62 = arith.constant 0 : index
    %c0_63 = arith.constant 0 : index
    %c0_64 = arith.constant 0 : index
    %118 = vector.load %arg15[%c0_62, %c0_63, %c0_64] : memref<1x128x256xbf16, #tpu.memory_space<vmem>>, vector<1x128x256xbf16>
    %119 = vector.shape_cast %118 : vector<1x128x256xbf16> to vector<128x256xbf16>
    %cst_65 = arith.constant dense<0.000000e+00> : vector<5x256xf32>
    %120 = tpu.matmul %117, %119, %cst_65 {dimension_numbers = #tpu.dot_dimension_numbers<[1], [0], [0], [1], [0, 0, 1, 1], [], []>} : vector<5x128xbf16>, vector<128x256xbf16>, vector<5x256xf32> -> vector<5x256xf32>
    %c0_66 = arith.constant 0 : index
    %c0_67 = arith.constant 0 : index
    %c0_68 = arith.constant 0 : index
    %121 = vector.load %arg16[%c0_66, %c0_67, %c0_68] : memref<1x1x256xf32, #tpu.memory_space<vmem>>, vector<1x1x256xf32>
    %122 = vector.shape_cast %121 : vector<1x1x256xf32> to vector<1x256xf32>
    %123 = vector.broadcast %122 : vector<1x256xf32> to vector<5x256xf32>
    %124 = arith.addf %120, %123 : vector<5x256xf32>
    %cst_69 = arith.constant 5.000000e-01 : f32
    %125 = vector.broadcast %cst_69 : f32 to vector<5x256xf32>
    %126 = arith.mulf %125, %124 : vector<5x256xf32>
    %cst_70 = arith.constant 0.707106769 : f32
    %127 = vector.broadcast %cst_70 : f32 to vector<5x256xf32>
    %128 = arith.mulf %124, %127 : vector<5x256xf32>
    %cst_71 = arith.constant 0.000000e+00 : f32
    %129 = vector.broadcast %cst_71 : f32 to vector<5x256xf32>
    %130 = arith.cmpf oge, %128, %129 : vector<5x256xf32>
    %cst_72 = arith.constant 1.000000e+00 : f32
    %cst_73 = arith.constant -1.000000e+00 : f32
    %131 = vector.broadcast %cst_72 : f32 to vector<5x256xf32>
    %132 = vector.broadcast %cst_73 : f32 to vector<5x256xf32>
    %133 = arith.select %130, %131, %132 : vector<5x256xi1>, vector<5x256xf32>
    %134 = math.absf %128 : vector<5x256xf32>
    %cst_74 = arith.constant 0.327591091 : f32
    %135 = vector.broadcast %cst_74 : f32 to vector<5x256xf32>
    %136 = arith.mulf %135, %134 : vector<5x256xf32>
    %cst_75 = arith.constant 1.000000e+00 : f32
    %137 = vector.broadcast %cst_75 : f32 to vector<5x256xf32>
    %138 = arith.addf %137, %136 : vector<5x256xf32>
    %cst_76 = arith.constant 1.000000e+00 : f32
    %139 = vector.broadcast %cst_76 : f32 to vector<5x256xf32>
    %140 = arith.divf %139, %138 : vector<5x256xf32>
    %cst_77 = arith.constant 1.06140542 : f32
    %141 = vector.broadcast %cst_77 : f32 to vector<5x256xf32>
    %142 = arith.mulf %141, %140 : vector<5x256xf32>
    %cst_78 = arith.constant -1.45315206 : f32
    %143 = vector.broadcast %cst_78 : f32 to vector<5x256xf32>
    %144 = arith.addf %142, %143 : vector<5x256xf32>
    %145 = arith.mulf %144, %140 : vector<5x256xf32>
    %cst_79 = arith.constant 1.42141378 : f32
    %146 = vector.broadcast %cst_79 : f32 to vector<5x256xf32>
    %147 = arith.addf %145, %146 : vector<5x256xf32>
    %148 = arith.mulf %147, %140 : vector<5x256xf32>
    %cst_80 = arith.constant -0.284496725 : f32
    %149 = vector.broadcast %cst_80 : f32 to vector<5x256xf32>
    %150 = arith.addf %148, %149 : vector<5x256xf32>
    %151 = arith.mulf %150, %140 : vector<5x256xf32>
    %cst_81 = arith.constant 0.254829586 : f32
    %152 = vector.broadcast %cst_81 : f32 to vector<5x256xf32>
    %153 = arith.addf %151, %152 : vector<5x256xf32>
    %154 = arith.mulf %153, %140 : vector<5x256xf32>
    %cst_82 = arith.constant 0.000000e+00 : f32
    %155 = vector.broadcast %cst_82 : f32 to vector<5x256xf32>
    %156 = arith.subf %155, %134 : vector<5x256xf32>
    %157 = arith.mulf %156, %134 : vector<5x256xf32>
    %158 = math.exp %157 : vector<5x256xf32>
    %159 = arith.mulf %154, %158 : vector<5x256xf32>
    %cst_83 = arith.constant 1.000000e+00 : f32
    %160 = vector.broadcast %cst_83 : f32 to vector<5x256xf32>
    %161 = arith.subf %160, %159 : vector<5x256xf32>
    %162 = arith.mulf %133, %161 : vector<5x256xf32>
    %cst_84 = arith.constant 1.000000e+00 : f32
    %163 = vector.broadcast %cst_84 : f32 to vector<5x256xf32>
    %164 = arith.addf %163, %162 : vector<5x256xf32>
    %165 = arith.mulf %126, %164 : vector<5x256xf32>
    %166 = arith.truncf %165 : vector<5x256xf32> to vector<5x256xbf16>
    %c0_85 = arith.constant 0 : index
    %c0_86 = arith.constant 0 : index
    %c0_87 = arith.constant 0 : index
    %167 = vector.load %arg17[%c0_85, %c0_86, %c0_87] : memref<1x256x128xbf16, #tpu.memory_space<vmem>>, vector<1x256x128xbf16>
    %168 = vector.shape_cast %167 : vector<1x256x128xbf16> to vector<256x128xbf16>
    %cst_88 = arith.constant dense<0.000000e+00> : vector<5x128xf32>
    %169 = tpu.matmul %166, %168, %cst_88 {dimension_numbers = #tpu.dot_dimension_numbers<[1], [0], [0], [1], [0, 0, 1, 1], [], []>} : vector<5x256xbf16>, vector<256x128xbf16>, vector<5x128xf32> -> vector<5x128xf32>
    %c0_89 = arith.constant 0 : index
    %c0_90 = arith.constant 0 : index
    %c0_91 = arith.constant 0 : index
    %170 = vector.load %arg18[%c0_89, %c0_90, %c0_91] : memref<1x1x128xf32, #tpu.memory_space<vmem>>, vector<1x1x128xf32>
    %171 = vector.shape_cast %170 : vector<1x1x128xf32> to vector<1x128xf32>
    %172 = vector.broadcast %171 : vector<1x128xf32> to vector<5x128xf32>
    %173 = arith.addf %169, %172 : vector<5x128xf32>
    %174 = arith.addf %90, %173 : vector<5x128xf32>
    %c0_92 = arith.constant 0 : index
    %c0_93 = arith.constant 0 : index
    %175 = vector.load %arg22[%c0_92, %c0_93] : memref<5x128xf32, #tpu.memory_space<vmem>>, vector<5x128xf32>
    tpu.vector_store %arg22[%c0_92, %c0_93], %174 {strides = array<i32>} : memref<5x128xf32, #tpu.memory_space<vmem>>, vector<5x128xf32>,
    %c1_i32 = arith.constant 1 : i32
    %176 = arith.cmpi eq, %arg1, %c1_i32 : i32
    %177 = arith.extui %176 : i1 to i32
    %c0_i32_94 = arith.constant 0 : i32
    %178 = arith.cmpi ne, %177, %c0_i32_94 : i32
    scf.if %178 {
      %179 = vector.extract_strided_slice %174 {offsets = [0, 0], sizes = [1, 128], strides = [1, 1]} : vector<5x128xf32> to vector<1x128xf32>
      %c0_95 = arith.constant 0 : index
      %c0_96 = arith.constant 0 : index
      %180 = vector.load %arg19[%c0_95, %c0_96] : memref<1x128xf32, #tpu.memory_space<vmem>>, vector<1x128xf32>
      %c0_97 = arith.constant 0 : index
      %c0_98 = arith.constant 0 : index
      %181 = vector.load %arg20[%c0_97, %c0_98] : memref<1x128xf32, #tpu.memory_space<vmem>>, vector<1x128xf32>
      %cst_99 = arith.constant dense<0.000000e+00> : vector<1xf32>
      %182 = vector.multi_reduction <add>, %179, %cst_99 [1] : vector<1x128xf32> to vector<1xf32>
      %183 = vector.shape_cast %182 : vector<1xf32> to vector<1x1xf32>
      %cst_100 = arith.constant 1.280000e+02 : f32
      %184 = vector.broadcast %cst_100 : f32 to vector<1x1xf32>
      %185 = arith.divf %183, %184 : vector<1x1xf32>
      %186 = vector.broadcast %185 : vector<1x1xf32> to vector<1x128xf32>
      %187 = arith.subf %179, %186 : vector<1x128xf32>
      %188 = arith.mulf %187, %187 : vector<1x128xf32>
      %cst_101 = arith.constant dense<0.000000e+00> : vector<1xf32>
      %189 = vector.multi_reduction <add>, %188, %cst_101 [1] : vector<1x128xf32> to vector<1xf32>
      %190 = vector.shape_cast %189 : vector<1xf32> to vector<1x1xf32>
      %cst_102 = arith.constant 1.280000e+02 : f32
      %191 = vector.broadcast %cst_102 : f32 to vector<1x1xf32>
      %192 = arith.divf %190, %191 : vector<1x1xf32>
      %193 = vector.broadcast %185 : vector<1x1xf32> to vector<1x128xf32>
      %194 = arith.subf %179, %193 : vector<1x128xf32>
      %cst_103 = arith.constant 9.99999997E-7 : f32
      %195 = vector.broadcast %cst_103 : f32 to vector<1x1xf32>
      %196 = arith.addf %192, %195 : vector<1x1xf32>
      %197 = math.rsqrt %196 : vector<1x1xf32>
      %198 = vector.broadcast %197 : vector<1x1xf32> to vector<1x128xf32>
      %199 = arith.mulf %194, %198 : vector<1x128xf32>
      %200 = arith.mulf %199, %180 : vector<1x128xf32>
      %201 = arith.addf %200, %181 : vector<1x128xf32>
      %c0_104 = arith.constant 0 : index
      %c0_105 = arith.constant 0 : index
      %c0_106 = arith.constant 0 : index
      %202 = vector.load %arg21[%c0_104, %c0_105, %c0_106] : memref<1x1x128xf32, #tpu.memory_space<vmem>>, vector<1x1x128xf32>
      %203 = vector.shape_cast %202 : vector<1x1x128xf32> to vector<1x128xf32>
      %204 = vector.shape_cast %201 : vector<1x128xf32> to vector<1x1x128xf32>
      tpu.vector_store %arg21[%c0_104, %c0_105, %c0_106], %204 {strides = array<i32>} : memref<1x1x128xf32, #tpu.memory_space<vmem>>, vector<1x1x128xf32>,
    } else {
    }
    return
  }
  func.func @transform_0(%arg0: i32, %arg1: i32) -> (i32, i32, i32) {
    %c0_i32 = arith.constant 0 : i32
    %c0_i32_0 = arith.constant 0 : i32
    %c0_i32_1 = arith.constant 0 : i32
    return %arg0, %c0_i32, %c0_i32_0 : i32, i32, i32
  }
  func.func @transform_1(%arg0: i32, %arg1: i32) -> (i32, i32, i32) {
    %c0_i32 = arith.constant 0 : i32
    %c0_i32_0 = arith.constant 0 : i32
    %c0_i32_1 = arith.constant 0 : i32
    return %arg1, %c0_i32, %c0_i32_0 : i32, i32, i32
  }
  func.func @transform_2(%arg0: i32, %arg1: i32) -> (i32, i32, i32) {
    %c0_i32 = arith.constant 0 : i32
    %c0_i32_0 = arith.constant 0 : i32
    %c0_i32_1 = arith.constant 0 : i32
    return %arg1, %c0_i32, %c0_i32_0 : i32, i32, i32
  }
  func.func @transform_3(%arg0: i32, %arg1: i32) -> (i32, i32, i32, i32) {
    %c0_i32 = arith.constant 0 : i32
    %c0_i32_0 = arith.constant 0 : i32
    %c0_i32_1 = arith.constant 0 : i32
    %c0_i32_2 = arith.constant 0 : i32
    return %arg1, %c0_i32, %c0_i32_0, %c0_i32_1 : i32, i32, i32, i32
  }
  func.func @transform_4(%arg0: i32, %arg1: i32) -> (i32, i32, i32, i32) {
    %c0_i32 = arith.constant 0 : i32
    %c0_i32_0 = arith.constant 0 : i32
    %c0_i32_1 = arith.constant 0 : i32
    %c0_i32_2 = arith.constant 0 : i32
    return %arg1, %c0_i32, %c0_i32_0, %c0_i32_1 : i32, i32, i32, i32
  }
  func.func @transform_5(%arg0: i32, %arg1: i32) -> (i32, i32, i32, i32) {
    %c0_i32 = arith.constant 0 : i32
    %c0_i32_0 = arith.constant 0 : i32
    %c0_i32_1 = arith.constant 0 : i32
    %c0_i32_2 = arith.constant 0 : i32
    return %arg1, %c0_i32, %c0_i32_0, %c0_i32_1 : i32, i32, i32, i32
  }
  func.func @transform_6(%arg0: i32, %arg1: i32) -> (i32, i32, i32, i32) {
    %c0_i32 = arith.constant 0 : i32
    %c0_i32_0 = arith.constant 0 : i32
    %c0_i32_1 = arith.constant 0 : i32
    %c0_i32_2 = arith.constant 0 : i32
    return %arg1, %c0_i32, %c0_i32_0, %c0_i32_1 : i32, i32, i32, i32
  }
  func.func @transform_7(%arg0: i32, %arg1: i32) -> (i32, i32, i32, i32) {
    %c0_i32 = arith.constant 0 : i32
    %c0_i32_0 = arith.constant 0 : i32
    %c0_i32_1 = arith.constant 0 : i32
    %c0_i32_2 = arith.constant 0 : i32
    return %arg1, %c0_i32, %c0_i32_0, %c0_i32_1 : i32, i32, i32, i32
  }
  func.func @transform_8(%arg0: i32, %arg1: i32) -> (i32, i32, i32, i32) {
    %c0_i32 = arith.constant 0 : i32
    %c0_i32_0 = arith.constant 0 : i32
    %c0_i32_1 = arith.constant 0 : i32
    %c0_i32_2 = arith.constant 0 : i32
    return %arg1, %c0_i32, %c0_i32_0, %c0_i32_1 : i32, i32, i32, i32
  }
  func.func @transform_9(%arg0: i32, %arg1: i32) -> (i32, i32, i32) {
    %c0_i32 = arith.constant 0 : i32
    %c0_i32_0 = arith.constant 0 : i32
    %c0_i32_1 = arith.constant 0 : i32
    return %arg1, %c0_i32, %c0_i32_0 : i32, i32, i32
  }
  func.func @transform_10(%arg0: i32, %arg1: i32) -> (i32, i32, i32) {
    %c0_i32 = arith.constant 0 : i32
    %c0_i32_0 = arith.constant 0 : i32
    %c0_i32_1 = arith.constant 0 : i32
    return %arg1, %c0_i32, %c0_i32_0 : i32, i32, i32
  }
  func.func @transform_11(%arg0: i32, %arg1: i32) -> (i32, i32, i32) {
    %c0_i32 = arith.constant 0 : i32
    %c0_i32_0 = arith.constant 0 : i32
    %c0_i32_1 = arith.constant 0 : i32
    return %arg1, %c0_i32, %c0_i32_0 : i32, i32, i32
  }
  func.func @transform_12(%arg0: i32, %arg1: i32) -> (i32, i32, i32) {
    %c0_i32 = arith.constant 0 : i32
    %c0_i32_0 = arith.constant 0 : i32
    %c0_i32_1 = arith.constant 0 : i32
    return %arg1, %c0_i32, %c0_i32_0 : i32, i32, i32
  }
  func.func @transform_13(%arg0: i32, %arg1: i32) -> (i32, i32, i32) {
    %c0_i32 = arith.constant 0 : i32
    %c0_i32_0 = arith.constant 0 : i32
    %c0_i32_1 = arith.constant 0 : i32
    return %arg1, %c0_i32, %c0_i32_0 : i32, i32, i32
  }
  func.func @transform_14(%arg0: i32, %arg1: i32) -> (i32, i32, i32) {
    %c0_i32 = arith.constant 0 : i32
    %c0_i32_0 = arith.constant 0 : i32
    %c0_i32_1 = arith.constant 0 : i32
    return %arg1, %c0_i32, %c0_i32_0 : i32, i32, i32
  }
  func.func @transform_15(%arg0: i32, %arg1: i32) -> (i32, i32, i32) {
    %c0_i32 = arith.constant 0 : i32
    %c0_i32_0 = arith.constant 0 : i32
    %c0_i32_1 = arith.constant 0 : i32
    return %arg1, %c0_i32, %c0_i32_0 : i32, i32, i32
  }
  func.func @transform_16(%arg0: i32, %arg1: i32) -> (i32, i32, i32) {
    %c0_i32 = arith.constant 0 : i32
    %c0_i32_0 = arith.constant 0 : i32
    %c0_i32_1 = arith.constant 0 : i32
    return %arg1, %c0_i32, %c0_i32_0 : i32, i32, i32
  }
  func.func @transform_17(%arg0: i32, %arg1: i32) -> (i32, i32) {
    %c0_i32 = arith.constant 0 : i32
    %c0_i32_0 = arith.constant 0 : i32
    %c0_i32_1 = arith.constant 0 : i32
    return %c0_i32, %c0_i32_0 : i32, i32
  }
  func.func @transform_18(%arg0: i32, %arg1: i32) -> (i32, i32) {
    %c0_i32 = arith.constant 0 : i32
    %c0_i32_0 = arith.constant 0 : i32
    %c0_i32_1 = arith.constant 0 : i32
    return %c0_i32, %c0_i32_0 : i32, i32
  }
  func.func @transform_19(%arg0: i32, %arg1: i32) -> (i32, i32, i32) {
    %c0_i32 = arith.constant 0 : i32
    %c0_i32_0 = arith.constant 0 : i32
    %c0_i32_1 = arith.constant 0 : i32
    return %arg0, %c0_i32, %c0_i32_0 : i32, i32, i32
  }
}

</mosaic_0001>

<llo_original>
// kernel: _lambda_.2
$region0: #{_lambda_.2}
  #allocation0 [shape = 'u32[]', space=smem, size = 0x4, offset = 0x4, fixed_abs, tag = 'smem constant byte address 0x4 - core index']
  #allocation1 [shape = 'u32[72,128]{1,0:T(1,128)}', space=vmem, size = 0x9000, scoped, tag = 'internal scratch']
  #allocation2 [shape = 'f32[8,128]{1,0:T(8,128)}', space=vmem, size = 0x1000, scoped, tag = 'scratch operand']
  %s0 = inlined_call_operand.vmem [shape: bf16[8,3072], index: 0, kind: input, shape index: {}]
  %s1 = inlined_call_operand.vmem [shape: bf16[3072,128], index: 1, kind: input, shape index: {}]
  %s2 = inlined_call_operand.vmem [shape: f32[1,128], index: 2, kind: input, shape index: {}]
  %s3 = inlined_call_operand.vmem [shape: f32[8,128], index: 3, kind: output, shape index: {}]
  %s4 = sld [smem:[#allocation0]]
  $region53: #{_lambda_.2} parent=0
    _
  %s6 = ssub.s32 1, %s4
  %s7 = scalar_select 0, %s6, %s4
  loop: start=0, step=1, limit=5
  $region2: #{_lambda_.2} parent=0 // loop_pre_header
    _
  $region3: #{_lambda_.2} parent=0 // loop_header
    %s9 = sphi 0, %s13
    %p10 = scmp.ge.s32.totalorder %s9, 5
    %s19 = sphi 0, %s21
    %s22 = sphi 0, %s19
    %s23 = sphi 0, %s22
    %s39 = sphi 0, %s23
    %s45 = sphi 0, %s47
    %s48 = sphi 0, %s45
    %s49 = sphi 0, %s48
    %s65 = sphi 0, %s49
    %s69 = sphi 0, %s69
    %s71 = sphi 0, %s69
    %s72 = sphi 0, %s71
    %s86 = sphi 0, %s72
    %s90 = sphi 0, %s90
    %s92 = sphi 0, %s90
    %s93 = sphi 0, %s92
    %s107 = sphi 0, %s93
  $region4: #{_lambda_.2} parent=0 // loop_header_branch
    %12 = sbr.rel (%p10) target = $region8
  $region5: #{_lambda_.2} parent=0 // loop_body
    %s14 = ssub.s32 %s9, 1
    %s15 = ssub.s32 %s9, 2
    %s16 = sadd.s32 %s9, 1
    %s17 = ssub.s32 %s9, %s16
    %p18 = scmp.eq.s32.totalorder %s17, 0
    %s20 = sadd.s32 %s19, 1
    %s21 = scalar_select %p18, %s19, %s20
    %p24 = pneg %p18
    %p25 = scmp.eq.s32.totalorder %s9, 2
    %p26 = por %p24, %p25
    %p27 = scmp.ne.s32.totalorder %s19, %s22
    %p28 = scmp.eq.s32.totalorder %s9, 0
    %p29 = por %p27, %p28
    %p30 = scmp.ne.s32.totalorder %s19, %s22
    %p31 = scmp.eq.s32.totalorder %s14, 2
    %p32 = por %p30, %p31
    %p33 = scmp.ne.s32.totalorder %s22, %s23
    %p34 = scmp.eq.s32.totalorder %s14, 0
    %p35 = por %p33, %p34
    %p36 = scmp.ne.s32.totalorder %s22, %s23
    %p37 = scmp.eq.s32.totalorder %s15, 2
    %p38 = por %p36, %p37
    %p40 = scmp.ne.s32.totalorder %s23, %s39
    %p41 = scmp.eq.s32.totalorder %s15, 0
    %p42 = por %p40, %p41
    %s43 = ssub.s32 %s9, %s16
    %p44 = scmp.eq.s32.totalorder %s43, 0
    %s46 = sadd.s32 %s45, 1
    %s47 = scalar_select %p44, %s45, %s46
    %p50 = pneg %p44
    %p51 = scmp.eq.s32.totalorder %s9, 2
    %p52 = por %p50, %p51
    %p53 = scmp.ne.s32.totalorder %s45, %s48
    %p54 = scmp.eq.s32.totalorder %s9, 0
    %p55 = por %p53, %p54
    %p56 = scmp.ne.s32.totalorder %s45, %s48
    %p57 = scmp.eq.s32.totalorder %s14, 2
    %p58 = por %p56, %p57
    %p59 = scmp.ne.s32.totalorder %s48, %s49
    %p60 = scmp.eq.s32.totalorder %s14, 0
    %p61 = por %p59, %p60
    %p62 = scmp.ne.s32.totalorder %s48, %s49
    %p63 = scmp.eq.s32.totalorder %s15, 2
    %p64 = por %p62, %p63
    %p66 = scmp.ne.s32.totalorder %s49, %s65
    %p67 = scmp.eq.s32.totalorder %s15, 0
    %p68 = por %p66, %p67
    %s70 = sadd.s32 %s69, 1
    %p73 = scmp.eq.s32.totalorder %s9, 2
    %p74 = scmp.ne.s32.totalorder %s69, %s71
    %p75 = scmp.eq.s32.totalorder %s9, 0
    %p76 = por %p74, %p75
    %p77 = scmp.ne.s32.totalorder %s69, %s71
    %p78 = scmp.eq.s32.totalorder %s14, 2
    %p79 = por %p77, %p78
    %p80 = scmp.ne.s32.totalorder %s71, %s72
    %p81 = scmp.eq.s32.totalorder %s14, 0
    %p82 = por %p80, %p81
    %p83 = scmp.ne.s32.totalorder %s71, %s72
    %p84 = scmp.eq.s32.totalorder %s15, 2
    %p85 = por %p83, %p84
    %p87 = scmp.ne.s32.totalorder %s72, %s86
    %p88 = scmp.eq.s32.totalorder %s15, 0
    %p89 = por %p87, %p88
    %s91 = sadd.s32 %s90, 1
    %p94 = scmp.eq.s32.totalorder %s9, 2
    %p95 = scmp.ne.s32.totalorder %s90, %s92
    %p96 = scmp.eq.s32.totalorder %s9, 0
    %p97 = por %p95, %p96
    %p98 = scmp.ne.s32.totalorder %s90, %s92
    %p99 = scmp.eq.s32.totalorder %s14, 2
    %p100 = por %p98, %p99
    %p101 = scmp.ne.s32.totalorder %s92, %s93
    %p102 = scmp.eq.s32.totalorder %s14, 0
    %p103 = por %p101, %p102
    %p104 = scmp.ne.s32.totalorder %s92, %s93
    %p105 = scmp.eq.s32.totalorder %s15, 2
    %p106 = por %p104, %p105
    %p108 = scmp.ne.s32.totalorder %s93, %s107
    %p109 = scmp.eq.s32.totalorder %s15, 0
    %p110 = por %p108, %p109
    %p111 = scmp.le.s32.totalorder 1, %s9
    %p112 = scmp.lt.s32.totalorder %s9, 4
    %p113 = pnand %p111, %p112
    %p114 = pneg %p113
    // Predicated region
    $region9: #{_lambda_.2} parent=5 // pred_check
      _
    $region10: #{_lambda_.2} parent=5 // pred_check_branch
      %116 = sbr.rel (%p113) target = $region12
    $region11: #{_lambda_.2} parent=5 // pred_region
      %s117 = ssub.s32 %s9, 1
      // Predicated region
      $region13: #{_lambda_.2} parent=11 // pred_check
        %p118 = pneg %p82
      $region14: #{_lambda_.2} parent=11 // pred_check_branch
        %120 = sbr.rel (%p118) target = $region16
      $region15: #{_lambda_.2} parent=11 // pred_region
        _
      $region16: #{_lambda_.2} parent=11 // pred_fallthru
        _
    $region12: #{_lambda_.2} parent=5 // pred_fallthru
      _
    %p121 = scmp.lt.s32.totalorder %s9, 3
    // Predicated region
    $region17: #{_lambda_.2} parent=5 // pred_check
      %p122 = pneg %p121
    $region18: #{_lambda_.2} parent=5 // pred_check_branch
      %124 = sbr.rel (%p122) target = $region20
    $region19: #{_lambda_.2} parent=5 // pred_region
      // Predicated region
      $region21: #{_lambda_.2} parent=19 // pred_check
        %p125 = pneg %p29
      $region22: #{_lambda_.2} parent=19 // pred_check_branch
        %127 = sbr.rel (%p125) target = $region24
      $region23: #{_lambda_.2} parent=19 // pred_region
        %s128 = smul.u32 8, %s9
        %p129 = scmp.lt.s32.totalorder %s128, 23
        %s130 = scalar_select %p129, %s128, 23
        %s131 = smul.addr %s130, 4
        %s132 = scalar_lea.vmem %s0, %s131
        %s133 = smul.u32 8, %s9
      $region24: #{_lambda_.2} parent=19 // pred_fallthru
        _
      // Predicated region
      $region25: #{_lambda_.2} parent=19 // pred_check
        %p134 = pneg %p55
      $region26: #{_lambda_.2} parent=19 // pred_check_branch
        %136 = sbr.rel (%p134) target = $region28
      $region27: #{_lambda_.2} parent=19 // pred_region
        %s137 = smul.u32 128, %s9
        %p138 = scmp.lt.s32.totalorder %s137, 383
        %s139 = scalar_select %p138, %s137, 383
        %s140 = smul.addr %s139, 4
        %s141 = scalar_lea.vmem %s1, %s140
        %s142 = smul.u32 128, %s9
      $region28: #{_lambda_.2} parent=19 // pred_fallthru
        _
    $region20: #{_lambda_.2} parent=5 // pred_fallthru
      _
    %p143 = scmp.le.s32.totalorder 1, %s9
    %p144 = scmp.lt.s32.totalorder %s9, 4
    %p145 = pnand %p143, %p144
    %p146 = pneg %p145
    // Predicated region
    $region29: #{_lambda_.2} parent=5 // pred_check
      _
    $region30: #{_lambda_.2} parent=5 // pred_check_branch
      %148 = sbr.rel (%p145) target = $region32
    $region31: #{_lambda_.2} parent=5 // pred_region
      %s149 = ssub.s32 %s9, 1
      %s150 = smul.u32 8, %s14
      %p151 = scmp.lt.s32.totalorder %s150, 23
      %s152 = scalar_select %p151, %s150, 23
      %s153 = smul.addr %s152, 4
      %s154 = scalar_lea.vmem %s0, %s153
      %p155 = pneg %p35
      %p156 = pneg %p32
      %s157 = smul.u32 128, %s14
      %p158 = scmp.lt.s32.totalorder %s157, 383
      %s159 = scalar_select %p158, %s157, 383
      %s160 = smul.addr %s159, 4
      %s161 = scalar_lea.vmem %s1, %s160
      %p162 = pneg %p61
      %p163 = pneg %p58
      %p164 = pneg %p82
      %p165 = pneg %p79
      %p166 = pneg %p103
      %p167 = pneg %p100
      %s168 = smul.u32 8, %s14
      %p169 = scmp.lt.s32.totalorder %s168, 23
      %s170 = scalar_select %p169, %s168, 23
      %s171 = smul.addr %s170, 4
      %s172 = scalar_lea.vmem %s0, %s171
      %s173 = smul.u32 8, %s14
      %s174 = smul.u32 128, %s14
      %p175 = scmp.lt.s32.totalorder %s174, 383
      %s176 = scalar_select %p175, %s174, 383
      %s177 = smul.addr %s176, 4
      %s178 = scalar_lea.vmem %s1, %s177
      %s179 = smul.u32 128, %s14
      %p180 = scmp.eq.s32.totalorder %s14, 0
      // Predicated region
      $region33: #{_lambda_.2} parent=31 // pred_check
        %p181 = pneg %p180
      $region34: #{_lambda_.2} parent=31 // pred_check_branch
        %183 = sbr.rel (%p181) target = $region36
      $region35: #{_lambda_.2} parent=31 // pred_region
        %184 = vst [vmem:[#allocation2] sm:$0xff] 0.0
      $region36: #{_lambda_.2} parent=31 // pred_fallthru
        _
      %v185 = vld [vmem:[#allocation2] sm:$0xff]
      %v186 = vld [vmem:[%s172] sm:$0xff]
      %v187 = vld [vmem:[%s172 + $0x8] sm:$0xff]
      %v188 = vld [vmem:[%s172 + $0x10] sm:$0xff]
      %v189 = vld [vmem:[%s172 + $0x18] sm:$0xff]
      %v190 = vld [vmem:[%s178] sm:$0xf]
      %v191 = vld [vmem:[%s178 + $0x4] sm:$0xf]
      %v192 = vld [vmem:[%s178 + $0x8] sm:$0xf]
      %v193 = vld [vmem:[%s178 + $0xc] sm:$0xf]
      %v194 = vld [vmem:[%s178 + $0x10] sm:$0xf]
      %v195 = vld [vmem:[%s178 + $0x14] sm:$0xf]
      %v196 = vld [vmem:[%s178 + $0x18] sm:$0xf]
      %v197 = vld [vmem:[%s178 + $0x1c] sm:$0xf]
      %v198 = vld [vmem:[%s178 + $0x20] sm:$0xf]
      %v199 = vld [vmem:[%s178 + $0x24] sm:$0xf]
      %v200 = vld [vmem:[%s178 + $0x28] sm:$0xf]
      %v201 = vld [vmem:[%s178 + $0x2c] sm:$0xf]
      %v202 = vld [vmem:[%s178 + $0x30] sm:$0xf]
      %v203 = vld [vmem:[%s178 + $0x34] sm:$0xf]
      %v204 = vld [vmem:[%s178 + $0x38] sm:$0xf]
      %v205 = vld [vmem:[%s178 + $0x3c] sm:$0xf]
      %v206 = vld [vmem:[%s178 + $0x40] sm:$0xf]
      %v207 = vld [vmem:[%s178 + $0x44] sm:$0xf]
      %v208 = vld [vmem:[%s178 + $0x48] sm:$0xf]
      %v209 = vld [vmem:[%s178 + $0x4c] sm:$0xf]
      %v210 = vld [vmem:[%s178 + $0x50] sm:$0xf]
      %v211 = vld [vmem:[%s178 + $0x54] sm:$0xf]
      %v212 = vld [vmem:[%s178 + $0x58] sm:$0xf]
      %v213 = vld [vmem:[%s178 + $0x5c] sm:$0xf]
      %v214 = vld [vmem:[%s178 + $0x60] sm:$0xf]
      %v215 = vld [vmem:[%s178 + $0x64] sm:$0xf]
      %v216 = vld [vmem:[%s178 + $0x68] sm:$0xf]
      %v217 = vld [vmem:[%s178 + $0x6c] sm:$0xf]
      %v218 = vld [vmem:[%s178 + $0x70] sm:$0xf]
      %v219 = vld [vmem:[%s178 + $0x74] sm:$0xf]
      %v220 = vld [vmem:[%s178 + $0x78] sm:$0xf]
      %v221 = vld [vmem:[%s178 + $0x7c] sm:$0xf]
      %v222 = vld [vmem:[%s178 + $0x80] sm:$0xf]
      %v223 = vld [vmem:[%s178 + $0x84] sm:$0xf]
      %v224 = vld [vmem:[%s178 + $0x88] sm:$0xf]
      %v225 = vld [vmem:[%s178 + $0x8c] sm:$0xf]
      %v226 = vld [vmem:[%s178 + $0x90] sm:$0xf]
      %v227 = vld [vmem:[%s178 + $0x94] sm:$0xf]
      %v228 = vld [vmem:[%s178 + $0x98] sm:$0xf]
      %v229 = vld [vmem:[%s178 + $0x9c] sm:$0xf]
      %v230 = vld [vmem:[%s178 + $0xa0] sm:$0xf]
      %v231 = vld [vmem:[%s178 + $0xa4] sm:$0xf]
      %v232 = vld [vmem:[%s178 + $0xa8] sm:$0xf]
      %v233 = vld [vmem:[%s178 + $0xac] sm:$0xf]
      %v234 = vld [vmem:[%s178 + $0xb0] sm:$0xf]
      %v235 = vld [vmem:[%s178 + $0xb4] sm:$0xf]
      %v236 = vld [vmem:[%s178 + $0xb8] sm:$0xf]
      %v237 = vld [vmem:[%s178 + $0xbc] sm:$0xf]
      %v238 = vld [vmem:[%s178 + $0xc0] sm:$0xf]
      %v239 = vld [vmem:[%s178 + $0xc4] sm:$0xf]
      %v240 = vld [vmem:[%s178 + $0xc8] sm:$0xf]
      %v241 = vld [vmem:[%s178 + $0xcc] sm:$0xf]
      %v242 = vld [vmem:[%s178 + $0xd0] sm:$0xf]
      %v243 = vld [vmem:[%s178 + $0xd4] sm:$0xf]
      %v244 = vld [vmem:[%s178 + $0xd8] sm:$0xf]
      %v245 = vld [vmem:[%s178 + $0xdc] sm:$0xf]
      %v246 = vld [vmem:[%s178 + $0xe0] sm:$0xf]
      %v247 = vld [vmem:[%s178 + $0xe4] sm:$0xf]
      %v248 = vld [vmem:[%s178 + $0xe8] sm:$0xf]
      %v249 = vld [vmem:[%s178 + $0xec] sm:$0xf]
      %v250 = vld [vmem:[%s178 + $0xf0] sm:$0xf]
      %v251 = vld [vmem:[%s178 + $0xf4] sm:$0xf]
      %v252 = vld [vmem:[%s178 + $0xf8] sm:$0xf]
      %v253 = vld [vmem:[%s178 + $0xfc] sm:$0xf]
      %v254 = vld [vmem:[%s178 + $0x100] sm:$0xf]
      %v255 = vld [vmem:[%s178 + $0x104] sm:$0xf]
      %v256 = vld [vmem:[%s178 + $0x108] sm:$0xf]
      %v257 = vld [vmem:[%s178 + $0x10c] sm:$0xf]
      %v258 = vld [vmem:[%s178 + $0x110] sm:$0xf]
      %v259 = vld [vmem:[%s178 + $0x114] sm:$0xf]
      %v260 = vld [vmem:[%s178 + $0x118] sm:$0xf]
      %v261 = vld [vmem:[%s178 + $0x11c] sm:$0xf]
      %v262 = vld [vmem:[%s178 + $0x120] sm:$0xf]
      %v263 = vld [vmem:[%s178 + $0x124] sm:$0xf]
      %v264 = vld [vmem:[%s178 + $0x128] sm:$0xf]
      %v265 = vld [vmem:[%s178 + $0x12c] sm:$0xf]
      %v266 = vld [vmem:[%s178 + $0x130] sm:$0xf]
      %v267 = vld [vmem:[%s178 + $0x134] sm:$0xf]
      %v268 = vld [vmem:[%s178 + $0x138] sm:$0xf]
      %v269 = vld [vmem:[%s178 + $0x13c] sm:$0xf]
      %v270 = vld [vmem:[%s178 + $0x140] sm:$0xf]
      %v271 = vld [vmem:[%s178 + $0x144] sm:$0xf]
      %v272 = vld [vmem:[%s178 + $0x148] sm:$0xf]
      %v273 = vld [vmem:[%s178 + $0x14c] sm:$0xf]
      %v274 = vld [vmem:[%s178 + $0x150] sm:$0xf]
      %v275 = vld [vmem:[%s178 + $0x154] sm:$0xf]
      %v276 = vld [vmem:[%s178 + $0x158] sm:$0xf]
      %v277 = vld [vmem:[%s178 + $0x15c] sm:$0xf]
      %v278 = vld [vmem:[%s178 + $0x160] sm:$0xf]
      %v279 = vld [vmem:[%s178 + $0x164] sm:$0xf]
      %v280 = vld [vmem:[%s178 + $0x168] sm:$0xf]
      %v281 = vld [vmem:[%s178 + $0x16c] sm:$0xf]
      %v282 = vld [vmem:[%s178 + $0x170] sm:$0xf]
      %v283 = vld [vmem:[%s178 + $0x174] sm:$0xf]
      %v284 = vld [vmem:[%s178 + $0x178] sm:$0xf]
      %v285 = vld [vmem:[%s178 + $0x17c] sm:$0xf]
      %v286 = vld [vmem:[%s178 + $0x180] sm:$0xf]
      %v287 = vld [vmem:[%s178 + $0x184] sm:$0xf]
      %v288 = vld [vmem:[%s178 + $0x188] sm:$0xf]
      %v289 = vld [vmem:[%s178 + $0x18c] sm:$0xf]
      %v290 = vld [vmem:[%s178 + $0x190] sm:$0xf]
      %v291 = vld [vmem:[%s178 + $0x194] sm:$0xf]
      %v292 = vld [vmem:[%s178 + $0x198] sm:$0xf]
      %v293 = vld [vmem:[%s178 + $0x19c] sm:$0xf]
      %v294 = vld [vmem:[%s178 + $0x1a0] sm:$0xf]
      %v295 = vld [vmem:[%s178 + $0x1a4] sm:$0xf]
      %v296 = vld [vmem:[%s178 + $0x1a8] sm:$0xf]
      %v297 = vld [vmem:[%s178 + $0x1ac] sm:$0xf]
      %v298 = vld [vmem:[%s178 + $0x1b0] sm:$0xf]
      %v299 = vld [vmem:[%s178 + $0x1b4] sm:$0xf]
      %v300 = vld [vmem:[%s178 + $0x1b8] sm:$0xf]
      %v301 = vld [vmem:[%s178 + $0x1bc] sm:$0xf]
      %v302 = vld [vmem:[%s178 + $0x1c0] sm:$0xf]
      %v303 = vld [vmem:[%s178 + $0x1c4] sm:$0xf]
      %v304 = vld [vmem:[%s178 + $0x1c8] sm:$0xf]
      %v305 = vld [vmem:[%s178 + $0x1cc] sm:$0xf]
      %v306 = vld [vmem:[%s178 + $0x1d0] sm:$0xf]
      %v307 = vld [vmem:[%s178 + $0x1d4] sm:$0xf]
      %v308 = vld [vmem:[%s178 + $0x1d8] sm:$0xf]
      %v309 = vld [vmem:[%s178 + $0x1dc] sm:$0xf]
      %v310 = vld [vmem:[%s178 + $0x1e0] sm:$0xf]
      %v311 = vld [vmem:[%s178 + $0x1e4] sm:$0xf]
      %v312 = vld [vmem:[%s178 + $0x1e8] sm:$0xf]
      %v313 = vld [vmem:[%s178 + $0x1ec] sm:$0xf]
      %v314 = vld [vmem:[%s178 + $0x1f0] sm:$0xf]
      %v315 = vld [vmem:[%s178 + $0x1f4] sm:$0xf]
      %v316 = vld [vmem:[%s178 + $0x1f8] sm:$0xf]
      %v317 = vld [vmem:[%s178 + $0x1fc] sm:$0xf]
      %v322 = vunpack.c.l.b16 %v186
      %v323 = vunpack.c.h.b16 %v186
      %v324 = vunpack.c.l.b16 %v187
      %v325 = vunpack.c.h.b16 %v187
      %v326 = vunpack.c.l.b16 %v188
      %v327 = vunpack.c.h.b16 %v188
      %v328 = vunpack.c.l.b16 %v189
      %v329 = vunpack.c.h.b16 %v189
      %v330 = vpack.c.b16 %v322, %v322
      %v331 = vpack.c.b16 %v323, %v323
      %v332 = vpack.c.b16 %v324, %v324
      %v333 = vpack.c.b16 %v325, %v325
      %v334 = vpack.c.b16 %v326, %v326
      %v335 = vpack.c.b16 %v327, %v327
      %v336 = vpack.c.b16 %v328, %v328
      %v337 = vpack.c.b16 %v329, %v329
      %v474 = vunpack.c.l.b16 %v190
      %v475 = vunpack.c.l.b16 %v191
      %v476 = vunpack.c.l.b16 %v192
      %v477 = vunpack.c.l.b16 %v193
      %v478 = vunpack.c.l.b16 %v194
      %v479 = vunpack.c.l.b16 %v195
      %v480 = vunpack.c.l.b16 %v196
      %v481 = vunpack.c.l.b16 %v197
      %v482 = vunpack.c.l.b16 %v198
      %v483 = vunpack.c.l.b16 %v199
      %v484 = vunpack.c.l.b16 %v200
      %v485 = vunpack.c.l.b16 %v201
      %v486 = vunpack.c.l.b16 %v202
      %v487 = vunpack.c.l.b16 %v203
      %v488 = vunpack.c.l.b16 %v204
      %v489 = vunpack.c.l.b16 %v205
      %v490 = vunpack.c.l.b16 %v206
      %v491 = vunpack.c.l.b16 %v207
      %v492 = vunpack.c.l.b16 %v208
      %v493 = vunpack.c.l.b16 %v209
      %v494 = vunpack.c.l.b16 %v210
      %v495 = vunpack.c.l.b16 %v211
      %v496 = vunpack.c.l.b16 %v212
      %v497 = vunpack.c.l.b16 %v213
      %v498 = vunpack.c.l.b16 %v214
      %v499 = vunpack.c.l.b16 %v215
      %v500 = vunpack.c.l.b16 %v216
      %v501 = vunpack.c.l.b16 %v217
      %v502 = vunpack.c.l.b16 %v218
      %v503 = vunpack.c.l.b16 %v219
      %v504 = vunpack.c.l.b16 %v220
      %v505 = vunpack.c.l.b16 %v221
      %v506 = vunpack.c.l.b16 %v222
      %v507 = vunpack.c.l.b16 %v223
      %v508 = vunpack.c.l.b16 %v224
      %v509 = vunpack.c.l.b16 %v225
      %v510 = vunpack.c.l.b16 %v226
      %v511 = vunpack.c.l.b16 %v227
      %v512 = vunpack.c.l.b16 %v228
      %v513 = vunpack.c.l.b16 %v229
      %v514 = vunpack.c.l.b16 %v230
      %v515 = vunpack.c.l.b16 %v231
      %v516 = vunpack.c.l.b16 %v232
      %v517 = vunpack.c.l.b16 %v233
      %v518 = vunpack.c.l.b16 %v234
      %v519 = vunpack.c.l.b16 %v235
      %v520 = vunpack.c.l.b16 %v236
      %v521 = vunpack.c.l.b16 %v237
      %v522 = vunpack.c.l.b16 %v238
      %v523 = vunpack.c.l.b16 %v239
      %v524 = vunpack.c.l.b16 %v240
      %v525 = vunpack.c.l.b16 %v241
      %v526 = vunpack.c.l.b16 %v242
      %v527 = vunpack.c.l.b16 %v243
      %v528 = vunpack.c.l.b16 %v244
      %v529 = vunpack.c.l.b16 %v245
      %v530 = vunpack.c.l.b16 %v246
      %v531 = vunpack.c.l.b16 %v247
      %v532 = vunpack.c.l.b16 %v248
      %v533 = vunpack.c.l.b16 %v249
      %v534 = vunpack.c.l.b16 %v250
      %v535 = vunpack.c.l.b16 %v251
      %v536 = vunpack.c.l.b16 %v252
      %v537 = vunpack.c.l.b16 %v253
      %v538 = vunpack.c.l.b16 %v254
      %v539 = vunpack.c.l.b16 %v255
      %v540 = vunpack.c.l.b16 %v256
      %v541 = vunpack.c.l.b16 %v257
      %v542 = vunpack.c.l.b16 %v258
      %v543 = vunpack.c.l.b16 %v259
      %v544 = vunpack.c.l.b16 %v260
      %v545 = vunpack.c.l.b16 %v261
      %v546 = vunpack.c.l.b16 %v262
      %v547 = vunpack.c.l.b16 %v263
      %v548 = vunpack.c.l.b16 %v264
      %v549 = vunpack.c.l.b16 %v265
      %v550 = vunpack.c.l.b16 %v266
      %v551 = vunpack.c.l.b16 %v267
      %v552 = vunpack.c.l.b16 %v268
      %v553 = vunpack.c.l.b16 %v269
      %v554 = vunpack.c.l.b16 %v270
      %v555 = vunpack.c.l.b16 %v271
      %v556 = vunpack.c.l.b16 %v272
      %v557 = vunpack.c.l.b16 %v273
      %v558 = vunpack.c.l.b16 %v274
      %v559 = vunpack.c.l.b16 %v275
      %v560 = vunpack.c.l.b16 %v276
      %v561 = vunpack.c.l.b16 %v277
      %v562 = vunpack.c.l.b16 %v278
      %v563 = vunpack.c.l.b16 %v279
      %v564 = vunpack.c.l.b16 %v280
      %v565 = vunpack.c.l.b16 %v281
      %v566 = vunpack.c.l.b16 %v282
      %v567 = vunpack.c.l.b16 %v283
      %v568 = vunpack.c.l.b16 %v284
      %v569 = vunpack.c.l.b16 %v285
      %v570 = vunpack.c.l.b16 %v286
      %v571 = vunpack.c.l.b16 %v287
      %v572 = vunpack.c.l.b16 %v288
      %v573 = vunpack.c.l.b16 %v289
      %v574 = vunpack.c.l.b16 %v290
      %v575 = vunpack.c.l.b16 %v291
      %v576 = vunpack.c.l.b16 %v292
      %v577 = vunpack.c.l.b16 %v293
      %v578 = vunpack.c.l.b16 %v294
      %v579 = vunpack.c.l.b16 %v295
      %v580 = vunpack.c.l.b16 %v296
      %v581 = vunpack.c.l.b16 %v297
      %v582 = vunpack.c.l.b16 %v298
      %v583 = vunpack.c.l.b16 %v299
      %v584 = vunpack.c.l.b16 %v300
      %v585 = vunpack.c.l.b16 %v301
      %v586 = vunpack.c.l.b16 %v302
      %v587 = vunpack.c.l.b16 %v303
      %v588 = vunpack.c.l.b16 %v304
      %v589 = vunpack.c.l.b16 %v305
      %v590 = vunpack.c.l.b16 %v306
      %v591 = vunpack.c.l.b16 %v307
      %v592 = vunpack.c.l.b16 %v308
      %v593 = vunpack.c.l.b16 %v309
      %v594 = vunpack.c.l.b16 %v310
      %v595 = vunpack.c.l.b16 %v311
      %v596 = vunpack.c.l.b16 %v312
      %v597 = vunpack.c.l.b16 %v313
      %v598 = vunpack.c.l.b16 %v314
      %v599 = vunpack.c.l.b16 %v315
      %v600 = vunpack.c.l.b16 %v316
      %v601 = vunpack.c.l.b16 %v317
      %v602 = vpack.c.b16 %v475, %v474
      %v603 = vpack.c.b16 %v477, %v476
      %v604 = vpack.c.b16 %v479, %v478
      %v605 = vpack.c.b16 %v481, %v480
      %v606 = vpack.c.b16 %v483, %v482
      %v607 = vpack.c.b16 %v485, %v484
      %v608 = vpack.c.b16 %v487, %v486
      %v609 = vpack.c.b16 %v489, %v488
      %v610 = vpack.c.b16 %v491, %v490
      %v611 = vpack.c.b16 %v493, %v492
      %v612 = vpack.c.b16 %v495, %v494
      %v613 = vpack.c.b16 %v497, %v496
      %v614 = vpack.c.b16 %v499, %v498
      %v615 = vpack.c.b16 %v501, %v500
      %v616 = vpack.c.b16 %v503, %v502
      %v617 = vpack.c.b16 %v505, %v504
      %v618 = vpack.c.b16 %v507, %v506
      %v619 = vpack.c.b16 %v509, %v508
      %v620 = vpack.c.b16 %v511, %v510
      %v621 = vpack.c.b16 %v513, %v512
      %v622 = vpack.c.b16 %v515, %v514
      %v623 = vpack.c.b16 %v517, %v516
      %v624 = vpack.c.b16 %v519, %v518
      %v625 = vpack.c.b16 %v521, %v520
      %v626 = vpack.c.b16 %v523, %v522
      %v627 = vpack.c.b16 %v525, %v524
      %v628 = vpack.c.b16 %v527, %v526
      %v629 = vpack.c.b16 %v529, %v528
      %v630 = vpack.c.b16 %v531, %v530
      %v631 = vpack.c.b16 %v533, %v532
      %v632 = vpack.c.b16 %v535, %v534
      %v633 = vpack.c.b16 %v537, %v536
      %v634 = vpack.c.b16 %v539, %v538
      %v635 = vpack.c.b16 %v541, %v540
      %v636 = vpack.c.b16 %v543, %v542
      %v637 = vpack.c.b16 %v545, %v544
      %v638 = vpack.c.b16 %v547, %v546
      %v639 = vpack.c.b16 %v549, %v548
      %v640 = vpack.c.b16 %v551, %v550
      %v641 = vpack.c.b16 %v553, %v552
      %v642 = vpack.c.b16 %v555, %v554
      %v643 = vpack.c.b16 %v557, %v556
      %v644 = vpack.c.b16 %v559, %v558
      %v645 = vpack.c.b16 %v561, %v560
      %v646 = vpack.c.b16 %v563, %v562
      %v647 = vpack.c.b16 %v565, %v564
      %v648 = vpack.c.b16 %v567, %v566
      %v649 = vpack.c.b16 %v569, %v568
      %v650 = vpack.c.b16 %v571, %v570
      %v651 = vpack.c.b16 %v573, %v572
      %v652 = vpack.c.b16 %v575, %v574
      %v653 = vpack.c.b16 %v577, %v576
      %v654 = vpack.c.b16 %v579, %v578
      %v655 = vpack.c.b16 %v581, %v580
      %v656 = vpack.c.b16 %v583, %v582
      %v657 = vpack.c.b16 %v585, %v584
      %v658 = vpack.c.b16 %v587, %v586
      %v659 = vpack.c.b16 %v589, %v588
      %v660 = vpack.c.b16 %v591, %v590
      %v661 = vpack.c.b16 %v593, %v592
      %v662 = vpack.c.b16 %v595, %v594
      %v663 = vpack.c.b16 %v597, %v596
      %v664 = vpack.c.b16 %v599, %v598
      %v665 = vpack.c.b16 %v601, %v600
      %730 = vmatpush.bf16.msra.mxu0 %v609
      %731 = vmatpush.bf16.msra.mxu0 %v608
      %732 = vmatpush.bf16.msra.mxu0 %v607
      %733 = vmatpush.bf16.msra.mxu0 %v606
      %734 = vmatpush.bf16.msra.mxu0 %v605
      %735 = vmatpush.bf16.msra.mxu0 %v604
      %736 = vmatpush.bf16.msra.mxu0 %v603
      %737 = vmatpush.bf16.msra.mxu0 %v602
      %738 = vmatmul.bf16.gmra.mxu0 %v330
      %v739 = vpop.f32.mrf.mxu0
      %v740 = vadd.f32 0.0, %v739
      %v741 = vpop.f32.mrf.mxu0
      %742 = vdwg.mxu0
      %743 = vmatpush.bf16.msra.mxu0 %v617
      %744 = vmatpush.bf16.msra.mxu0 %v616
      %745 = vmatpush.bf16.msra.mxu0 %v615
      %746 = vmatpush.bf16.msra.mxu0 %v614
      %747 = vmatpush.bf16.msra.mxu0 %v613
      %748 = vmatpush.bf16.msra.mxu0 %v612
      %749 = vmatpush.bf16.msra.mxu0 %v611
      %750 = vmatpush.bf16.msra.mxu0 %v610
      %751 = vmatmul.bf16.gmra.mxu0 %v331
      %v752 = vpop.f32.mrf.mxu0
      %v753 = vadd.f32 %v740, %v752
      %v754 = vpop.f32.mrf.mxu0
      %755 = vdwg.mxu0
      %756 = vmatpush.bf16.msra.mxu0 %v625
      %757 = vmatpush.bf16.msra.mxu0 %v624
      %758 = vmatpush.bf16.msra.mxu0 %v623
      %759 = vmatpush.bf16.msra.mxu0 %v622
      %760 = vmatpush.bf16.msra.mxu0 %v621
      %761 = vmatpush.bf16.msra.mxu0 %v620
      %762 = vmatpush.bf16.msra.mxu0 %v619
      %763 = vmatpush.bf16.msra.mxu0 %v618
      %764 = vmatmul.bf16.gmra.mxu0 %v332
      %v765 = vpop.f32.mrf.mxu0
      %v766 = vadd.f32 %v753, %v765
      %v767 = vpop.f32.mrf.mxu0
      %768 = vdwg.mxu0
      %769 = vmatpush.bf16.msra.mxu0 %v633
      %770 = vmatpush.bf16.msra.mxu0 %v632
      %771 = vmatpush.bf16.msra.mxu0 %v631
      %772 = vmatpush.bf16.msra.mxu0 %v630
      %773 = vmatpush.bf16.msra.mxu0 %v629
      %774 = vmatpush.bf16.msra.mxu0 %v628
      %775 = vmatpush.bf16.msra.mxu0 %v627
      %776 = vmatpush.bf16.msra.mxu0 %v626
      %777 = vmatmul.bf16.gmra.mxu0 %v333
      %v778 = vpop.f32.mrf.mxu0
      %v779 = vadd.f32 %v766, %v778
      %v780 = vpop.f32.mrf.mxu0
      %781 = vdwg.mxu0
      %782 = vmatpush.bf16.msra.mxu0 %v641
      %783 = vmatpush.bf16.msra.mxu0 %v640
      %784 = vmatpush.bf16.msra.mxu0 %v639
      %785 = vmatpush.bf16.msra.mxu0 %v638
      %786 = vmatpush.bf16.msra.mxu0 %v637
      %787 = vmatpush.bf16.msra.mxu0 %v636
      %788 = vmatpush.bf16.msra.mxu0 %v635
      %789 = vmatpush.bf16.msra.mxu0 %v634
      %790 = vmatmul.bf16.gmra.mxu0 %v334
      %v791 = vpop.f32.mrf.mxu0
      %v792 = vadd.f32 %v779, %v791
      %v793 = vpop.f32.mrf.mxu0
      %794 = vdwg.mxu0
      %795 = vmatpush.bf16.msra.mxu0 %v649
      %796 = vmatpush.bf16.msra.mxu0 %v648
      %797 = vmatpush.bf16.msra.mxu0 %v647
      %798 = vmatpush.bf16.msra.mxu0 %v646
      %799 = vmatpush.bf16.msra.mxu0 %v645
      %800 = vmatpush.bf16.msra.mxu0 %v644
      %801 = vmatpush.bf16.msra.mxu0 %v643
      %802 = vmatpush.bf16.msra.mxu0 %v642
      %803 = vmatmul.bf16.gmra.mxu0 %v335
      %v804 = vpop.f32.mrf.mxu0
      %v805 = vadd.f32 %v792, %v804
      %v806 = vpop.f32.mrf.mxu0
      %807 = vdwg.mxu0
      %808 = vmatpush.bf16.msra.mxu0 %v657
      %809 = vmatpush.bf16.msra.mxu0 %v656
      %810 = vmatpush.bf16.msra.mxu0 %v655
      %811 = vmatpush.bf16.msra.mxu0 %v654
      %812 = vmatpush.bf16.msra.mxu0 %v653
      %813 = vmatpush.bf16.msra.mxu0 %v652
      %814 = vmatpush.bf16.msra.mxu0 %v651
      %815 = vmatpush.bf16.msra.mxu0 %v650
      %816 = vmatmul.bf16.gmra.mxu0 %v336
      %v817 = vpop.f32.mrf.mxu0
      %v818 = vadd.f32 %v805, %v817
      %v819 = vpop.f32.mrf.mxu0
      %820 = vdwg.mxu0
      %821 = vmatpush.bf16.msra.mxu0 %v665
      %822 = vmatpush.bf16.msra.mxu0 %v664
      %823 = vmatpush.bf16.msra.mxu0 %v663
      %824 = vmatpush.bf16.msra.mxu0 %v662
      %825 = vmatpush.bf16.msra.mxu0 %v661
      %826 = vmatpush.bf16.msra.mxu0 %v660
      %827 = vmatpush.bf16.msra.mxu0 %v659
      %828 = vmatpush.bf16.msra.mxu0 %v658
      %829 = vmatmul.bf16.gmra.mxu0 %v337
      %v830 = vpop.f32.mrf.mxu0
      %v831 = vadd.f32 %v818, %v830
      %v832 = vpop.f32.mrf.mxu0
      %833 = vdwg.mxu0
      %v834 = vadd.f32 %v185, %v831
      %835 = vst [vmem:[#allocation2] sm:$0xff] %v834
      %p836 = scmp.eq.s32.totalorder %s14, 2
      // Predicated region
      $region37: #{_lambda_.2} parent=31 // pred_check
        %p837 = pneg %p836
      $region38: #{_lambda_.2} parent=31 // pred_check_branch
        %839 = sbr.rel (%p837) target = $region40
      $region39: #{_lambda_.2} parent=31 // pred_region
        %v840 = vld [vmem:[#allocation2] sm:$0xff]
        %v841 = vld [vmem:[%s2] sm:$0x1]
        %v843 = vperm.slane %v841, 0
        %v845 = vadd.f32 %v840, %v843
        %846 = vst [vmem:[%s3] sm:$0xff] %v845
      $region40: #{_lambda_.2} parent=31 // pred_fallthru
        _
      // Predicated region
      $region41: #{_lambda_.2} parent=31 // pred_check
        %p847 = pneg %p100
      $region42: #{_lambda_.2} parent=31 // pred_check_branch
        %849 = sbr.rel (%p847) target = $region44
      $region43: #{_lambda_.2} parent=31 // pred_region
        _
      $region44: #{_lambda_.2} parent=31 // pred_fallthru
        _
      // Predicated region
      $region45: #{_lambda_.2} parent=31 // pred_check
        %p850 = pneg %p100
      $region46: #{_lambda_.2} parent=31 // pred_check_branch
        %852 = sbr.rel (%p850) target = $region48
      $region47: #{_lambda_.2} parent=31 // pred_region
        _
      $region48: #{_lambda_.2} parent=31 // pred_fallthru
        _
    $region32: #{_lambda_.2} parent=5 // pred_fallthru
      _
    %p853 = scmp.le.s32.totalorder 2, %s9
    // Predicated region
    $region49: #{_lambda_.2} parent=5 // pred_check
      %p854 = pneg %p853
    $region50: #{_lambda_.2} parent=5 // pred_check_branch
      %856 = sbr.rel (%p854) target = $region52
    $region51: #{_lambda_.2} parent=5 // pred_region
      %s857 = ssub.s32 %s9, 2
    $region52: #{_lambda_.2} parent=5 // pred_fallthru
      _
  $region6: #{_lambda_.2} parent=0 // loop_footer
    %s13 = sadd.s32 1, %s9
  $region7: #{_lambda_.2} parent=0 // loop_footer_branch
    %8 = sbr.rel target = $region3
  $region8: #{_lambda_.2} parent=0 // loop_exit
    _

// kernel: _lambda_.3
$region0: #{_lambda_.3}
  #allocation0 [shape = 'u32[]', space=smem, size = 0x4, offset = 0x4, fixed_abs, tag = 'smem constant byte address 0x4 - core index']
  #allocation1 [shape = 'u32[72,128]{1,0:T(1,128)}', space=vmem, size = 0x9000, scoped, tag = 'internal scratch']
  #allocation2 [shape = 'f32[5,128]{1,0:T(8,128)}', space=vmem, size = 0x1000, scoped, tag = 'scratch operand']
  %s0 = inlined_call_operand.vmem [shape: f32[2,5,128], index: 0, kind: input, shape index: {}]
  %s1 = inlined_call_operand.vmem [shape: f32[2,1,128], index: 1, kind: input, shape index: {}, may-alias: {1,11}]
  %s2 = inlined_call_operand.vmem [shape: f32[2,1,128], index: 2, kind: input, shape index: {}, may-alias: {2,10,12,16}]
  %s3 = inlined_call_operand.vmem [shape: bf16[2,4,128,32], index: 3, kind: input, shape index: {}]
  %s4 = inlined_call_operand.vmem [shape: f32[2,4,1,32], index: 4, kind: input, shape index: {}, may-alias: {4,6,8}]
  %s5 = inlined_call_operand.hbm [shape: bf16[2,4,128,32], index: 5, kind: input, shape index: {}]
  %s6 = inlined_call_operand.vmem [shape: f32[2,4,1,32], index: 6, kind: input, shape index: {}, may-alias: {4,6,8}]
  %s7 = inlined_call_operand.hbm [shape: bf16[2,4,128,32], index: 7, kind: input, shape index: {}]
  %s8 = inlined_call_operand.vmem [shape: f32[2,4,1,32], index: 8, kind: input, shape index: {}, may-alias: {4,6,8}]
  %s9 = inlined_call_operand.vmem [shape: bf16[2,128,128], index: 9, kind: input, shape index: {}]
  %s10 = inlined_call_operand.vmem [shape: f32[2,1,128], index: 10, kind: input, shape index: {}, may-alias: {2,10,12,16}]
  %s11 = inlined_call_operand.vmem [shape: f32[2,1,128], index: 11, kind: input, shape index: {}, may-alias: {1,11}]
  %s12 = inlined_call_operand.vmem [shape: f32[2,1,128], index: 12, kind: input, shape index: {}, may-alias: {2,10,12,16}]
  %s13 = inlined_call_operand.vmem [shape: bf16[2,128,256], index: 13, kind: input, shape index: {}]
  %s14 = inlined_call_operand.vmem [shape: f32[2,1,256], index: 14, kind: input, shape index: {}]
  %s15 = inlined_call_operand.hbm [shape: bf16[2,256,128], index: 15, kind: input, shape index: {}]
  %s16 = inlined_call_operand.vmem [shape: f32[2,1,128], index: 16, kind: input, shape index: {}, may-alias: {2,10,12,16}]
  %s17 = inlined_call_operand.vmem [shape: f32[1,128], index: 17, kind: input, shape index: {}]
  %s18 = inlined_call_operand.vmem [shape: f32[1,128], index: 18, kind: input, shape index: {}]
  %s19 = inlined_call_operand.hbm [shape: f32[2,1,128], index: 19, kind: output, shape index: {}]
  %s20 = sld [smem:[#allocation0]]
  $region129: #{_lambda_.3} parent=0
    _
  %s22 = ssub.s32 1, %s20
  %s23 = scalar_select 0, %s22, %s20
  $region1: #{_lambda_.3} parent=0
    #allocation3 [shape = 'u8[262144]{0}', space=vmem, size = 0x40000, scoped, tag = 'input window, operand 5']
    #allocation4 [shape = 's32[2]{0}', space=sflag, size = 0x8, scoped, tag = 'scoped memory for _lambda_.3']
    #allocation5 [shape = 's32[2]{0}', space=sflag, size = 0x8, scoped, tag = 'scoped memory for _lambda_.3']
    #allocation6 [shape = 'u8[262144]{0}', space=vmem, size = 0x40000, scoped, tag = 'input window, operand 7']
    #allocation7 [shape = 's32[2]{0}', space=sflag, size = 0x8, scoped, tag = 'scoped memory for _lambda_.3']
    #allocation8 [shape = 'u8[131072]{0}', space=vmem, size = 0x20000, scoped, tag = 'input window, operand 15']
    #allocation9 [shape = 'u8[1024]{0}', space=vmem, size = 0x400, scoped, tag = 'output window, operand 0']
    %24 = vsyncpa [#allocation4], 0
    %s25 = scalar_lea.sflag [#allocation4], 1
    %26 = vsyncpa %s25, 0
    %27 = vsyncpa [#allocation7], 0
    %s28 = scalar_lea.sflag [#allocation7], 1
    %29 = vsyncpa %s28, 0
    %30 = vsyncpa [#allocation5], 0
    %s31 = scalar_lea.sflag [#allocation5], 1
    %32 = vsyncpa %s31, 0
    loop: start=0, step=1, limit=6
    $region2: #{_lambda_.3} parent=1 // loop_pre_header
      _
    $region3: #{_lambda_.3} parent=1 // loop_header
      %s34 = sphi 0, %s38
      %p35 = scmp.ge.s32.totalorder %s34, 6
      %s41 = sphi 0, %s53
      %s42 = sphi 0, %s49
      %s43 = sphi 0, %s41
      %s44 = sphi 0, %s42
      %s45 = sphi 0, %s43
      %s46 = sphi 0, %s44
      %s56 = sphi 0, %s58
      %s59 = sphi 0, %s56
      %s60 = sphi 0, %s59
      %s76 = sphi 0, %s60
      %s82 = sphi 0, %s84
      %s85 = sphi 0, %s82
      %s86 = sphi 0, %s85
      %s102 = sphi 0, %s86
      %s108 = sphi 0, %s110
      %s111 = sphi 0, %s108
      %s112 = sphi 0, %s111
      %s128 = sphi 0, %s112
      %s134 = sphi 0, %s136
      %s137 = sphi 0, %s134
      %s138 = sphi 0, %s137
      %s154 = sphi 0, %s138
      %s160 = sphi 0, %s162
      %s163 = sphi 0, %s160
      %s164 = sphi 0, %s163
      %s180 = sphi 0, %s164
      %s186 = sphi 0, %s188
      %s189 = sphi 0, %s186
      %s190 = sphi 0, %s189
      %s206 = sphi 0, %s190
      %s212 = sphi 0, %s214
      %s215 = sphi 0, %s212
      %s216 = sphi 0, %s215
      %s232 = sphi 0, %s216
      %s238 = sphi 0, %s240
      %s241 = sphi 0, %s238
      %s242 = sphi 0, %s241
      %s258 = sphi 0, %s242
      %s264 = sphi 0, %s266
      %s267 = sphi 0, %s264
      %s268 = sphi 0, %s267
      %s284 = sphi 0, %s268
      %s290 = sphi 0, %s292
      %s293 = sphi 0, %s290
      %s294 = sphi 0, %s293
      %s310 = sphi 0, %s294
      %s316 = sphi 0, %s318
      %s319 = sphi 0, %s316
      %s320 = sphi 0, %s319
      %s336 = sphi 0, %s320
      %s342 = sphi 0, %s344
      %s345 = sphi 0, %s342
      %s346 = sphi 0, %s345
      %s362 = sphi 0, %s346
      %s368 = sphi 0, %s370
      %s371 = sphi 0, %s368
      %s372 = sphi 0, %s371
      %s388 = sphi 0, %s372
      %s394 = sphi 0, %s396
      %s397 = sphi 0, %s394
      %s398 = sphi 0, %s397
      %s414 = sphi 0, %s398
      %s420 = sphi 0, %s422
      %s423 = sphi 0, %s420
      %s424 = sphi 0, %s423
      %s440 = sphi 0, %s424
      %s446 = sphi 0, %s448
      %s449 = sphi 0, %s446
      %s450 = sphi 0, %s449
      %s466 = sphi 0, %s450
      %s472 = sphi 0, %s474
      %s475 = sphi 0, %s472
      %s476 = sphi 0, %s475
      %s492 = sphi 0, %s476
      %s496 = sphi 0, %s496
      %s498 = sphi 0, %s496
      %s499 = sphi 0, %s498
      %s513 = sphi 0, %s499
      %s517 = sphi 0, %s517
      %s519 = sphi 0, %s517
      %s520 = sphi 0, %s519
      %s534 = sphi 0, %s520
      %s540 = sphi 0, %s542
      %s543 = sphi 0, %s540
      %s544 = sphi 0, %s543
      %s560 = sphi 0, %s544
    $region4: #{_lambda_.3} parent=1 // loop_header_branch
      %37 = sbr.rel (%p35) target = $region8
    $region5: #{_lambda_.3} parent=1 // loop_body
      %s39 = ssub.s32 %s34, 1
      %s40 = ssub.s32 %s34, 2
      %s47 = sadd.s32 1, %s42
      %p48 = scmp.ge.s32.totalorder %s47, 2
      %s49 = scalar_select %p48, 0, %s47
      %s50 = sadd.s32 1, %s41
      %s51 = scalar_select %p48, %s50, %s41
      %p52 = scmp.ge.s32.totalorder %s51, 2
      %s53 = scalar_select %p52, 0, %s51
      %s54 = ssub.s32 %s41, %s53
      %p55 = scmp.eq.s32.totalorder %s54, 0
      %s57 = sadd.s32 %s56, 1
      %s58 = scalar_select %p55, %s56, %s57
      %p61 = pneg %p55
      %p62 = scmp.eq.s32.totalorder %s34, 3
      %p63 = por %p61, %p62
      %p64 = scmp.ne.s32.totalorder %s56, %s59
      %p65 = scmp.eq.s32.totalorder %s34, 0
      %p66 = por %p64, %p65
      %p67 = scmp.ne.s32.totalorder %s56, %s59
      %p68 = scmp.eq.s32.totalorder %s39, 3
      %p69 = por %p67, %p68
      %p70 = scmp.ne.s32.totalorder %s59, %s60
      %p71 = scmp.eq.s32.totalorder %s39, 0
      %p72 = por %p70, %p71
      %p73 = scmp.ne.s32.totalorder %s59, %s60
      %p74 = scmp.eq.s32.totalorder %s40, 3
      %p75 = por %p73, %p74
      %p77 = scmp.ne.s32.totalorder %s60, %s76
      %p78 = scmp.eq.s32.totalorder %s40, 0
      %p79 = por %p77, %p78
      %s80 = ssub.s32 %s42, %s49
      %p81 = scmp.eq.s32.totalorder %s80, 0
      %s83 = sadd.s32 %s82, 1
      %s84 = scalar_select %p81, %s82, %s83
      %p87 = pneg %p81
      %p88 = scmp.eq.s32.totalorder %s34, 3
      %p89 = por %p87, %p88
      %p90 = scmp.ne.s32.totalorder %s82, %s85
      %p91 = scmp.eq.s32.totalorder %s34, 0
      %p92 = por %p90, %p91
      %p93 = scmp.ne.s32.totalorder %s82, %s85
      %p94 = scmp.eq.s32.totalorder %s39, 3
      %p95 = por %p93, %p94
      %p96 = scmp.ne.s32.totalorder %s85, %s86
      %p97 = scmp.eq.s32.totalorder %s39, 0
      %p98 = por %p96, %p97
      %p99 = scmp.ne.s32.totalorder %s85, %s86
      %p100 = scmp.eq.s32.totalorder %s40, 3
      %p101 = por %p99, %p100
      %p103 = scmp.ne.s32.totalorder %s86, %s102
      %p104 = scmp.eq.s32.totalorder %s40, 0
      %p105 = por %p103, %p104
      %s106 = ssub.s32 %s42, %s49
      %p107 = scmp.eq.s32.totalorder %s106, 0
      %s109 = sadd.s32 %s108, 1
      %s110 = scalar_select %p107, %s108, %s109
      %p113 = pneg %p107
      %p114 = scmp.eq.s32.totalorder %s34, 3
      %p115 = por %p113, %p114
      %p116 = scmp.ne.s32.totalorder %s108, %s111
      %p117 = scmp.eq.s32.totalorder %s34, 0
      %p118 = por %p116, %p117
      %p119 = scmp.ne.s32.totalorder %s108, %s111
      %p120 = scmp.eq.s32.totalorder %s39, 3
      %p121 = por %p119, %p120
      %p122 = scmp.ne.s32.totalorder %s111, %s112
      %p123 = scmp.eq.s32.totalorder %s39, 0
      %p124 = por %p122, %p123
      %p125 = scmp.ne.s32.totalorder %s111, %s112
      %p126 = scmp.eq.s32.totalorder %s40, 3
      %p127 = por %p125, %p126
      %p129 = scmp.ne.s32.totalorder %s112, %s128
      %p130 = scmp.eq.s32.totalorder %s40, 0
      %p131 = por %p129, %p130
      %s132 = ssub.s32 %s42, %s49
      %p133 = scmp.eq.s32.totalorder %s132, 0
      %s135 = sadd.s32 %s134, 1
      %s136 = scalar_select %p133, %s134, %s135
      %p139 = pneg %p133
      %p140 = scmp.eq.s32.totalorder %s34, 3
      %p141 = por %p139, %p140
      %p142 = scmp.ne.s32.totalorder %s134, %s137
      %p143 = scmp.eq.s32.totalorder %s34, 0
      %p144 = por %p142, %p143
      %p145 = scmp.ne.s32.totalorder %s134, %s137
      %p146 = scmp.eq.s32.totalorder %s39, 3
      %p147 = por %p145, %p146
      %p148 = scmp.ne.s32.totalorder %s137, %s138
      %p149 = scmp.eq.s32.totalorder %s39, 0
      %p150 = por %p148, %p149
      %p151 = scmp.ne.s32.totalorder %s137, %s138
      %p152 = scmp.eq.s32.totalorder %s40, 3
      %p153 = por %p151, %p152
      %p155 = scmp.ne.s32.totalorder %s138, %s154
      %p156 = scmp.eq.s32.totalorder %s40, 0
      %p157 = por %p155, %p156
      %s158 = ssub.s32 %s42, %s49
      %p159 = scmp.eq.s32.totalorder %s158, 0
      %s161 = sadd.s32 %s160, 1
      %s162 = scalar_select %p159, %s160, %s161
      %p165 = pneg %p159
      %p166 = scmp.eq.s32.totalorder %s34, 3
      %p167 = por %p165, %p166
      %p168 = scmp.ne.s32.totalorder %s160, %s163
      %p169 = scmp.eq.s32.totalorder %s34, 0
      %p170 = por %p168, %p169
      %p171 = scmp.ne.s32.totalorder %s160, %s163
      %p172 = scmp.eq.s32.totalorder %s39, 3
      %p173 = por %p171, %p172
      %p174 = scmp.ne.s32.totalorder %s163, %s164
      %p175 = scmp.eq.s32.totalorder %s39, 0
      %p176 = por %p174, %p175
      %p177 = scmp.ne.s32.totalorder %s163, %s164
      %p178 = scmp.eq.s32.totalorder %s40, 3
      %p179 = por %p177, %p178
      %p181 = scmp.ne.s32.totalorder %s164, %s180
      %p182 = scmp.eq.s32.totalorder %s40, 0
      %p183 = por %p181, %p182
      %s184 = ssub.s32 %s42, %s49
      %p185 = scmp.eq.s32.totalorder %s184, 0
      %s187 = sadd.s32 %s186, 1
      %s188 = scalar_select %p185, %s186, %s187
      %p191 = pneg %p185
      %p192 = scmp.eq.s32.totalorder %s34, 3
      %p193 = por %p191, %p192
      %p194 = scmp.ne.s32.totalorder %s186, %s189
      %p195 = scmp.eq.s32.totalorder %s34, 0
      %p196 = por %p194, %p195
      %p197 = scmp.ne.s32.totalorder %s186, %s189
      %p198 = scmp.eq.s32.totalorder %s39, 3
      %p199 = por %p197, %p198
      %p200 = scmp.ne.s32.totalorder %s189, %s190
      %p201 = scmp.eq.s32.totalorder %s39, 0
      %p202 = por %p200, %p201
      %p203 = scmp.ne.s32.totalorder %s189, %s190
      %p204 = scmp.eq.s32.totalorder %s40, 3
      %p205 = por %p203, %p204
      %p207 = scmp.ne.s32.totalorder %s190, %s206
      %p208 = scmp.eq.s32.totalorder %s40, 0
      %p209 = por %p207, %p208
      %s210 = ssub.s32 %s42, %s49
      %p211 = scmp.eq.s32.totalorder %s210, 0
      %s213 = sadd.s32 %s212, 1
      %s214 = scalar_select %p211, %s212, %s213
      %p217 = pneg %p211
      %p218 = scmp.eq.s32.totalorder %s34, 3
      %p219 = por %p217, %p218
      %p220 = scmp.ne.s32.totalorder %s212, %s215
      %p221 = scmp.eq.s32.totalorder %s34, 0
      %p222 = por %p220, %p221
      %p223 = scmp.ne.s32.totalorder %s212, %s215
      %p224 = scmp.eq.s32.totalorder %s39, 3
      %p225 = por %p223, %p224
      %p226 = scmp.ne.s32.totalorder %s215, %s216
      %p227 = scmp.eq.s32.totalorder %s39, 0
      %p228 = por %p226, %p227
      %p229 = scmp.ne.s32.totalorder %s215, %s216
      %p230 = scmp.eq.s32.totalorder %s40, 3
      %p231 = por %p229, %p230
      %p233 = scmp.ne.s32.totalorder %s216, %s232
      %p234 = scmp.eq.s32.totalorder %s40, 0
      %p235 = por %p233, %p234
      %s236 = ssub.s32 %s42, %s49
      %p237 = scmp.eq.s32.totalorder %s236, 0
      %s239 = sadd.s32 %s238, 1
      %s240 = scalar_select %p237, %s238, %s239
      %p243 = pneg %p237
      %p244 = scmp.eq.s32.totalorder %s34, 3
      %p245 = por %p243, %p244
      %p246 = scmp.ne.s32.totalorder %s238, %s241
      %p247 = scmp.eq.s32.totalorder %s34, 0
      %p248 = por %p246, %p247
      %p249 = scmp.ne.s32.totalorder %s238, %s241
      %p250 = scmp.eq.s32.totalorder %s39, 3
      %p251 = por %p249, %p250
      %p252 = scmp.ne.s32.totalorder %s241, %s242
      %p253 = scmp.eq.s32.totalorder %s39, 0
      %p254 = por %p252, %p253
      %p255 = scmp.ne.s32.totalorder %s241, %s242
      %p256 = scmp.eq.s32.totalorder %s40, 3
      %p257 = por %p255, %p256
      %p259 = scmp.ne.s32.totalorder %s242, %s258
      %p260 = scmp.eq.s32.totalorder %s40, 0
      %p261 = por %p259, %p260
      %s262 = ssub.s32 %s42, %s49
      %p263 = scmp.eq.s32.totalorder %s262, 0
      %s265 = sadd.s32 %s264, 1
      %s266 = scalar_select %p263, %s264, %s265
      %p269 = pneg %p263
      %p270 = scmp.eq.s32.totalorder %s34, 3
      %p271 = por %p269, %p270
      %p272 = scmp.ne.s32.totalorder %s264, %s267
      %p273 = scmp.eq.s32.totalorder %s34, 0
      %p274 = por %p272, %p273
      %p275 = scmp.ne.s32.totalorder %s264, %s267
      %p276 = scmp.eq.s32.totalorder %s39, 3
      %p277 = por %p275, %p276
      %p278 = scmp.ne.s32.totalorder %s267, %s268
      %p279 = scmp.eq.s32.totalorder %s39, 0
      %p280 = por %p278, %p279
      %p281 = scmp.ne.s32.totalorder %s267, %s268
      %p282 = scmp.eq.s32.totalorder %s40, 3
      %p283 = por %p281, %p282
      %p285 = scmp.ne.s32.totalorder %s268, %s284
      %p286 = scmp.eq.s32.totalorder %s40, 0
      %p287 = por %p285, %p286
      %s288 = ssub.s32 %s42, %s49
      %p289 = scmp.eq.s32.totalorder %s288, 0
      %s291 = sadd.s32 %s290, 1
      %s292 = scalar_select %p289, %s290, %s291
      %p295 = pneg %p289
      %p296 = scmp.eq.s32.totalorder %s34, 3
      %p297 = por %p295, %p296
      %p298 = scmp.ne.s32.totalorder %s290, %s293
      %p299 = scmp.eq.s32.totalorder %s34, 0
      %p300 = por %p298, %p299
      %p301 = scmp.ne.s32.totalorder %s290, %s293
      %p302 = scmp.eq.s32.totalorder %s39, 3
      %p303 = por %p301, %p302
      %p304 = scmp.ne.s32.totalorder %s293, %s294
      %p305 = scmp.eq.s32.totalorder %s39, 0
      %p306 = por %p304, %p305
      %p307 = scmp.ne.s32.totalorder %s293, %s294
      %p308 = scmp.eq.s32.totalorder %s40, 3
      %p309 = por %p307, %p308
      %p311 = scmp.ne.s32.totalorder %s294, %s310
      %p312 = scmp.eq.s32.totalorder %s40, 0
      %p313 = por %p311, %p312
      %s314 = ssub.s32 %s42, %s49
      %p315 = scmp.eq.s32.totalorder %s314, 0
      %s317 = sadd.s32 %s316, 1
      %s318 = scalar_select %p315, %s316, %s317
      %p321 = pneg %p315
      %p322 = scmp.eq.s32.totalorder %s34, 3
      %p323 = por %p321, %p322
      %p324 = scmp.ne.s32.totalorder %s316, %s319
      %p325 = scmp.eq.s32.totalorder %s34, 0
      %p326 = por %p324, %p325
      %p327 = scmp.ne.s32.totalorder %s316, %s319
      %p328 = scmp.eq.s32.totalorder %s39, 3
      %p329 = por %p327, %p328
      %p330 = scmp.ne.s32.totalorder %s319, %s320
      %p331 = scmp.eq.s32.totalorder %s39, 0
      %p332 = por %p330, %p331
      %p333 = scmp.ne.s32.totalorder %s319, %s320
      %p334 = scmp.eq.s32.totalorder %s40, 3
      %p335 = por %p333, %p334
      %p337 = scmp.ne.s32.totalorder %s320, %s336
      %p338 = scmp.eq.s32.totalorder %s40, 0
      %p339 = por %p337, %p338
      %s340 = ssub.s32 %s42, %s49
      %p341 = scmp.eq.s32.totalorder %s340, 0
      %s343 = sadd.s32 %s342, 1
      %s344 = scalar_select %p341, %s342, %s343
      %p347 = pneg %p341
      %p348 = scmp.eq.s32.totalorder %s34, 3
      %p349 = por %p347, %p348
      %p350 = scmp.ne.s32.totalorder %s342, %s345
      %p351 = scmp.eq.s32.totalorder %s34, 0
      %p352 = por %p350, %p351
      %p353 = scmp.ne.s32.totalorder %s342, %s345
      %p354 = scmp.eq.s32.totalorder %s39, 3
      %p355 = por %p353, %p354
      %p356 = scmp.ne.s32.totalorder %s345, %s346
      %p357 = scmp.eq.s32.totalorder %s39, 0
      %p358 = por %p356, %p357
      %p359 = scmp.ne.s32.totalorder %s345, %s346
      %p360 = scmp.eq.s32.totalorder %s40, 3
      %p361 = por %p359, %p360
      %p363 = scmp.ne.s32.totalorder %s346, %s362
      %p364 = scmp.eq.s32.totalorder %s40, 0
      %p365 = por %p363, %p364
      %s366 = ssub.s32 %s42, %s49
      %p367 = scmp.eq.s32.totalorder %s366, 0
      %s369 = sadd.s32 %s368, 1
      %s370 = scalar_select %p367, %s368, %s369
      %p373 = pneg %p367
      %p374 = scmp.eq.s32.totalorder %s34, 3
      %p375 = por %p373, %p374
      %p376 = scmp.ne.s32.totalorder %s368, %s371
      %p377 = scmp.eq.s32.totalorder %s34, 0
      %p378 = por %p376, %p377
      %p379 = scmp.ne.s32.totalorder %s368, %s371
      %p380 = scmp.eq.s32.totalorder %s39, 3
      %p381 = por %p379, %p380
      %p382 = scmp.ne.s32.totalorder %s371, %s372
      %p383 = scmp.eq.s32.totalorder %s39, 0
      %p384 = por %p382, %p383
      %p385 = scmp.ne.s32.totalorder %s371, %s372
      %p386 = scmp.eq.s32.totalorder %s40, 3
      %p387 = por %p385, %p386
      %p389 = scmp.ne.s32.totalorder %s372, %s388
      %p390 = scmp.eq.s32.totalorder %s40, 0
      %p391 = por %p389, %p390
      %s392 = ssub.s32 %s42, %s49
      %p393 = scmp.eq.s32.totalorder %s392, 0
      %s395 = sadd.s32 %s394, 1
      %s396 = scalar_select %p393, %s394, %s395
      %p399 = pneg %p393
      %p400 = scmp.eq.s32.totalorder %s34, 3
      %p401 = por %p399, %p400
      %p402 = scmp.ne.s32.totalorder %s394, %s397
      %p403 = scmp.eq.s32.totalorder %s34, 0
      %p404 = por %p402, %p403
      %p405 = scmp.ne.s32.totalorder %s394, %s397
      %p406 = scmp.eq.s32.totalorder %s39, 3
      %p407 = por %p405, %p406
      %p408 = scmp.ne.s32.totalorder %s397, %s398
      %p409 = scmp.eq.s32.totalorder %s39, 0
      %p410 = por %p408, %p409
      %p411 = scmp.ne.s32.totalorder %s397, %s398
      %p412 = scmp.eq.s32.totalorder %s40, 3
      %p413 = por %p411, %p412
      %p415 = scmp.ne.s32.totalorder %s398, %s414
      %p416 = scmp.eq.s32.totalorder %s40, 0
      %p417 = por %p415, %p416
      %s418 = ssub.s32 %s42, %s49
      %p419 = scmp.eq.s32.totalorder %s418, 0
      %s421 = sadd.s32 %s420, 1
      %s422 = scalar_select %p419, %s420, %s421
      %p425 = pneg %p419
      %p426 = scmp.eq.s32.totalorder %s34, 3
      %p427 = por %p425, %p426
      %p428 = scmp.ne.s32.totalorder %s420, %s423
      %p429 = scmp.eq.s32.totalorder %s34, 0
      %p430 = por %p428, %p429
      %p431 = scmp.ne.s32.totalorder %s420, %s423
      %p432 = scmp.eq.s32.totalorder %s39, 3
      %p433 = por %p431, %p432
      %p434 = scmp.ne.s32.totalorder %s423, %s424
      %p435 = scmp.eq.s32.totalorder %s39, 0
      %p436 = por %p434, %p435
      %p437 = scmp.ne.s32.totalorder %s423, %s424
      %p438 = scmp.eq.s32.totalorder %s40, 3
      %p439 = por %p437, %p438
      %p441 = scmp.ne.s32.totalorder %s424, %s440
      %p442 = scmp.eq.s32.totalorder %s40, 0
      %p443 = por %p441, %p442
      %s444 = ssub.s32 %s42, %s49
      %p445 = scmp.eq.s32.totalorder %s444, 0
      %s447 = sadd.s32 %s446, 1
      %s448 = scalar_select %p445, %s446, %s447
      %p451 = pneg %p445
      %p452 = scmp.eq.s32.totalorder %s34, 3
      %p453 = por %p451, %p452
      %p454 = scmp.ne.s32.totalorder %s446, %s449
      %p455 = scmp.eq.s32.totalorder %s34, 0
      %p456 = por %p454, %p455
      %p457 = scmp.ne.s32.totalorder %s446, %s449
      %p458 = scmp.eq.s32.totalorder %s39, 3
      %p459 = por %p457, %p458
      %p460 = scmp.ne.s32.totalorder %s449, %s450
      %p461 = scmp.eq.s32.totalorder %s39, 0
      %p462 = por %p460, %p461
      %p463 = scmp.ne.s32.totalorder %s449, %s450
      %p464 = scmp.eq.s32.totalorder %s40, 3
      %p465 = por %p463, %p464
      %p467 = scmp.ne.s32.totalorder %s450, %s466
      %p468 = scmp.eq.s32.totalorder %s40, 0
      %p469 = por %p467, %p468
      %s470 = ssub.s32 %s42, %s49
      %p471 = scmp.eq.s32.totalorder %s470, 0
      %s473 = sadd.s32 %s472, 1
      %s474 = scalar_select %p471, %s472, %s473
      %p477 = pneg %p471
      %p478 = scmp.eq.s32.totalorder %s34, 3
      %p479 = por %p477, %p478
      %p480 = scmp.ne.s32.totalorder %s472, %s475
      %p481 = scmp.eq.s32.totalorder %s34, 0
      %p482 = por %p480, %p481
      %p483 = scmp.ne.s32.totalorder %s472, %s475
      %p484 = scmp.eq.s32.totalorder %s39, 3
      %p485 = por %p483, %p484
      %p486 = scmp.ne.s32.totalorder %s475, %s476
      %p487 = scmp.eq.s32.totalorder %s39, 0
      %p488 = por %p486, %p487
      %p489 = scmp.ne.s32.totalorder %s475, %s476
      %p490 = scmp.eq.s32.totalorder %s40, 3
      %p491 = por %p489, %p490
      %p493 = scmp.ne.s32.totalorder %s476, %s492
      %p494 = scmp.eq.s32.totalorder %s40, 0
      %p495 = por %p493, %p494
      %s497 = sadd.s32 %s496, 1
      %p500 = scmp.eq.s32.totalorder %s34, 3
      %p501 = scmp.ne.s32.totalorder %s496, %s498
      %p502 = scmp.eq.s32.totalorder %s34, 0
      %p503 = por %p501, %p502
      %p504 = scmp.ne.s32.totalorder %s496, %s498
      %p505 = scmp.eq.s32.totalorder %s39, 3
      %p506 = por %p504, %p505
      %p507 = scmp.ne.s32.totalorder %s498, %s499
      %p508 = scmp.eq.s32.totalorder %s39, 0
      %p509 = por %p507, %p508
      %p510 = scmp.ne.s32.totalorder %s498, %s499
      %p511 = scmp.eq.s32.totalorder %s40, 3
      %p512 = por %p510, %p511
      %p514 = scmp.ne.s32.totalorder %s499, %s513
      %p515 = scmp.eq.s32.totalorder %s40, 0
      %p516 = por %p514, %p515
      %s518 = sadd.s32 %s517, 1
      %p521 = scmp.eq.s32.totalorder %s34, 3
      %p522 = scmp.ne.s32.totalorder %s517, %s519
      %p523 = scmp.eq.s32.totalorder %s34, 0
      %p524 = por %p522, %p523
      %p525 = scmp.ne.s32.totalorder %s517, %s519
      %p526 = scmp.eq.s32.totalorder %s39, 3
      %p527 = por %p525, %p526
      %p528 = scmp.ne.s32.totalorder %s519, %s520
      %p529 = scmp.eq.s32.totalorder %s39, 0
      %p530 = por %p528, %p529
      %p531 = scmp.ne.s32.totalorder %s519, %s520
      %p532 = scmp.eq.s32.totalorder %s40, 3
      %p533 = por %p531, %p532
      %p535 = scmp.ne.s32.totalorder %s520, %s534
      %p536 = scmp.eq.s32.totalorder %s40, 0
      %p537 = por %p535, %p536
      %s538 = ssub.s32 %s41, %s53
      %p539 = scmp.eq.s32.totalorder %s538, 0
      %s541 = sadd.s32 %s540, 1
      %s542 = scalar_select %p539, %s540, %s541
      %p545 = pneg %p539
      %p546 = scmp.eq.s32.totalorder %s34, 3
      %p547 = por %p545, %p546
      %p548 = scmp.ne.s32.totalorder %s540, %s543
      %p549 = scmp.eq.s32.totalorder %s34, 0
      %p550 = por %p548, %p549
      %p551 = scmp.ne.s32.totalorder %s540, %s543
      %p552 = scmp.eq.s32.totalorder %s39, 3
      %p553 = por %p551, %p552
      %p554 = scmp.ne.s32.totalorder %s543, %s544
      %p555 = scmp.eq.s32.totalorder %s39, 0
      %p556 = por %p554, %p555
      %p557 = scmp.ne.s32.totalorder %s543, %s544
      %p558 = scmp.eq.s32.totalorder %s40, 3
      %p559 = por %p557, %p558
      %p561 = scmp.ne.s32.totalorder %s544, %s560
      %p562 = scmp.eq.s32.totalorder %s40, 0
      %p563 = por %p561, %p562
      %p564 = scmp.le.s32.totalorder 1, %s34
      %p565 = scmp.lt.s32.totalorder %s34, 5
      %p566 = pnand %p564, %p565
      %p567 = pneg %p566
      // Predicated region
      $region9: #{_lambda_.3} parent=5 // pred_check
        _
      $region10: #{_lambda_.3} parent=5 // pred_check_branch
        %569 = sbr.rel (%p566) target = $region12
      $region11: #{_lambda_.3} parent=5 // pred_region
        %s570 = ssub.s32 %s34, 1
        // Predicated region
        $region13: #{_lambda_.3} parent=11 // pred_check
          %p571 = pneg %p509
        $region14: #{_lambda_.3} parent=11 // pred_check_branch
          %573 = sbr.rel (%p571) target = $region16
        $region15: #{_lambda_.3} parent=11 // pred_region
          _
        $region16: #{_lambda_.3} parent=11 // pred_fallthru
          _
        // Predicated region
        $region17: #{_lambda_.3} parent=11 // pred_check
          %p574 = pneg %p530
        $region18: #{_lambda_.3} parent=11 // pred_check_branch
          %576 = sbr.rel (%p574) target = $region20
        $region19: #{_lambda_.3} parent=11 // pred_region
          _
        $region20: #{_lambda_.3} parent=11 // pred_fallthru
          _
      $region12: #{_lambda_.3} parent=5 // pred_fallthru
        _
      %p577 = scmp.lt.s32.totalorder %s34, 4
      // Predicated region
      $region21: #{_lambda_.3} parent=5 // pred_check
        %p578 = pneg %p577
      $region22: #{_lambda_.3} parent=5 // pred_check_branch
        %580 = sbr.rel (%p578) target = $region24
      $region23: #{_lambda_.3} parent=5 // pred_region
        // Predicated region
        $region25: #{_lambda_.3} parent=23 // pred_check
          %p581 = pneg %p66
        $region26: #{_lambda_.3} parent=23 // pred_check_branch
          %583 = sbr.rel (%p581) target = $region28
        $region27: #{_lambda_.3} parent=23 // pred_region
          %p584 = scmp.lt.s32.totalorder %s41, 1
          %s585 = scalar_select %p584, %s41, 1
          %s586 = smul.addr %s585, 8
          %s587 = scalar_lea.vmem %s0, %s586
        $region28: #{_lambda_.3} parent=23 // pred_fallthru
          _
        // Predicated region
        $region29: #{_lambda_.3} parent=23 // pred_check
          %p588 = pneg %p92
        $region30: #{_lambda_.3} parent=23 // pred_check_branch
          %590 = sbr.rel (%p588) target = $region32
        $region31: #{_lambda_.3} parent=23 // pred_region
          %p591 = scmp.lt.s32.totalorder %s42, 1
          %s592 = scalar_select %p591, %s42, 1
          %s593 = scalar_lea.vmem %s1, %s592
        $region32: #{_lambda_.3} parent=23 // pred_fallthru
          _
        // Predicated region
        $region33: #{_lambda_.3} parent=23 // pred_check
          %p594 = pneg %p118
        $region34: #{_lambda_.3} parent=23 // pred_check_branch
          %596 = sbr.rel (%p594) target = $region36
        $region35: #{_lambda_.3} parent=23 // pred_region
          %p597 = scmp.lt.s32.totalorder %s42, 1
          %s598 = scalar_select %p597, %s42, 1
          %s599 = scalar_lea.vmem %s2, %s598
        $region36: #{_lambda_.3} parent=23 // pred_fallthru
          _
        // Predicated region
        $region37: #{_lambda_.3} parent=23 // pred_check
          %p600 = pneg %p144
        $region38: #{_lambda_.3} parent=23 // pred_check_branch
          %602 = sbr.rel (%p600) target = $region40
        $region39: #{_lambda_.3} parent=23 // pred_region
          %p603 = scmp.lt.s32.totalorder %s42, 1
          %s604 = scalar_select %p603, %s42, 1
          %s605 = smul.addr %s604, 64
          %s606 = smul.addr %s605, 4
          %s607 = scalar_lea.vmem %s3, %s606
        $region40: #{_lambda_.3} parent=23 // pred_fallthru
          _
        // Predicated region
        $region41: #{_lambda_.3} parent=23 // pred_check
          %p608 = pneg %p170
        $region42: #{_lambda_.3} parent=23 // pred_check_branch
          %610 = sbr.rel (%p608) target = $region44
        $region43: #{_lambda_.3} parent=23 // pred_region
          %p611 = scmp.lt.s32.totalorder %s42, 1
          %s612 = scalar_select %p611, %s42, 1
          %s613 = smul.addr %s612, 4
          %s614 = scalar_lea.vmem %s4, %s613
        $region44: #{_lambda_.3} parent=23 // pred_fallthru
          _
        // Predicated region
        $region45: #{_lambda_.3} parent=23 // pred_check
          %p615 = pneg %p196
        $region46: #{_lambda_.3} parent=23 // pred_check_branch
          %617 = sbr.rel (%p615) target = $region48
        $region47: #{_lambda_.3} parent=23 // pred_region
          %s618 = sand.u32 %s186, 1
          %s619 = scalar_lea.sflag [#allocation4], %s618
          %s620 = sand.u32 %s186, 1
          %s621 = smul.addr %s620, 256
          %s622 = scalar_lea.vmem [#allocation3], %s621
          %624 = vsyncadd %s619, 0
          %s625 = smul.addr %s42, 64
          %s626 = smul.addr %s625, 4
          %s627 = scalar_lea.hbm %s5, %s626
          %s628 = sshll.u32 %s627, 4
          %s629 = int_to_ptr.hbm [resolvable:$true] %s628
          %s630 = sshll.u32 %s622, 4
          %s631 = int_to_ptr.vmem [resolvable:$true] %s630
          %636 = dma.hbm_to_vmem [thread:$0]  %s629, 4096, %s631, %s619, 64, 64, 4
        $region48: #{_lambda_.3} parent=23 // pred_fallthru
          _
        // Predicated region
        $region49: #{_lambda_.3} parent=23 // pred_check
          %p637 = pneg %p222
        $region50: #{_lambda_.3} parent=23 // pred_check_branch
          %639 = sbr.rel (%p637) target = $region52
        $region51: #{_lambda_.3} parent=23 // pred_region
          %p640 = scmp.lt.s32.totalorder %s42, 1
          %s641 = scalar_select %p640, %s42, 1
          %s642 = smul.addr %s641, 4
          %s643 = scalar_lea.vmem %s6, %s642
        $region52: #{_lambda_.3} parent=23 // pred_fallthru
          _
        // Predicated region
        $region53: #{_lambda_.3} parent=23 // pred_check
          %p644 = pneg %p248
        $region54: #{_lambda_.3} parent=23 // pred_check_branch
          %646 = sbr.rel (%p644) target = $region56
        $region55: #{_lambda_.3} parent=23 // pred_region
          %s647 = sand.u32 %s34, 1
          %s648 = scalar_lea.sflag [#allocation7], %s647
          %s649 = sand.u32 %s238, 1
          %s650 = smul.addr %s649, 256
          %s651 = scalar_lea.vmem [#allocation6], %s650
          %653 = vsyncadd %s648, 0
          %s654 = smul.addr %s42, 64
          %s655 = smul.addr %s654, 4
          %s656 = scalar_lea.hbm %s7, %s655
          %s657 = sshll.u32 %s656, 4
          %s658 = int_to_ptr.hbm [resolvable:$true] %s657
          %s659 = sshll.u32 %s651, 4
          %s660 = int_to_ptr.vmem [resolvable:$true] %s659
          %665 = dma.hbm_to_vmem [thread:$0]  %s658, 4096, %s660, %s648, 64, 64, 4
        $region56: #{_lambda_.3} parent=23 // pred_fallthru
          _
        // Predicated region
        $region57: #{_lambda_.3} parent=23 // pred_check
          %p666 = pneg %p274
        $region58: #{_lambda_.3} parent=23 // pred_check_branch
          %668 = sbr.rel (%p666) target = $region60
        $region59: #{_lambda_.3} parent=23 // pred_region
          %p669 = scmp.lt.s32.totalorder %s42, 1
          %s670 = scalar_select %p669, %s42, 1
          %s671 = smul.addr %s670, 4
          %s672 = scalar_lea.vmem %s8, %s671
        $region60: #{_lambda_.3} parent=23 // pred_fallthru
          _
        // Predicated region
        $region61: #{_lambda_.3} parent=23 // pred_check
          %p673 = pneg %p300
        $region62: #{_lambda_.3} parent=23 // pred_check_branch
          %675 = sbr.rel (%p673) target = $region64
        $region63: #{_lambda_.3} parent=23 // pred_region
          %p676 = scmp.lt.s32.totalorder %s42, 1
          %s677 = scalar_select %p676, %s42, 1
          %s678 = smul.addr %s677, 16
          %s679 = smul.addr %s678, 4
          %s680 = scalar_lea.vmem %s9, %s679
        $region64: #{_lambda_.3} parent=23 // pred_fallthru
          _
        // Predicated region
        $region65: #{_lambda_.3} parent=23 // pred_check
          %p681 = pneg %p326
        $region66: #{_lambda_.3} parent=23 // pred_check_branch
          %683 = sbr.rel (%p681) target = $region68
        $region67: #{_lambda_.3} parent=23 // pred_region
          %p684 = scmp.lt.s32.totalorder %s42, 1
          %s685 = scalar_select %p684, %s42, 1
          %s686 = scalar_lea.vmem %s10, %s685
        $region68: #{_lambda_.3} parent=23 // pred_fallthru
          _
        // Predicated region
        $region69: #{_lambda_.3} parent=23 // pred_check
          %p687 = pneg %p352
        $region70: #{_lambda_.3} parent=23 // pred_check_branch
          %689 = sbr.rel (%p687) target = $region72
        $region71: #{_lambda_.3} parent=23 // pred_region
          %p690 = scmp.lt.s32.totalorder %s42, 1
          %s691 = scalar_select %p690, %s42, 1
          %s692 = scalar_lea.vmem %s11, %s691
        $region72: #{_lambda_.3} parent=23 // pred_fallthru
          _
        // Predicated region
        $region73: #{_lambda_.3} parent=23 // pred_check
          %p693 = pneg %p378
        $region74: #{_lambda_.3} parent=23 // pred_check_branch
          %695 = sbr.rel (%p693) target = $region76
        $region75: #{_lambda_.3} parent=23 // pred_region
          %p696 = scmp.lt.s32.totalorder %s42, 1
          %s697 = scalar_select %p696, %s42, 1
          %s698 = scalar_lea.vmem %s12, %s697
        $region76: #{_lambda_.3} parent=23 // pred_fallthru
          _
        // Predicated region
        $region77: #{_lambda_.3} parent=23 // pred_check
          %p699 = pneg %p404
        $region78: #{_lambda_.3} parent=23 // pred_check_branch
          %701 = sbr.rel (%p699) target = $region80
        $region79: #{_lambda_.3} parent=23 // pred_region
          %p702 = scmp.lt.s32.totalorder %s42, 1
          %s703 = scalar_select %p702, %s42, 1
          %s704 = smul.addr %s703, 32
          %s705 = smul.addr %s704, 4
          %s706 = scalar_lea.vmem %s13, %s705
        $region80: #{_lambda_.3} parent=23 // pred_fallthru
          _
        // Predicated region
        $region81: #{_lambda_.3} parent=23 // pred_check
          %p707 = pneg %p430
        $region82: #{_lambda_.3} parent=23 // pred_check_branch
          %709 = sbr.rel (%p707) target = $region84
        $region83: #{_lambda_.3} parent=23 // pred_region
          %p710 = scmp.lt.s32.totalorder %s42, 1
          %s711 = scalar_select %p710, %s42, 1
          %s712 = smul.addr %s711, 2
          %s713 = scalar_lea.vmem %s14, %s712
        $region84: #{_lambda_.3} parent=23 // pred_fallthru
          _
        // Predicated region
        $region85: #{_lambda_.3} parent=23 // pred_check
          %p714 = pneg %p456
        $region86: #{_lambda_.3} parent=23 // pred_check_branch
          %716 = sbr.rel (%p714) target = $region88
        $region87: #{_lambda_.3} parent=23 // pred_region
          %s717 = sand.u32 %s34, 1
          %s718 = scalar_lea.sflag [#allocation7], %s717
          %s719 = sand.u32 %s446, 1
          %s720 = smul.addr %s719, 128
          %s721 = scalar_lea.vmem [#allocation8], %s720
          %723 = vsyncadd %s718, 0
          %s724 = smul.addr %s42, 32
          %s725 = smul.addr %s724, 4
          %s726 = scalar_lea.hbm %s15, %s725
          %s727 = sshll.u32 %s726, 4
          %s728 = int_to_ptr.hbm [resolvable:$true] %s727
          %s729 = sshll.u32 %s721, 4
          %s730 = int_to_ptr.vmem [resolvable:$true] %s729
          %735 = dma.hbm_to_vmem [thread:$0]  %s728, 2048, %s730, %s718, 64, 64, 4
        $region88: #{_lambda_.3} parent=23 // pred_fallthru
          _
        // Predicated region
        $region89: #{_lambda_.3} parent=23 // pred_check
          %p736 = pneg %p482
        $region90: #{_lambda_.3} parent=23 // pred_check_branch
          %738 = sbr.rel (%p736) target = $region92
        $region91: #{_lambda_.3} parent=23 // pred_region
          %p739 = scmp.lt.s32.totalorder %s42, 1
          %s740 = scalar_select %p739, %s42, 1
          %s741 = scalar_lea.vmem %s16, %s740
        $region92: #{_lambda_.3} parent=23 // pred_fallthru
          _
      $region24: #{_lambda_.3} parent=5 // pred_fallthru
        _
      %p742 = scmp.le.s32.totalorder 1, %s34
      %p743 = scmp.lt.s32.totalorder %s34, 5
      %p744 = pnand %p742, %p743
      %p745 = pneg %p744
      // Predicated region
      $region93: #{_lambda_.3} parent=5 // pred_check
        _
      $region94: #{_lambda_.3} parent=5 // pred_check_branch
        %747 = sbr.rel (%p744) target = $region96
      $region95: #{_lambda_.3} parent=5 // pred_region
        %s748 = ssub.s32 %s34, 1
        %s749 = sand.u32 %s189, 1
        %s750 = scalar_lea.sflag [#allocation4], %s749
        %s751 = sand.u32 %s189, 1
        %s752 = smul.addr %s751, 256
        %s753 = scalar_lea.vmem [#allocation3], %s752
        // Predicated region
        $region97: #{_lambda_.3} parent=95 // pred_check
          %p754 = pneg %p202
        $region98: #{_lambda_.3} parent=95 // pred_check_branch
          %756 = sbr.rel (%p754) target = $region100
        $region99: #{_lambda_.3} parent=95 // pred_region
          %758 = dma.done %s750, 4096
        $region100: #{_lambda_.3} parent=95 // pred_fallthru
          _
        %s759 = sand.u32 %s39, 1
        %s760 = scalar_lea.sflag [#allocation7], %s759
        %s761 = sand.u32 %s241, 1
        %s762 = smul.addr %s761, 256
        %s763 = scalar_lea.vmem [#allocation6], %s762
        // Predicated region
        $region101: #{_lambda_.3} parent=95 // pred_check
          %p764 = pneg %p254
        $region102: #{_lambda_.3} parent=95 // pred_check_branch
          %766 = sbr.rel (%p764) target = $region104
        $region103: #{_lambda_.3} parent=95 // pred_region
          %768 = dma.done %s760, 4096
        $region104: #{_lambda_.3} parent=95 // pred_fallthru
          _
        %s769 = sand.u32 %s39, 1
        %s770 = scalar_lea.sflag [#allocation7], %s769
        %s771 = sand.u32 %s449, 1
        %s772 = smul.addr %s771, 128
        %s773 = scalar_lea.vmem [#allocation8], %s772
        // Predicated region
        $region105: #{_lambda_.3} parent=95 // pred_check
          %p774 = pneg %p462
        $region106: #{_lambda_.3} parent=95 // pred_check_branch
          %776 = sbr.rel (%p774) target = $region108
        $region107: #{_lambda_.3} parent=95 // pred_region
          %778 = dma.done %s770, 2048
        $region108: #{_lambda_.3} parent=95 // pred_fallthru
          _
        %p779 = scmp.lt.s32.totalorder %s43, 1
        %s780 = scalar_select %p779, %s43, 1
        %s781 = smul.addr %s780, 8
        %s782 = scalar_lea.vmem %s0, %s781
        %p783 = pneg %p72
        %p784 = pneg %p69
        %p785 = scmp.lt.s32.totalorder %s44, 1
        %s786 = scalar_select %p785, %s44, 1
        %s787 = scalar_lea.vmem %s1, %s786
        %p788 = pneg %p98
        %p789 = pneg %p95
        %p790 = scmp.lt.s32.totalorder %s44, 1
        %s791 = scalar_select %p790, %s44, 1
        %s792 = scalar_lea.vmem %s2, %s791
        %p793 = pneg %p124
        %p794 = pneg %p121
        %p795 = scmp.lt.s32.totalorder %s44, 1
        %s796 = scalar_select %p795, %s44, 1
        %s797 = smul.addr %s796, 64
        %s798 = smul.addr %s797, 4
        %s799 = scalar_lea.vmem %s3, %s798
        %p800 = pneg %p150
        %p801 = pneg %p147
        %p802 = scmp.lt.s32.totalorder %s44, 1
        %s803 = scalar_select %p802, %s44, 1
        %s804 = smul.addr %s803, 4
        %s805 = scalar_lea.vmem %s4, %s804
        %p806 = pneg %p176
        %p807 = pneg %p173
        %s808 = sand.u32 %s189, 1
        %s809 = scalar_lea.sflag [#allocation4], %s808
        %s810 = sand.u32 %s189, 1
        %s811 = smul.addr %s810, 256
        %s812 = scalar_lea.vmem [#allocation3], %s811
        %p813 = pneg %p202
        %p814 = pneg %p199
        %p815 = scmp.lt.s32.totalorder %s44, 1
        %s816 = scalar_select %p815, %s44, 1
        %s817 = smul.addr %s816, 4
        %s818 = scalar_lea.vmem %s6, %s817
        %p819 = pneg %p228
        %p820 = pneg %p225
        %s821 = sand.u32 %s39, 1
        %s822 = scalar_lea.sflag [#allocation7], %s821
        %s823 = sand.u32 %s241, 1
        %s824 = smul.addr %s823, 256
        %s825 = scalar_lea.vmem [#allocation6], %s824
        %p826 = pneg %p254
        %p827 = pneg %p251
        %p828 = scmp.lt.s32.totalorder %s44, 1
        %s829 = scalar_select %p828, %s44, 1
        %s830 = smul.addr %s829, 4
        %s831 = scalar_lea.vmem %s8, %s830
        %p832 = pneg %p280
        %p833 = pneg %p277
        %p834 = scmp.lt.s32.totalorder %s44, 1
        %s835 = scalar_select %p834, %s44, 1
        %s836 = smul.addr %s835, 16
        %s837 = smul.addr %s836, 4
        %s838 = scalar_lea.vmem %s9, %s837
        %p839 = pneg %p306
        %p840 = pneg %p303
        %p841 = scmp.lt.s32.totalorder %s44, 1
        %s842 = scalar_select %p841, %s44, 1
        %s843 = scalar_lea.vmem %s10, %s842
        %p844 = pneg %p332
        %p845 = pneg %p329
        %p846 = scmp.lt.s32.totalorder %s44, 1
        %s847 = scalar_select %p846, %s44, 1
        %s848 = scalar_lea.vmem %s11, %s847
        %p849 = pneg %p358
        %p850 = pneg %p355
        %p851 = scmp.lt.s32.totalorder %s44, 1
        %s852 = scalar_select %p851, %s44, 1
        %s853 = scalar_lea.vmem %s12, %s852
        %p854 = pneg %p384
        %p855 = pneg %p381
        %p856 = scmp.lt.s32.totalorder %s44, 1
        %s857 = scalar_select %p856, %s44, 1
        %s858 = smul.addr %s857, 32
        %s859 = smul.addr %s858, 4
        %s860 = scalar_lea.vmem %s13, %s859
        %p861 = pneg %p410
        %p862 = pneg %p407
        %p863 = scmp.lt.s32.totalorder %s44, 1
        %s864 = scalar_select %p863, %s44, 1
        %s865 = smul.addr %s864, 2
        %s866 = scalar_lea.vmem %s14, %s865
        %p867 = pneg %p436
        %p868 = pneg %p433
        %s869 = sand.u32 %s39, 1
        %s870 = scalar_lea.sflag [#allocation7], %s869
        %s871 = sand.u32 %s449, 1
        %s872 = smul.addr %s871, 128
        %s873 = scalar_lea.vmem [#allocation8], %s872
        %p874 = pneg %p462
        %p875 = pneg %p459
        %p876 = scmp.lt.s32.totalorder %s44, 1
        %s877 = scalar_select %p876, %s44, 1
        %s878 = scalar_lea.vmem %s16, %s877
        %p879 = pneg %p488
        %p880 = pneg %p485
        %p881 = pneg %p509
        %p882 = pneg %p506
        %p883 = pneg %p530
        %p884 = pneg %p527
        %p885 = pneg %p556
        %p886 = pneg %p553
        %s887 = sand.u32 %s543, 1
        %s888 = scalar_lea.sflag [#allocation5], %s887
        %s889 = sand.u32 %s543, 1
        %s890 = scalar_lea.vmem [#allocation9], %s889
        %p891 = scmp.lt.s32.totalorder %s43, 1
        %s892 = scalar_select %p891, %s43, 1
        %s893 = smul.addr %s892, 8
        %s894 = scalar_lea.vmem %s0, %s893
        %p895 = scmp.lt.s32.totalorder %s44, 1
        %s896 = scalar_select %p895, %s44, 1
        %s897 = scalar_lea.vmem %s1, %s896
        %p898 = scmp.lt.s32.totalorder %s44, 1
        %s899 = scalar_select %p898, %s44, 1
        %s900 = scalar_lea.vmem %s2, %s899
        %p901 = scmp.lt.s32.totalorder %s44, 1
        %s902 = scalar_select %p901, %s44, 1
        %s903 = smul.addr %s902, 64
        %s904 = smul.addr %s903, 4
        %s905 = scalar_lea.vmem %s3, %s904
        %p906 = scmp.lt.s32.totalorder %s44, 1
        %s907 = scalar_select %p906, %s44, 1
        %s908 = smul.addr %s907, 4
        %s909 = scalar_lea.vmem %s4, %s908
        %p910 = scmp.lt.s32.totalorder %s44, 1
        %s911 = scalar_select %p910, %s44, 1
        %s912 = smul.addr %s911, 4
        %s913 = scalar_lea.vmem %s6, %s912
        %p914 = scmp.lt.s32.totalorder %s44, 1
        %s915 = scalar_select %p914, %s44, 1
        %s916 = smul.addr %s915, 4
        %s917 = scalar_lea.vmem %s8, %s916
        %p918 = scmp.lt.s32.totalorder %s44, 1
        %s919 = scalar_select %p918, %s44, 1
        %s920 = smul.addr %s919, 16
        %s921 = smul.addr %s920, 4
        %s922 = scalar_lea.vmem %s9, %s921
        %p923 = scmp.lt.s32.totalorder %s44, 1
        %s924 = scalar_select %p923, %s44, 1
        %s925 = scalar_lea.vmem %s10, %s924
        %p926 = scmp.lt.s32.totalorder %s44, 1
        %s927 = scalar_select %p926, %s44, 1
        %s928 = scalar_lea.vmem %s11, %s927
        %p929 = scmp.lt.s32.totalorder %s44, 1
        %s930 = scalar_select %p929, %s44, 1
        %s931 = scalar_lea.vmem %s12, %s930
        %p932 = scmp.lt.s32.totalorder %s44, 1
        %s933 = scalar_select %p932, %s44, 1
        %s934 = smul.addr %s933, 32
        %s935 = smul.addr %s934, 4
        %s936 = scalar_lea.vmem %s13, %s935
        %p937 = scmp.lt.s32.totalorder %s44, 1
        %s938 = scalar_select %p937, %s44, 1
        %s939 = smul.addr %s938, 2
        %s940 = scalar_lea.vmem %s14, %s939
        %p941 = scmp.lt.s32.totalorder %s44, 1
        %s942 = scalar_select %p941, %s44, 1
        %s943 = scalar_lea.vmem %s16, %s942
        %p945 = scmp.eq.s32.totalorder %s44, 0
        // Predicated region
        $region109: #{_lambda_.3} parent=95 // pred_check
          %p946 = pneg %p945
        $region110: #{_lambda_.3} parent=95 // pred_check_branch
          %948 = sbr.rel (%p946) target = $region112
        $region111: #{_lambda_.3} parent=95 // pred_region
          %v949 = vld [vmem:[%s894] sm:$0x1f]
          %950 = vst [vmem:[#allocation2] sm:$0x1f] %v949
        $region112: #{_lambda_.3} parent=95 // pred_fallthru
          _
        %v951 = vld [vmem:[#allocation2] sm:$0x1f]
        %v952 = vld [vmem:[%s897] sm:$0x1]
        %v953 = vld [vmem:[%s900] sm:$0x1]
        %vm954 = vcmask 1044480
        %v955 = vsel %vm954, %v951, 0.0
        %956 = vadd.xlane.f32.xlu0 %v955
        %v957 = vpop.xlane.xlu0 %956
        %v958 = vrcp.pop 128.0
        %v959 = vmul.f32 128.0, %v958
        %v960 = vsub.f32 1.0, %v959
        %v961 = vmul.f32 %v958, %v960
        %v962 = vadd.f32 %v958, %v961
        %vm963 = vweird.f32 %v958
        %v964 = vsel %vm963, %v958, %v962
        %v965 = vmul.f32 %v957, %v964
        %v966 = vsub.f32 %v951, %v965
        %v967 = vmul.f32 %v966, %v966
        %v968 = vsel %vm954, %v967, 0.0
        %969 = vadd.xlane.f32.xlu0 %v968
        %v970 = vpop.xlane.xlu0 %969
        %v971 = vmul.f32 %v970, %v964
        %v972 = vadd.f32 %v971, 1e-06
        %v973 = vrsqrt.pop %v972
        %v974 = vmul.f32 %v973, %v972
        %v975 = vmul.f32 %v974, %v973
        %v976 = vmul.f32 0.5, %v975
        %v977 = vsub.f32 1.5, %v976
        %v978 = vmul.f32 %v973, %v977
        %vm979 = vweird.f32 %v972
        %vm980 = vweird.f32 %v973
        %vm981 = vmor %vm979, %vm980
        %v982 = vsel %vm981, %v973, %v978
        %v983 = vmul.f32 %v966, %v982
        %v985 = vperm.slane %v952, 0
        %v987 = vmul.f32 %v983, %v985
        %v989 = vperm.slane %v953, 0
        %v991 = vadd.f32 %v987, %v989
        %v992 = vpack.c.bf16 %v991, %v991
        %v993 = vld [vmem:[%s905] sm:$0xf]
        %v994 = vld [vmem:[%s905 + $0x4] sm:$0xf]
        %v995 = vld [vmem:[%s905 + $0x8] sm:$0xf]
        %v996 = vld [vmem:[%s905 + $0xc] sm:$0xf]
        %v997 = vld [vmem:[%s905 + $0x10] sm:$0xf]
        %v998 = vld [vmem:[%s905 + $0x14] sm:$0xf]
        %v999 = vld [vmem:[%s905 + $0x18] sm:$0xf]
        %v1000 = vld [vmem:[%s905 + $0x1c] sm:$0xf]
        %v1001 = vld [vmem:[%s905 + $0x20] sm:$0xf]
        %v1002 = vld [vmem:[%s905 + $0x24] sm:$0xf]
        %v1003 = vld [vmem:[%s905 + $0x28] sm:$0xf]
        %v1004 = vld [vmem:[%s905 + $0x2c] sm:$0xf]
        %v1005 = vld [vmem:[%s905 + $0x30] sm:$0xf]
        %v1006 = vld [vmem:[%s905 + $0x34] sm:$0xf]
        %v1007 = vld [vmem:[%s905 + $0x38] sm:$0xf]
        %v1008 = vld [vmem:[%s905 + $0x3c] sm:$0xf]
        %v1009 = vld [vmem:[%s905 + $0x40] sm:$0xf]
        %v1010 = vld [vmem:[%s905 + $0x44] sm:$0xf]
        %v1011 = vld [vmem:[%s905 + $0x48] sm:$0xf]
        %v1012 = vld [vmem:[%s905 + $0x4c] sm:$0xf]
        %v1013 = vld [vmem:[%s905 + $0x50] sm:$0xf]
        %v1014 = vld [vmem:[%s905 + $0x54] sm:$0xf]
        %v1015 = vld [vmem:[%s905 + $0x58] sm:$0xf]
        %v1016 = vld [vmem:[%s905 + $0x5c] sm:$0xf]
        %v1017 = vld [vmem:[%s905 + $0x60] sm:$0xf]
        %v1018 = vld [vmem:[%s905 + $0x64] sm:$0xf]
        %v1019 = vld [vmem:[%s905 + $0x68] sm:$0xf]
        %v1020 = vld [vmem:[%s905 + $0x6c] sm:$0xf]
        %v1021 = vld [vmem:[%s905 + $0x70] sm:$0xf]
        %v1022 = vld [vmem:[%s905 + $0x74] sm:$0xf]
        %v1023 = vld [vmem:[%s905 + $0x78] sm:$0xf]
        %v1024 = vld [vmem:[%s905 + $0x7c] sm:$0xf]
        %v1025 = vld [vmem:[%s905 + $0x80] sm:$0xf]
        %v1026 = vld [vmem:[%s905 + $0x84] sm:$0xf]
        %v1027 = vld [vmem:[%s905 + $0x88] sm:$0xf]
        %v1028 = vld [vmem:[%s905 + $0x8c] sm:$0xf]
        %v1029 = vld [vmem:[%s905 + $0x90] sm:$0xf]
        %v1030 = vld [vmem:[%s905 + $0x94] sm:$0xf]
        %v1031 = vld [vmem:[%s905 + $0x98] sm:$0xf]
        %v1032 = vld [vmem:[%s905 + $0x9c] sm:$0xf]
        %v1033 = vld [vmem:[%s905 + $0xa0] sm:$0xf]
        %v1034 = vld [vmem:[%s905 + $0xa4] sm:$0xf]
        %v1035 = vld [vmem:[%s905 + $0xa8] sm:$0xf]
        %v1036 = vld [vmem:[%s905 + $0xac] sm:$0xf]
        %v1037 = vld [vmem:[%s905 + $0xb0] sm:$0xf]
        %v1038 = vld [vmem:[%s905 + $0xb4] sm:$0xf]
        %v1039 = vld [vmem:[%s905 + $0xb8] sm:$0xf]
        %v1040 = vld [vmem:[%s905 + $0xbc] sm:$0xf]
        %v1041 = vld [vmem:[%s905 + $0xc0] sm:$0xf]
        %v1042 = vld [vmem:[%s905 + $0xc4] sm:$0xf]
        %v1043 = vld [vmem:[%s905 + $0xc8] sm:$0xf]
        %v1044 = vld [vmem:[%s905 + $0xcc] sm:$0xf]
        %v1045 = vld [vmem:[%s905 + $0xd0] sm:$0xf]
        %v1046 = vld [vmem:[%s905 + $0xd4] sm:$0xf]
        %v1047 = vld [vmem:[%s905 + $0xd8] sm:$0xf]
        %v1048 = vld [vmem:[%s905 + $0xdc] sm:$0xf]
        %v1049 = vld [vmem:[%s905 + $0xe0] sm:$0xf]
        %v1050 = vld [vmem:[%s905 + $0xe4] sm:$0xf]
        %v1051 = vld [vmem:[%s905 + $0xe8] sm:$0xf]
        %v1052 = vld [vmem:[%s905 + $0xec] sm:$0xf]
        %v1053 = vld [vmem:[%s905 + $0xf0] sm:$0xf]
        %v1054 = vld [vmem:[%s905 + $0xf4] sm:$0xf]
        %v1055 = vld [vmem:[%s905 + $0xf8] sm:$0xf]
        %v1056 = vld [vmem:[%s905 + $0xfc] sm:$0xf]
        %v1057 = vld [vmem:[%s909] sm:$0x1]
        %v1058 = vld [vmem:[%s909 + $0x1] sm:$0x1]
        %v1059 = vld [vmem:[%s909 + $0x2] sm:$0x1]
        %v1060 = vld [vmem:[%s909 + $0x3] sm:$0x1]
        %v1065 = vperm.slane %v1057, 0
        %v1066 = vperm.slane %v1058, 0
        %v1067 = vperm.slane %v1059, 0
        %v1068 = vperm.slane %v1060, 0
        %v1089 = vunpack.c.l.b16 %v993
        %v1090 = vunpack.c.l.b16 %v994
        %v1091 = vunpack.c.l.b16 %v995
        %v1092 = vunpack.c.l.b16 %v996
        %v1093 = vunpack.c.l.b16 %v997
        %v1094 = vunpack.c.l.b16 %v998
        %v1095 = vunpack.c.l.b16 %v999
        %v1096 = vunpack.c.l.b16 %v1000
        %v1097 = vunpack.c.l.b16 %v1001
        %v1098 = vunpack.c.l.b16 %v1002
        %v1099 = vunpack.c.l.b16 %v1003
        %v1100 = vunpack.c.l.b16 %v1004
        %v1101 = vunpack.c.l.b16 %v1005
        %v1102 = vunpack.c.l.b16 %v1006
        %v1103 = vunpack.c.l.b16 %v1007
        %v1104 = vunpack.c.l.b16 %v1008
        %v1105 = vpack.c.b16 %v1090, %v1089
        %v1106 = vpack.c.b16 %v1092, %v1091
        %v1107 = vpack.c.b16 %v1094, %v1093
        %v1108 = vpack.c.b16 %v1096, %v1095
        %v1109 = vpack.c.b16 %v1098, %v1097
        %v1110 = vpack.c.b16 %v1100, %v1099
        %v1111 = vpack.c.b16 %v1102, %v1101
        %v1112 = vpack.c.b16 %v1104, %v1103
        %1121 = vmatpush.bf16.msra.mxu0 %v1112
        %1122 = vmatpush.bf16.msra.mxu0 %v1111
        %1123 = vmatpush.bf16.msra.mxu0 %v1110
        %1124 = vmatpush.bf16.msra.mxu0 %v1109
        %1125 = vmatpush.bf16.msra.mxu0 %v1108
        %1126 = vmatpush.bf16.msra.mxu0 %v1107
        %1127 = vmatpush.bf16.msra.mxu0 %v1106
        %1128 = vmatpush.bf16.msra.mxu0 %v1105
        %1129 = vmatmul.bf16.gmra.mxu0 %v992
        %v1130 = vpop.f32.mrf.mxu0
        %v1131 = vadd.f32 %v1065, %v1130
        %v1132 = vpop.f32.mrf.mxu0
        %1133 = vdwg.mxu0
        %v1150 = vunpack.c.l.b16 %v1009
        %v1151 = vunpack.c.l.b16 %v1010
        %v1152 = vunpack.c.l.b16 %v1011
        %v1153 = vunpack.c.l.b16 %v1012
        %v1154 = vunpack.c.l.b16 %v1013
        %v1155 = vunpack.c.l.b16 %v1014
        %v1156 = vunpack.c.l.b16 %v1015
        %v1157 = vunpack.c.l.b16 %v1016
        %v1158 = vunpack.c.l.b16 %v1017
        %v1159 = vunpack.c.l.b16 %v1018
        %v1160 = vunpack.c.l.b16 %v1019
        %v1161 = vunpack.c.l.b16 %v1020
        %v1162 = vunpack.c.l.b16 %v1021
        %v1163 = vunpack.c.l.b16 %v1022
        %v1164 = vunpack.c.l.b16 %v1023
        %v1165 = vunpack.c.l.b16 %v1024
        %v1166 = vpack.c.b16 %v1151, %v1150
        %v1167 = vpack.c.b16 %v1153, %v1152
        %v1168 = vpack.c.b16 %v1155, %v1154
        %v1169 = vpack.c.b16 %v1157, %v1156
        %v1170 = vpack.c.b16 %v1159, %v1158
        %v1171 = vpack.c.b16 %v1161, %v1160
        %v1172 = vpack.c.b16 %v1163, %v1162
        %v1173 = vpack.c.b16 %v1165, %v1164
        %1182 = vmatpush.bf16.msra.mxu0 %v1173
        %1183 = vmatpush.bf16.msra.mxu0 %v1172
        %1184 = vmatpush.bf16.msra.mxu0 %v1171
        %1185 = vmatpush.bf16.msra.mxu0 %v1170
        %1186 = vmatpush.bf16.msra.mxu0 %v1169
        %1187 = vmatpush.bf16.msra.mxu0 %v1168
        %1188 = vmatpush.bf16.msra.mxu0 %v1167
        %1189 = vmatpush.bf16.msra.mxu0 %v1166
        %1190 = vmatmul.bf16.gmra.mxu0 %v992
        %v1191 = vpop.f32.mrf.mxu0
        %v1192 = vadd.f32 %v1066, %v1191
        %v1193 = vpop.f32.mrf.mxu0
        %1194 = vdwg.mxu0
        %v1211 = vunpack.c.l.b16 %v1025
        %v1212 = vunpack.c.l.b16 %v1026
        %v1213 = vunpack.c.l.b16 %v1027
        %v1214 = vunpack.c.l.b16 %v1028
        %v1215 = vunpack.c.l.b16 %v1029
        %v1216 = vunpack.c.l.b16 %v1030
        %v1217 = vunpack.c.l.b16 %v1031
        %v1218 = vunpack.c.l.b16 %v1032
        %v1219 = vunpack.c.l.b16 %v1033
        %v1220 = vunpack.c.l.b16 %v1034
        %v1221 = vunpack.c.l.b16 %v1035
        %v1222 = vunpack.c.l.b16 %v1036
        %v1223 = vunpack.c.l.b16 %v1037
        %v1224 = vunpack.c.l.b16 %v1038
        %v1225 = vunpack.c.l.b16 %v1039
        %v1226 = vunpack.c.l.b16 %v1040
        %v1227 = vpack.c.b16 %v1212, %v1211
        %v1228 = vpack.c.b16 %v1214, %v1213
        %v1229 = vpack.c.b16 %v1216, %v1215
        %v1230 = vpack.c.b16 %v1218, %v1217
        %v1231 = vpack.c.b16 %v1220, %v1219
        %v1232 = vpack.c.b16 %v1222, %v1221
        %v1233 = vpack.c.b16 %v1224, %v1223
        %v1234 = vpack.c.b16 %v1226, %v1225
        %1243 = vmatpush.bf16.msra.mxu0 %v1234
        %1244 = vmatpush.bf16.msra.mxu0 %v1233
        %1245 = vmatpush.bf16.msra.mxu0 %v1232
        %1246 = vmatpush.bf16.msra.mxu0 %v1231
        %1247 = vmatpush.bf16.msra.mxu0 %v1230
        %1248 = vmatpush.bf16.msra.mxu0 %v1229
        %1249 = vmatpush.bf16.msra.mxu0 %v1228
        %1250 = vmatpush.bf16.msra.mxu0 %v1227
        %1251 = vmatmul.bf16.gmra.mxu0 %v992
        %v1252 = vpop.f32.mrf.mxu0
        %v1253 = vadd.f32 %v1067, %v1252
        %v1254 = vpop.f32.mrf.mxu0
        %1255 = vdwg.mxu0
        %v1272 = vunpack.c.l.b16 %v1041
        %v1273 = vunpack.c.l.b16 %v1042
        %v1274 = vunpack.c.l.b16 %v1043
        %v1275 = vunpack.c.l.b16 %v1044
        %v1276 = vunpack.c.l.b16 %v1045
        %v1277 = vunpack.c.l.b16 %v1046
        %v1278 = vunpack.c.l.b16 %v1047
        %v1279 = vunpack.c.l.b16 %v1048
        %v1280 = vunpack.c.l.b16 %v1049
        %v1281 = vunpack.c.l.b16 %v1050
        %v1282 = vunpack.c.l.b16 %v1051
        %v1283 = vunpack.c.l.b16 %v1052
        %v1284 = vunpack.c.l.b16 %v1053
        %v1285 = vunpack.c.l.b16 %v1054
        %v1286 = vunpack.c.l.b16 %v1055
        %v1287 = vunpack.c.l.b16 %v1056
        %v1288 = vpack.c.b16 %v1273, %v1272
        %v1289 = vpack.c.b16 %v1275, %v1274
        %v1290 = vpack.c.b16 %v1277, %v1276
        %v1291 = vpack.c.b16 %v1279, %v1278
        %v1292 = vpack.c.b16 %v1281, %v1280
        %v1293 = vpack.c.b16 %v1283, %v1282
        %v1294 = vpack.c.b16 %v1285, %v1284
        %v1295 = vpack.c.b16 %v1287, %v1286
        %1304 = vmatpush.bf16.msra.mxu0 %v1295
        %1305 = vmatpush.bf16.msra.mxu0 %v1294
        %1306 = vmatpush.bf16.msra.mxu0 %v1293
        %1307 = vmatpush.bf16.msra.mxu0 %v1292
        %1308 = vmatpush.bf16.msra.mxu0 %v1291
        %1309 = vmatpush.bf16.msra.mxu0 %v1290
        %1310 = vmatpush.bf16.msra.mxu0 %v1289
        %1311 = vmatpush.bf16.msra.mxu0 %v1288
        %1312 = vmatmul.bf16.gmra.mxu0 %v992
        %v1313 = vpop.f32.mrf.mxu0
        %v1314 = vadd.f32 %v1068, %v1313
        %v1315 = vpop.f32.mrf.mxu0
        %1316 = vdwg.mxu0
        %v1317 = vld [vmem:[%s753] sm:$0xf]
        %v1318 = vld [vmem:[%s753 + $0x4] sm:$0xf]
        %v1319 = vld [vmem:[%s753 + $0x8] sm:$0xf]
        %v1320 = vld [vmem:[%s753 + $0xc] sm:$0xf]
        %v1321 = vld [vmem:[%s753 + $0x10] sm:$0xf]
        %v1322 = vld [vmem:[%s753 + $0x14] sm:$0xf]
        %v1323 = vld [vmem:[%s753 + $0x18] sm:$0xf]
        %v1324 = vld [vmem:[%s753 + $0x1c] sm:$0xf]
        %v1325 = vld [vmem:[%s753 + $0x20] sm:$0xf]
        %v1326 = vld [vmem:[%s753 + $0x24] sm:$0xf]
        %v1327 = vld [vmem:[%s753 + $0x28] sm:$0xf]
        %v1328 = vld [vmem:[%s753 + $0x2c] sm:$0xf]
        %v1329 = vld [vmem:[%s753 + $0x30] sm:$0xf]
        %v1330 = vld [vmem:[%s753 + $0x34] sm:$0xf]
        %v1331 = vld [vmem:[%s753 + $0x38] sm:$0xf]
        %v1332 = vld [vmem:[%s753 + $0x3c] sm:$0xf]
        %v1333 = vld [vmem:[%s753 + $0x40] sm:$0xf]
        %v1334 = vld [vmem:[%s753 + $0x44] sm:$0xf]
        %v1335 = vld [vmem:[%s753 + $0x48] sm:$0xf]
        %v1336 = vld [vmem:[%s753 + $0x4c] sm:$0xf]
        %v1337 = vld [vmem:[%s753 + $0x50] sm:$0xf]
        %v1338 = vld [vmem:[%s753 + $0x54] sm:$0xf]
        %v1339 = vld [vmem:[%s753 + $0x58] sm:$0xf]
        %v1340 = vld [vmem:[%s753 + $0x5c] sm:$0xf]
        %v1341 = vld [vmem:[%s753 + $0x60] sm:$0xf]
        %v1342 = vld [vmem:[%s753 + $0x64] sm:$0xf]
        %v1343 = vld [vmem:[%s753 + $0x68] sm:$0xf]
        %v1344 = vld [vmem:[%s753 + $0x6c] sm:$0xf]
        %v1345 = vld [vmem:[%s753 + $0x70] sm:$0xf]
        %v1346 = vld [vmem:[%s753 + $0x74] sm:$0xf]
        %v1347 = vld [vmem:[%s753 + $0x78] sm:$0xf]
        %v1348 = vld [vmem:[%s753 + $0x7c] sm:$0xf]
        %v1349 = vld [vmem:[%s753 + $0x80] sm:$0xf]
        %v1350 = vld [vmem:[%s753 + $0x84] sm:$0xf]
        %v1351 = vld [vmem:[%s753 + $0x88] sm:$0xf]
        %v1352 = vld [vmem:[%s753 + $0x8c] sm:$0xf]
        %v1353 = vld [vmem:[%s753 + $0x90] sm:$0xf]
        %v1354 = vld [vmem:[%s753 + $0x94] sm:$0xf]
        %v1355 = vld [vmem:[%s753 + $0x98] sm:$0xf]
        %v1356 = vld [vmem:[%s753 + $0x9c] sm:$0xf]
        %v1357 = vld [vmem:[%s753 + $0xa0] sm:$0xf]
        %v1358 = vld [vmem:[%s753 + $0xa4] sm:$0xf]
        %v1359 = vld [vmem:[%s753 + $0xa8] sm:$0xf]
        %v1360 = vld [vmem:[%s753 + $0xac] sm:$0xf]
        %v1361 = vld [vmem:[%s753 + $0xb0] sm:$0xf]
        %v1362 = vld [vmem:[%s753 + $0xb4] sm:$0xf]
        %v1363 = vld [vmem:[%s753 + $0xb8] sm:$0xf]
        %v1364 = vld [vmem:[%s753 + $0xbc] sm:$0xf]
        %v1365 = vld [vmem:[%s753 + $0xc0] sm:$0xf]
        %v1366 = vld [vmem:[%s753 + $0xc4] sm:$0xf]
        %v1367 = vld [vmem:[%s753 + $0xc8] sm:$0xf]
        %v1368 = vld [vmem:[%s753 + $0xcc] sm:$0xf]
        %v1369 = vld [vmem:[%s753 + $0xd0] sm:$0xf]
        %v1370 = vld [vmem:[%s753 + $0xd4] sm:$0xf]
        %v1371 = vld [vmem:[%s753 + $0xd8] sm:$0xf]
        %v1372 = vld [vmem:[%s753 + $0xdc] sm:$0xf]
        %v1373 = vld [vmem:[%s753 + $0xe0] sm:$0xf]
        %v1374 = vld [vmem:[%s753 + $0xe4] sm:$0xf]
        %v1375 = vld [vmem:[%s753 + $0xe8] sm:$0xf]
        %v1376 = vld [vmem:[%s753 + $0xec] sm:$0xf]
        %v1377 = vld [vmem:[%s753 + $0xf0] sm:$0xf]
        %v1378 = vld [vmem:[%s753 + $0xf4] sm:$0xf]
        %v1379 = vld [vmem:[%s753 + $0xf8] sm:$0xf]
        %v1380 = vld [vmem:[%s753 + $0xfc] sm:$0xf]
        %v1381 = vld [vmem:[%s913] sm:$0x1]
        %v1382 = vld [vmem:[%s913 + $0x1] sm:$0x1]
        %v1383 = vld [vmem:[%s913 + $0x2] sm:$0x1]
        %v1384 = vld [vmem:[%s913 + $0x3] sm:$0x1]
        %v1389 = vperm.slane %v1381, 0
        %v1390 = vperm.slane %v1382, 0
        %v1391 = vperm.slane %v1383, 0
        %v1392 = vperm.slane %v1384, 0
        %v1413 = vunpack.c.l.b16 %v1317
        %v1414 = vunpack.c.l.b16 %v1318
        %v1415 = vunpack.c.l.b16 %v1319
        %v1416 = vunpack.c.l.b16 %v1320
        %v1417 = vunpack.c.l.b16 %v1321
        %v1418 = vunpack.c.l.b16 %v1322
        %v1419 = vunpack.c.l.b16 %v1323
        %v1420 = vunpack.c.l.b16 %v1324
        %v1421 = vunpack.c.l.b16 %v1325
        %v1422 = vunpack.c.l.b16 %v1326
        %v1423 = vunpack.c.l.b16 %v1327
        %v1424 = vunpack.c.l.b16 %v1328
        %v1425 = vunpack.c.l.b16 %v1329
        %v1426 = vunpack.c.l.b16 %v1330
        %v1427 = vunpack.c.l.b16 %v1331
        %v1428 = vunpack.c.l.b16 %v1332
        %v1429 = vpack.c.b16 %v1414, %v1413
        %v1430 = vpack.c.b16 %v1416, %v1415
        %v1431 = vpack.c.b16 %v1418, %v1417
        %v1432 = vpack.c.b16 %v1420, %v1419
        %v1433 = vpack.c.b16 %v1422, %v1421
        %v1434 = vpack.c.b16 %v1424, %v1423
        %v1435 = vpack.c.b16 %v1426, %v1425
        %v1436 = vpack.c.b16 %v1428, %v1427
        %1445 = vmatpush.bf16.msra.mxu0 %v1436
        %1446 = vmatpush.bf16.msra.mxu0 %v1435
        %1447 = vmatpush.bf16.msra.mxu0 %v1434
        %1448 = vmatpush.bf16.msra.mxu0 %v1433
        %1449 = vmatpush.bf16.msra.mxu0 %v1432
        %1450 = vmatpush.bf16.msra.mxu0 %v1431
        %1451 = vmatpush.bf16.msra.mxu0 %v1430
        %1452 = vmatpush.bf16.msra.mxu0 %v1429
        %1453 = vmatmul.bf16.gmra.mxu0 %v992
        %v1454 = vpop.f32.mrf.mxu0
        %v1455 = vadd.f32 %v1389, %v1454
        %v1456 = vpop.f32.mrf.mxu0
        %1457 = vdwg.mxu0
        %v1474 = vunpack.c.l.b16 %v1333
        %v1475 = vunpack.c.l.b16 %v1334
        %v1476 = vunpack.c.l.b16 %v1335
        %v1477 = vunpack.c.l.b16 %v1336
        %v1478 = vunpack.c.l.b16 %v1337
        %v1479 = vunpack.c.l.b16 %v1338
        %v1480 = vunpack.c.l.b16 %v1339
        %v1481 = vunpack.c.l.b16 %v1340
        %v1482 = vunpack.c.l.b16 %v1341
        %v1483 = vunpack.c.l.b16 %v1342
        %v1484 = vunpack.c.l.b16 %v1343
        %v1485 = vunpack.c.l.b16 %v1344
        %v1486 = vunpack.c.l.b16 %v1345
        %v1487 = vunpack.c.l.b16 %v1346
        %v1488 = vunpack.c.l.b16 %v1347
        %v1489 = vunpack.c.l.b16 %v1348
        %v1490 = vpack.c.b16 %v1475, %v1474
        %v1491 = vpack.c.b16 %v1477, %v1476
        %v1492 = vpack.c.b16 %v1479, %v1478
        %v1493 = vpack.c.b16 %v1481, %v1480
        %v1494 = vpack.c.b16 %v1483, %v1482
        %v1495 = vpack.c.b16 %v1485, %v1484
        %v1496 = vpack.c.b16 %v1487, %v1486
        %v1497 = vpack.c.b16 %v1489, %v1488
        %1506 = vmatpush.bf16.msra.mxu0 %v1497
        %1507 = vmatpush.bf16.msra.mxu0 %v1496
        %1508 = vmatpush.bf16.msra.mxu0 %v1495
        %1509 = vmatpush.bf16.msra.mxu0 %v1494
        %1510 = vmatpush.bf16.msra.mxu0 %v1493
        %1511 = vmatpush.bf16.msra.mxu0 %v1492
        %1512 = vmatpush.bf16.msra.mxu0 %v1491
        %1513 = vmatpush.bf16.msra.mxu0 %v1490
        %1514 = vmatmul.bf16.gmra.mxu0 %v992
        %v1515 = vpop.f32.mrf.mxu0
        %v1516 = vadd.f32 %v1390, %v1515
        %v1517 = vpop.f32.mrf.mxu0
        %1518 = vdwg.mxu0
        %v1535 = vunpack.c.l.b16 %v1349
        %v1536 = vunpack.c.l.b16 %v1350
        %v1537 = vunpack.c.l.b16 %v1351
        %v1538 = vunpack.c.l.b16 %v1352
        %v1539 = vunpack.c.l.b16 %v1353
        %v1540 = vunpack.c.l.b16 %v1354
        %v1541 = vunpack.c.l.b16 %v1355
        %v1542 = vunpack.c.l.b16 %v1356
        %v1543 = vunpack.c.l.b16 %v1357
        %v1544 = vunpack.c.l.b16 %v1358
        %v1545 = vunpack.c.l.b16 %v1359
        %v1546 = vunpack.c.l.b16 %v1360
        %v1547 = vunpack.c.l.b16 %v1361
        %v1548 = vunpack.c.l.b16 %v1362
        %v1549 = vunpack.c.l.b16 %v1363
        %v1550 = vunpack.c.l.b16 %v1364
        %v1551 = vpack.c.b16 %v1536, %v1535
        %v1552 = vpack.c.b16 %v1538, %v1537
        %v1553 = vpack.c.b16 %v1540, %v1539
        %v1554 = vpack.c.b16 %v1542, %v1541
        %v1555 = vpack.c.b16 %v1544, %v1543
        %v1556 = vpack.c.b16 %v1546, %v1545
        %v1557 = vpack.c.b16 %v1548, %v1547
        %v1558 = vpack.c.b16 %v1550, %v1549
        %1567 = vmatpush.bf16.msra.mxu0 %v1558
        %1568 = vmatpush.bf16.msra.mxu0 %v1557
        %1569 = vmatpush.bf16.msra.mxu0 %v1556
        %1570 = vmatpush.bf16.msra.mxu0 %v1555
        %1571 = vmatpush.bf16.msra.mxu0 %v1554
        %1572 = vmatpush.bf16.msra.mxu0 %v1553
        %1573 = vmatpush.bf16.msra.mxu0 %v1552
        %1574 = vmatpush.bf16.msra.mxu0 %v1551
        %1575 = vmatmul.bf16.gmra.mxu0 %v992
        %v1576 = vpop.f32.mrf.mxu0
        %v1577 = vadd.f32 %v1391, %v1576
        %v1578 = vpop.f32.mrf.mxu0
        %1579 = vdwg.mxu0
        %v1596 = vunpack.c.l.b16 %v1365
        %v1597 = vunpack.c.l.b16 %v1366
        %v1598 = vunpack.c.l.b16 %v1367
        %v1599 = vunpack.c.l.b16 %v1368
        %v1600 = vunpack.c.l.b16 %v1369
        %v1601 = vunpack.c.l.b16 %v1370
        %v1602 = vunpack.c.l.b16 %v1371
        %v1603 = vunpack.c.l.b16 %v1372
        %v1604 = vunpack.c.l.b16 %v1373
        %v1605 = vunpack.c.l.b16 %v1374
        %v1606 = vunpack.c.l.b16 %v1375
        %v1607 = vunpack.c.l.b16 %v1376
        %v1608 = vunpack.c.l.b16 %v1377
        %v1609 = vunpack.c.l.b16 %v1378
        %v1610 = vunpack.c.l.b16 %v1379
        %v1611 = vunpack.c.l.b16 %v1380
        %v1612 = vpack.c.b16 %v1597, %v1596
        %v1613 = vpack.c.b16 %v1599, %v1598
        %v1614 = vpack.c.b16 %v1601, %v1600
        %v1615 = vpack.c.b16 %v1603, %v1602
        %v1616 = vpack.c.b16 %v1605, %v1604
        %v1617 = vpack.c.b16 %v1607, %v1606
        %v1618 = vpack.c.b16 %v1609, %v1608
        %v1619 = vpack.c.b16 %v1611, %v1610
        %1628 = vmatpush.bf16.msra.mxu0 %v1619
        %1629 = vmatpush.bf16.msra.mxu0 %v1618
        %1630 = vmatpush.bf16.msra.mxu0 %v1617
        %1631 = vmatpush.bf16.msra.mxu0 %v1616
        %1632 = vmatpush.bf16.msra.mxu0 %v1615
        %1633 = vmatpush.bf16.msra.mxu0 %v1614
        %1634 = vmatpush.bf16.msra.mxu0 %v1613
        %1635 = vmatpush.bf16.msra.mxu0 %v1612
        %1636 = vmatmul.bf16.gmra.mxu0 %v992
        %v1637 = vpop.f32.mrf.mxu0
        %v1638 = vadd.f32 %v1392, %v1637
        %v1639 = vpop.f32.mrf.mxu0
        %1640 = vdwg.mxu0
        %v1641 = vld [vmem:[%s763] sm:$0xf]
        %v1642 = vld [vmem:[%s763 + $0x4] sm:$0xf]
        %v1643 = vld [vmem:[%s763 + $0x8] sm:$0xf]
        %v1644 = vld [vmem:[%s763 + $0xc] sm:$0xf]
        %v1645 = vld [vmem:[%s763 + $0x10] sm:$0xf]
        %v1646 = vld [vmem:[%s763 + $0x14] sm:$0xf]
        %v1647 = vld [vmem:[%s763 + $0x18] sm:$0xf]
        %v1648 = vld [vmem:[%s763 + $0x1c] sm:$0xf]
        %v1649 = vld [vmem:[%s763 + $0x20] sm:$0xf]
        %v1650 = vld [vmem:[%s763 + $0x24] sm:$0xf]
        %v1651 = vld [vmem:[%s763 + $0x28] sm:$0xf]
        %v1652 = vld [vmem:[%s763 + $0x2c] sm:$0xf]
        %v1653 = vld [vmem:[%s763 + $0x30] sm:$0xf]
        %v1654 = vld [vmem:[%s763 + $0x34] sm:$0xf]
        %v1655 = vld [vmem:[%s763 + $0x38] sm:$0xf]
        %v1656 = vld [vmem:[%s763 + $0x3c] sm:$0xf]
        %v1657 = vld [vmem:[%s763 + $0x40] sm:$0xf]
        %v1658 = vld [vmem:[%s763 + $0x44] sm:$0xf]
        %v1659 = vld [vmem:[%s763 + $0x48] sm:$0xf]
        %v1660 = vld [vmem:[%s763 + $0x4c] sm:$0xf]
        %v1661 = vld [vmem:[%s763 + $0x50] sm:$0xf]
        %v1662 = vld [vmem:[%s763 + $0x54] sm:$0xf]
        %v1663 = vld [vmem:[%s763 + $0x58] sm:$0xf]
        %v1664 = vld [vmem:[%s763 + $0x5c] sm:$0xf]
        %v1665 = vld [vmem:[%s763 + $0x60] sm:$0xf]
        %v1666 = vld [vmem:[%s763 + $0x64] sm:$0xf]
        %v1667 = vld [vmem:[%s763 + $0x68] sm:$0xf]
        %v1668 = vld [vmem:[%s763 + $0x6c] sm:$0xf]
        %v1669 = vld [vmem:[%s763 + $0x70] sm:$0xf]
        %v1670 = vld [vmem:[%s763 + $0x74] sm:$0xf]
        %v1671 = vld [vmem:[%s763 + $0x78] sm:$0xf]
        %v1672 = vld [vmem:[%s763 + $0x7c] sm:$0xf]
        %v1673 = vld [vmem:[%s763 + $0x80] sm:$0xf]
        %v1674 = vld [vmem:[%s763 + $0x84] sm:$0xf]
        %v1675 = vld [vmem:[%s763 + $0x88] sm:$0xf]
        %v1676 = vld [vmem:[%s763 + $0x8c] sm:$0xf]
        %v1677 = vld [vmem:[%s763 + $0x90] sm:$0xf]
        %v1678 = vld [vmem:[%s763 + $0x94] sm:$0xf]
        %v1679 = vld [vmem:[%s763 + $0x98] sm:$0xf]
        %v1680 = vld [vmem:[%s763 + $0x9c] sm:$0xf]
        %v1681 = vld [vmem:[%s763 + $0xa0] sm:$0xf]
        %v1682 = vld [vmem:[%s763 + $0xa4] sm:$0xf]
        %v1683 = vld [vmem:[%s763 + $0xa8] sm:$0xf]
        %v1684 = vld [vmem:[%s763 + $0xac] sm:$0xf]
        %v1685 = vld [vmem:[%s763 + $0xb0] sm:$0xf]
        %v1686 = vld [vmem:[%s763 + $0xb4] sm:$0xf]
        %v1687 = vld [vmem:[%s763 + $0xb8] sm:$0xf]
        %v1688 = vld [vmem:[%s763 + $0xbc] sm:$0xf]
        %v1689 = vld [vmem:[%s763 + $0xc0] sm:$0xf]
        %v1690 = vld [vmem:[%s763 + $0xc4] sm:$0xf]
        %v1691 = vld [vmem:[%s763 + $0xc8] sm:$0xf]
        %v1692 = vld [vmem:[%s763 + $0xcc] sm:$0xf]
        %v1693 = vld [vmem:[%s763 + $0xd0] sm:$0xf]
        %v1694 = vld [vmem:[%s763 + $0xd4] sm:$0xf]
        %v1695 = vld [vmem:[%s763 + $0xd8] sm:$0xf]
        %v1696 = vld [vmem:[%s763 + $0xdc] sm:$0xf]
        %v1697 = vld [vmem:[%s763 + $0xe0] sm:$0xf]
        %v1698 = vld [vmem:[%s763 + $0xe4] sm:$0xf]
        %v1699 = vld [vmem:[%s763 + $0xe8] sm:$0xf]
        %v1700 = vld [vmem:[%s763 + $0xec] sm:$0xf]
        %v1701 = vld [vmem:[%s763 + $0xf0] sm:$0xf]
        %v1702 = vld [vmem:[%s763 + $0xf4] sm:$0xf]
        %v1703 = vld [vmem:[%s763 + $0xf8] sm:$0xf]
        %v1704 = vld [vmem:[%s763 + $0xfc] sm:$0xf]
        %v1705 = vld [vmem:[%s917] sm:$0x1]
        %v1706 = vld [vmem:[%s917 + $0x1] sm:$0x1]
        %v1707 = vld [vmem:[%s917 + $0x2] sm:$0x1]
        %v1708 = vld [vmem:[%s917 + $0x3] sm:$0x1]
        %v1713 = vperm.slane %v1705, 0
        %v1714 = vperm.slane %v1706, 0
        %v1715 = vperm.slane %v1707, 0
        %v1716 = vperm.slane %v1708, 0
        %v1737 = vunpack.c.l.b16 %v1641
        %v1738 = vunpack.c.l.b16 %v1642
        %v1739 = vunpack.c.l.b16 %v1643
        %v1740 = vunpack.c.l.b16 %v1644
        %v1741 = vunpack.c.l.b16 %v1645
        %v1742 = vunpack.c.l.b16 %v1646
        %v1743 = vunpack.c.l.b16 %v1647
        %v1744 = vunpack.c.l.b16 %v1648
        %v1745 = vunpack.c.l.b16 %v1649
        %v1746 = vunpack.c.l.b16 %v1650
        %v1747 = vunpack.c.l.b16 %v1651
        %v1748 = vunpack.c.l.b16 %v1652
        %v1749 = vunpack.c.l.b16 %v1653
        %v1750 = vunpack.c.l.b16 %v1654
        %v1751 = vunpack.c.l.b16 %v1655
        %v1752 = vunpack.c.l.b16 %v1656
        %v1753 = vpack.c.b16 %v1738, %v1737
        %v1754 = vpack.c.b16 %v1740, %v1739
        %v1755 = vpack.c.b16 %v1742, %v1741
        %v1756 = vpack.c.b16 %v1744, %v1743
        %v1757 = vpack.c.b16 %v1746, %v1745
        %v1758 = vpack.c.b16 %v1748, %v1747
        %v1759 = vpack.c.b16 %v1750, %v1749
        %v1760 = vpack.c.b16 %v1752, %v1751
        %1769 = vmatpush.bf16.msra.mxu0 %v1760
        %1770 = vmatpush.bf16.msra.mxu0 %v1759
        %1771 = vmatpush.bf16.msra.mxu0 %v1758
        %1772 = vmatpush.bf16.msra.mxu0 %v1757
        %1773 = vmatpush.bf16.msra.mxu0 %v1756
        %1774 = vmatpush.bf16.msra.mxu0 %v1755
        %1775 = vmatpush.bf16.msra.mxu0 %v1754
        %1776 = vmatpush.bf16.msra.mxu0 %v1753
        %1777 = vmatmul.bf16.gmra.mxu0 %v992
        %v1778 = vpop.f32.mrf.mxu0
        %v1779 = vadd.f32 %v1713, %v1778
        %v1780 = vpop.f32.mrf.mxu0
        %1781 = vdwg.mxu0
        %v1798 = vunpack.c.l.b16 %v1657
        %v1799 = vunpack.c.l.b16 %v1658
        %v1800 = vunpack.c.l.b16 %v1659
        %v1801 = vunpack.c.l.b16 %v1660
        %v1802 = vunpack.c.l.b16 %v1661
        %v1803 = vunpack.c.l.b16 %v1662
        %v1804 = vunpack.c.l.b16 %v1663
        %v1805 = vunpack.c.l.b16 %v1664
        %v1806 = vunpack.c.l.b16 %v1665
        %v1807 = vunpack.c.l.b16 %v1666
        %v1808 = vunpack.c.l.b16 %v1667
        %v1809 = vunpack.c.l.b16 %v1668
        %v1810 = vunpack.c.l.b16 %v1669
        %v1811 = vunpack.c.l.b16 %v1670
        %v1812 = vunpack.c.l.b16 %v1671
        %v1813 = vunpack.c.l.b16 %v1672
        %v1814 = vpack.c.b16 %v1799, %v1798
        %v1815 = vpack.c.b16 %v1801, %v1800
        %v1816 = vpack.c.b16 %v1803, %v1802
        %v1817 = vpack.c.b16 %v1805, %v1804
        %v1818 = vpack.c.b16 %v1807, %v1806
        %v1819 = vpack.c.b16 %v1809, %v1808
        %v1820 = vpack.c.b16 %v1811, %v1810
        %v1821 = vpack.c.b16 %v1813, %v1812
        %1830 = vmatpush.bf16.msra.mxu0 %v1821
        %1831 = vmatpush.bf16.msra.mxu0 %v1820
        %1832 = vmatpush.bf16.msra.mxu0 %v1819
        %1833 = vmatpush.bf16.msra.mxu0 %v1818
        %1834 = vmatpush.bf16.msra.mxu0 %v1817
        %1835 = vmatpush.bf16.msra.mxu0 %v1816
        %1836 = vmatpush.bf16.msra.mxu0 %v1815
        %1837 = vmatpush.bf16.msra.mxu0 %v1814
        %1838 = vmatmul.bf16.gmra.mxu0 %v992
        %v1839 = vpop.f32.mrf.mxu0
        %v1840 = vadd.f32 %v1714, %v1839
        %v1841 = vpop.f32.mrf.mxu0
        %1842 = vdwg.mxu0
        %v1859 = vunpack.c.l.b16 %v1673
        %v1860 = vunpack.c.l.b16 %v1674
        %v1861 = vunpack.c.l.b16 %v1675
        %v1862 = vunpack.c.l.b16 %v1676
        %v1863 = vunpack.c.l.b16 %v1677
        %v1864 = vunpack.c.l.b16 %v1678
        %v1865 = vunpack.c.l.b16 %v1679
        %v1866 = vunpack.c.l.b16 %v1680
        %v1867 = vunpack.c.l.b16 %v1681
        %v1868 = vunpack.c.l.b16 %v1682
        %v1869 = vunpack.c.l.b16 %v1683
        %v1870 = vunpack.c.l.b16 %v1684
        %v1871 = vunpack.c.l.b16 %v1685
        %v1872 = vunpack.c.l.b16 %v1686
        %v1873 = vunpack.c.l.b16 %v1687
        %v1874 = vunpack.c.l.b16 %v1688
        %v1875 = vpack.c.b16 %v1860, %v1859
        %v1876 = vpack.c.b16 %v1862, %v1861
        %v1877 = vpack.c.b16 %v1864, %v1863
        %v1878 = vpack.c.b16 %v1866, %v1865
        %v1879 = vpack.c.b16 %v1868, %v1867
        %v1880 = vpack.c.b16 %v1870, %v1869
        %v1881 = vpack.c.b16 %v1872, %v1871
        %v1882 = vpack.c.b16 %v1874, %v1873
        %1891 = vmatpush.bf16.msra.mxu0 %v1882
        %1892 = vmatpush.bf16.msra.mxu0 %v1881
        %1893 = vmatpush.bf16.msra.mxu0 %v1880
        %1894 = vmatpush.bf16.msra.mxu0 %v1879
        %1895 = vmatpush.bf16.msra.mxu0 %v1878
        %1896 = vmatpush.bf16.msra.mxu0 %v1877
        %1897 = vmatpush.bf16.msra.mxu0 %v1876
        %1898 = vmatpush.bf16.msra.mxu0 %v1875
        %1899 = vmatmul.bf16.gmra.mxu0 %v992
        %v1900 = vpop.f32.mrf.mxu0
        %v1901 = vadd.f32 %v1715, %v1900
        %v1902 = vpop.f32.mrf.mxu0
        %1903 = vdwg.mxu0
        %v1920 = vunpack.c.l.b16 %v1689
        %v1921 = vunpack.c.l.b16 %v1690
        %v1922 = vunpack.c.l.b16 %v1691
        %v1923 = vunpack.c.l.b16 %v1692
        %v1924 = vunpack.c.l.b16 %v1693
        %v1925 = vunpack.c.l.b16 %v1694
        %v1926 = vunpack.c.l.b16 %v1695
        %v1927 = vunpack.c.l.b16 %v1696
        %v1928 = vunpack.c.l.b16 %v1697
        %v1929 = vunpack.c.l.b16 %v1698
        %v1930 = vunpack.c.l.b16 %v1699
        %v1931 = vunpack.c.l.b16 %v1700
        %v1932 = vunpack.c.l.b16 %v1701
        %v1933 = vunpack.c.l.b16 %v1702
        %v1934 = vunpack.c.l.b16 %v1703
        %v1935 = vunpack.c.l.b16 %v1704
        %v1936 = vpack.c.b16 %v1921, %v1920
        %v1937 = vpack.c.b16 %v1923, %v1922
        %v1938 = vpack.c.b16 %v1925, %v1924
        %v1939 = vpack.c.b16 %v1927, %v1926
        %v1940 = vpack.c.b16 %v1929, %v1928
        %v1941 = vpack.c.b16 %v1931, %v1930
        %v1942 = vpack.c.b16 %v1933, %v1932
        %v1943 = vpack.c.b16 %v1935, %v1934
        %1952 = vmatpush.bf16.msra.mxu0 %v1943
        %1953 = vmatpush.bf16.msra.mxu0 %v1942
        %1954 = vmatpush.bf16.msra.mxu0 %v1941
        %1955 = vmatpush.bf16.msra.mxu0 %v1940
        %1956 = vmatpush.bf16.msra.mxu0 %v1939
        %1957 = vmatpush.bf16.msra.mxu0 %v1938
        %1958 = vmatpush.bf16.msra.mxu0 %v1937
        %1959 = vmatpush.bf16.msra.mxu0 %v1936
        %1960 = vmatmul.bf16.gmra.mxu0 %v992
        %v1961 = vpop.f32.mrf.mxu0
        %v1962 = vadd.f32 %v1716, %v1961
        %v1963 = vpop.f32.mrf.mxu0
        %1964 = vdwg.mxu0
        %v1965 = vmul.f32 %v1131, 0.17677669
        %v1966 = vmul.f32 %v1192, 0.17677669
        %v1967 = vmul.f32 %v1253, 0.17677669
        %v1968 = vmul.f32 %v1314, 0.17677669
        %v1969 = vpack.c.bf16 %v1965, %v1965
        %v1970 = vpack.c.bf16 %v1966, %v1966
        %v1971 = vpack.c.bf16 %v1967, %v1967
        %v1972 = vpack.c.bf16 %v1968, %v1968
        %v1973 = vpack.c.bf16 %v1455, %v1455
        %v1974 = vpack.c.bf16 %v1516, %v1516
        %v1975 = vpack.c.bf16 %v1577, %v1577
        %v1976 = vpack.c.bf16 %v1638, %v1638
        %vm1977 = vcmask 261120
        %v1979 = vsel %vm1977, %v1969, 0
        %v1982 = vsel %vm1977, %v1973, 0
        %1984 = vmatpush.bf16.xpose.msra.mxu0 0
        %1985 = vmatpush.bf16.xpose.msra.mxu0 0
        %1986 = vmatpush.bf16.xpose.msra.mxu0 0
        %1987 = vmatpush.bf16.xpose.msra.mxu0 0
        %1988 = vmatpush.bf16.xpose.msra.mxu0 0
        %1989 = vmatpush.bf16.xpose.msra.mxu0 0
        %1990 = vmatpush.bf16.xpose.msra.mxu0 0
        %1991 = vmatpush.bf16.xpose.msra.mxu0 %v1982
        %1992 = vmatmul.bf16.gmra.mxu0 %v1979
        %v1993 = vpop.f32.mrf.mxu0
        %v1994 = vadd.f32 0.0, %v1993
        %v1995 = vpop.f32.mrf.mxu0
        %1996 = vdwg.mxu0
        %v1998 = vsel %vm1977, %v1970, 0
        %v2001 = vsel %vm1977, %v1974, 0
        %2003 = vmatpush.bf16.xpose.msra.mxu0 0
        %2004 = vmatpush.bf16.xpose.msra.mxu0 0
        %2005 = vmatpush.bf16.xpose.msra.mxu0 0
        %2006 = vmatpush.bf16.xpose.msra.mxu0 0
        %2007 = vmatpush.bf16.xpose.msra.mxu0 0
        %2008 = vmatpush.bf16.xpose.msra.mxu0 0
        %2009 = vmatpush.bf16.xpose.msra.mxu0 0
        %2010 = vmatpush.bf16.xpose.msra.mxu0 %v2001
        %2011 = vmatmul.bf16.gmra.mxu0 %v1998
        %v2012 = vpop.f32.mrf.mxu0
        %v2013 = vadd.f32 0.0, %v2012
        %v2014 = vpop.f32.mrf.mxu0
        %2015 = vdwg.mxu0
        %v2017 = vsel %vm1977, %v1971, 0
        %v2020 = vsel %vm1977, %v1975, 0
        %2022 = vmatpush.bf16.xpose.msra.mxu0 0
        %2023 = vmatpush.bf16.xpose.msra.mxu0 0
        %2024 = vmatpush.bf16.xpose.msra.mxu0 0
        %2025 = vmatpush.bf16.xpose.msra.mxu0 0
        %2026 = vmatpush.bf16.xpose.msra.mxu0 0
        %2027 = vmatpush.bf16.xpose.msra.mxu0 0
        %2028 = vmatpush.bf16.xpose.msra.mxu0 0
        %2029 = vmatpush.bf16.xpose.msra.mxu0 %v2020
        %2030 = vmatmul.bf16.gmra.mxu0 %v2017
        %v2031 = vpop.f32.mrf.mxu0
        %v2032 = vadd.f32 0.0, %v2031
        %v2033 = vpop.f32.mrf.mxu0
        %2034 = vdwg.mxu0
        %v2036 = vsel %vm1977, %v1972, 0
        %v2039 = vsel %vm1977, %v1976, 0
        %2041 = vmatpush.bf16.xpose.msra.mxu0 0
        %2042 = vmatpush.bf16.xpose.msra.mxu0 0
        %2043 = vmatpush.bf16.xpose.msra.mxu0 0
        %2044 = vmatpush.bf16.xpose.msra.mxu0 0
        %2045 = vmatpush.bf16.xpose.msra.mxu0 0
        %2046 = vmatpush.bf16.xpose.msra.mxu0 0
        %2047 = vmatpush.bf16.xpose.msra.mxu0 0
        %2048 = vmatpush.bf16.xpose.msra.mxu0 %v2039
        %2049 = vmatmul.bf16.gmra.mxu0 %v2036
        %v2050 = vpop.f32.mrf.mxu0
        %v2051 = vadd.f32 0.0, %v2050
        %v2052 = vpop.f32.mrf.mxu0
        %2053 = vdwg.mxu0
        %vm2054 = vcmask 36864
        %v2055 = vsel %vm2054, %v1994, -inf
        %2056 = vmax.xlane.f32.xlu0 %v2055
        %v2057 = vpop.xlane.xlu0 %2056
        %v2058 = vsel %vm2054, %v2013, -inf
        %2059 = vmax.xlane.f32.xlu0 %v2058
        %v2060 = vpop.xlane.xlu0 %2059
        %v2061 = vsel %vm2054, %v2032, -inf
        %2062 = vmax.xlane.f32.xlu0 %v2061
        %v2063 = vpop.xlane.xlu0 %2062
        %v2064 = vsel %vm2054, %v2051, -inf
        %2065 = vmax.xlane.f32.xlu0 %v2064
        %v2066 = vpop.xlane.xlu0 %2065
        %v2067 = vsub.f32 %v1994, %v2057
        %v2068 = vsub.f32 %v2013, %v2060
        %v2069 = vsub.f32 %v2032, %v2063
        %v2070 = vsub.f32 %v2051, %v2066
        %v2071 = vmul.f32 %v2067, 1.442695
        %v2072 = vpow.pop %v2071
        %v2073 = vmul.f32 %v2068, 1.442695
        %v2074 = vpow.pop %v2073
        %v2075 = vmul.f32 %v2069, 1.442695
        %v2076 = vpow.pop %v2075
        %v2077 = vmul.f32 %v2070, 1.442695
        %v2078 = vpow.pop %v2077
        %v2079 = vsel %vm2054, %v2072, 0.0
        %2080 = vadd.xlane.f32.xlu0 %v2079
        %v2081 = vpop.xlane.xlu0 %2080
        %v2082 = vsel %vm2054, %v2074, 0.0
        %2083 = vadd.xlane.f32.xlu0 %v2082
        %v2084 = vpop.xlane.xlu0 %2083
        %v2085 = vsel %vm2054, %v2076, 0.0
        %2086 = vadd.xlane.f32.xlu0 %v2085
        %v2087 = vpop.xlane.xlu0 %2086
        %v2088 = vsel %vm2054, %v2078, 0.0
        %2089 = vadd.xlane.f32.xlu0 %v2088
        %v2090 = vpop.xlane.xlu0 %2089
        %v2091 = vrcp.pop %v2081
        %v2092 = vrcp.pop %v2084
        %v2093 = vrcp.pop %v2087
        %v2094 = vrcp.pop %v2090
        %v2095 = vmul.f32 %v2072, %v2091
        %v2096 = vmul.f32 %v2074, %v2092
        %v2097 = vmul.f32 %v2076, %v2093
        %v2098 = vmul.f32 %v2078, %v2094
        %v2099 = vpack.c.bf16 %v2095, %v2095
        %v2100 = vpack.c.bf16 %v2096, %v2096
        %v2101 = vpack.c.bf16 %v2097, %v2097
        %v2102 = vpack.c.bf16 %v2098, %v2098
        %v2103 = vpack.c.bf16 %v1779, %v1779
        %v2104 = vpack.c.bf16 %v1840, %v1840
        %v2105 = vpack.c.bf16 %v1901, %v1901
        %v2106 = vpack.c.bf16 %v1962, %v1962
        %vm2107 = vcmask 39936
        %v2109 = vsel %vm2107, %v2099, 0
        %vm2111 = vcmask 1041408
        %vm2112 = vcmask 1042432
        %v2113 = vsel %vm2111, 4294967295, 65535
        %v2114 = vsel %vm2112, %v2113, 0
        %v2116 = vand.u32 %v2103, %v2114
        %2118 = vmatpush.bf16.msra.mxu0 0
        %2119 = vmatpush.bf16.msra.mxu0 0
        %2120 = vmatpush.bf16.msra.mxu0 0
        %2121 = vmatpush.bf16.msra.mxu0 0
        %2122 = vmatpush.bf16.msra.mxu0 0
        %2123 = vmatpush.bf16.msra.mxu0 0
        %2124 = vmatpush.bf16.msra.mxu0 0
        %2125 = vmatpush.bf16.msra.mxu0 %v2116
        %2126 = vmatmul.bf16.gmra.mxu0 %v2109
        %v2127 = vpop.f32.mrf.mxu0
        %v2128 = vadd.f32 0.0, %v2127
        %v2129 = vpop.f32.mrf.mxu0
        %2130 = vdwg.mxu0
        %v2132 = vsel %vm2107, %v2100, 0
        %v2135 = vand.u32 %v2104, %v2114
        %2137 = vmatpush.bf16.msra.mxu0 0
        %2138 = vmatpush.bf16.msra.mxu0 0
        %2139 = vmatpush.bf16.msra.mxu0 0
        %2140 = vmatpush.bf16.msra.mxu0 0
        %2141 = vmatpush.bf16.msra.mxu0 0
        %2142 = vmatpush.bf16.msra.mxu0 0
        %2143 = vmatpush.bf16.msra.mxu0 0
        %2144 = vmatpush.bf16.msra.mxu0 %v2135
        %2145 = vmatmul.bf16.gmra.mxu0 %v2132
        %v2146 = vpop.f32.mrf.mxu0
        %v2147 = vadd.f32 0.0, %v2146
        %v2148 = vpop.f32.mrf.mxu0
        %2149 = vdwg.mxu0
        %v2151 = vsel %vm2107, %v2101, 0
        %v2154 = vand.u32 %v2105, %v2114
        %2156 = vmatpush.bf16.msra.mxu0 0
        %2157 = vmatpush.bf16.msra.mxu0 0
        %2158 = vmatpush.bf16.msra.mxu0 0
        %2159 = vmatpush.bf16.msra.mxu0 0
        %2160 = vmatpush.bf16.msra.mxu0 0
        %2161 = vmatpush.bf16.msra.mxu0 0
        %2162 = vmatpush.bf16.msra.mxu0 0
        %2163 = vmatpush.bf16.msra.mxu0 %v2154
        %2164 = vmatmul.bf16.gmra.mxu0 %v2151
        %v2165 = vpop.f32.mrf.mxu0
        %v2166 = vadd.f32 0.0, %v2165
        %v2167 = vpop.f32.mrf.mxu0
        %2168 = vdwg.mxu0
        %v2170 = vsel %vm2107, %v2102, 0
        %v2173 = vand.u32 %v2106, %v2114
        %2175 = vmatpush.bf16.msra.mxu0 0
        %2176 = vmatpush.bf16.msra.mxu0 0
        %2177 = vmatpush.bf16.msra.mxu0 0
        %2178 = vmatpush.bf16.msra.mxu0 0
        %2179 = vmatpush.bf16.msra.mxu0 0
        %2180 = vmatpush.bf16.msra.mxu0 0
        %2181 = vmatpush.bf16.msra.mxu0 0
        %2182 = vmatpush.bf16.msra.mxu0 %v2173
        %2183 = vmatmul.bf16.gmra.mxu0 %v2170
        %v2184 = vpop.f32.mrf.mxu0
        %v2185 = vadd.f32 0.0, %v2184
        %v2186 = vpop.f32.mrf.mxu0
        %2187 = vdwg.mxu0
        %2189 = vrot.lane.b32.xlu0 %v2147, 32
        %v2190 = vpop.permute.xlu0 %2189
        %2193 = vrot.lane.b32.xlu0 %v2166, 64
        %v2194 = vpop.permute.xlu0 %2193
        %2197 = vrot.lane.b32.xlu0 %v2185, 96
        %v2198 = vpop.permute.xlu0 %2197
        %v2200 = vsel %vm1977, %v2128, %v2190
        %vm2201 = vcmask 523264
        %v2202 = vsel %vm2201, %v2200, %v2194
        %vm2203 = vcmask 785408
        %v2204 = vsel %vm2203, %v2202, %v2198
        %v2205 = vpack.c.bf16 %v2204, %v2204
        %v2206 = vld [vmem:[%s922] sm:$0xf]
        %v2207 = vld [vmem:[%s922 + $0x4] sm:$0xf]
        %v2208 = vld [vmem:[%s922 + $0x8] sm:$0xf]
        %v2209 = vld [vmem:[%s922 + $0xc] sm:$0xf]
        %v2210 = vld [vmem:[%s922 + $0x10] sm:$0xf]
        %v2211 = vld [vmem:[%s922 + $0x14] sm:$0xf]
        %v2212 = vld [vmem:[%s922 + $0x18] sm:$0xf]
        %v2213 = vld [vmem:[%s922 + $0x1c] sm:$0xf]
        %v2214 = vld [vmem:[%s922 + $0x20] sm:$0xf]
        %v2215 = vld [vmem:[%s922 + $0x24] sm:$0xf]
        %v2216 = vld [vmem:[%s922 + $0x28] sm:$0xf]
        %v2217 = vld [vmem:[%s922 + $0x2c] sm:$0xf]
        %v2218 = vld [vmem:[%s922 + $0x30] sm:$0xf]
        %v2219 = vld [vmem:[%s922 + $0x34] sm:$0xf]
        %v2220 = vld [vmem:[%s922 + $0x38] sm:$0xf]
        %v2221 = vld [vmem:[%s922 + $0x3c] sm:$0xf]
        %v2222 = vld [vmem:[%s925] sm:$0x1]
        %v2224 = vperm.slane %v2222, 0
        %v2242 = vunpack.c.l.b16 %v2206
        %v2243 = vunpack.c.l.b16 %v2207
        %v2244 = vunpack.c.l.b16 %v2208
        %v2245 = vunpack.c.l.b16 %v2209
        %v2246 = vunpack.c.l.b16 %v2210
        %v2247 = vunpack.c.l.b16 %v2211
        %v2248 = vunpack.c.l.b16 %v2212
        %v2249 = vunpack.c.l.b16 %v2213
        %v2250 = vunpack.c.l.b16 %v2214
        %v2251 = vunpack.c.l.b16 %v2215
        %v2252 = vunpack.c.l.b16 %v2216
        %v2253 = vunpack.c.l.b16 %v2217
        %v2254 = vunpack.c.l.b16 %v2218
        %v2255 = vunpack.c.l.b16 %v2219
        %v2256 = vunpack.c.l.b16 %v2220
        %v2257 = vunpack.c.l.b16 %v2221
        %v2258 = vpack.c.b16 %v2243, %v2242
        %v2259 = vpack.c.b16 %v2245, %v2244
        %v2260 = vpack.c.b16 %v2247, %v2246
        %v2261 = vpack.c.b16 %v2249, %v2248
        %v2262 = vpack.c.b16 %v2251, %v2250
        %v2263 = vpack.c.b16 %v2253, %v2252
        %v2264 = vpack.c.b16 %v2255, %v2254
        %v2265 = vpack.c.b16 %v2257, %v2256
        %2274 = vmatpush.bf16.msra.mxu0 %v2265
        %2275 = vmatpush.bf16.msra.mxu0 %v2264
        %2276 = vmatpush.bf16.msra.mxu0 %v2263
        %2277 = vmatpush.bf16.msra.mxu0 %v2262
        %2278 = vmatpush.bf16.msra.mxu0 %v2261
        %2279 = vmatpush.bf16.msra.mxu0 %v2260
        %2280 = vmatpush.bf16.msra.mxu0 %v2259
        %2281 = vmatpush.bf16.msra.mxu0 %v2258
        %2282 = vmatmul.bf16.gmra.mxu0 %v2205
        %v2283 = vpop.f32.mrf.mxu0
        %v2284 = vadd.f32 %v2224, %v2283
        %v2285 = vpop.f32.mrf.mxu0
        %2286 = vdwg.mxu0
        %v2287 = vadd.f32 %v951, %v2284
        %v2288 = vld [vmem:[%s928] sm:$0x1]
        %v2289 = vld [vmem:[%s931] sm:$0x1]
        %v2290 = vsel %vm954, %v2287, 0.0
        %2291 = vadd.xlane.f32.xlu0 %v2290
        %v2292 = vpop.xlane.xlu0 %2291
        %v2293 = vmul.f32 %v2292, %v964
        %v2294 = vsub.f32 %v2287, %v2293
        %v2295 = vmul.f32 %v2294, %v2294
        %v2296 = vsel %vm954, %v2295, 0.0
        %2297 = vadd.xlane.f32.xlu0 %v2296
        %v2298 = vpop.xlane.xlu0 %2297
        %v2299 = vmul.f32 %v2298, %v964
        %v2300 = vadd.f32 %v2299, 1e-06
        %v2301 = vrsqrt.pop %v2300
        %v2302 = vmul.f32 %v2301, %v2300
        %v2303 = vmul.f32 %v2302, %v2301
        %v2304 = vmul.f32 0.5, %v2303
        %v2305 = vsub.f32 1.5, %v2304
        %v2306 = vmul.f32 %v2301, %v2305
        %vm2307 = vweird.f32 %v2300
        %vm2308 = vweird.f32 %v2301
        %vm2309 = vmor %vm2307, %vm2308
        %v2310 = vsel %vm2309, %v2301, %v2306
        %v2311 = vmul.f32 %v2294, %v2310
        %v2313 = vperm.slane %v2288, 0
        %v2315 = vmul.f32 %v2311, %v2313
        %v2317 = vperm.slane %v2289, 0
        %v2319 = vadd.f32 %v2315, %v2317
        %v2320 = vpack.c.bf16 %v2319, %v2319
        %v2321 = vld [vmem:[%s936] sm:$0xff]
        %v2322 = vld [vmem:[%s936 + $0x8] sm:$0xff]
        %v2323 = vld [vmem:[%s936 + $0x10] sm:$0xff]
        %v2324 = vld [vmem:[%s936 + $0x18] sm:$0xff]
        %v2325 = vld [vmem:[%s936 + $0x20] sm:$0xff]
        %v2326 = vld [vmem:[%s936 + $0x28] sm:$0xff]
        %v2327 = vld [vmem:[%s936 + $0x30] sm:$0xff]
        %v2328 = vld [vmem:[%s936 + $0x38] sm:$0xff]
        %v2329 = vld [vmem:[%s936 + $0x40] sm:$0xff]
        %v2330 = vld [vmem:[%s936 + $0x48] sm:$0xff]
        %v2331 = vld [vmem:[%s936 + $0x50] sm:$0xff]
        %v2332 = vld [vmem:[%s936 + $0x58] sm:$0xff]
        %v2333 = vld [vmem:[%s936 + $0x60] sm:$0xff]
        %v2334 = vld [vmem:[%s936 + $0x68] sm:$0xff]
        %v2335 = vld [vmem:[%s936 + $0x70] sm:$0xff]
        %v2336 = vld [vmem:[%s936 + $0x78] sm:$0xff]
        %v2337 = vld [vmem:[%s940] sm:$0x3]
        %v2339 = vperm.slane %v2337, 0
        %v2340 = vperm.slane %v2337, 1
        %v2359 = vunpack.c.l.b16 %v2321
        %v2360 = vunpack.c.h.b16 %v2321
        %v2361 = vunpack.c.l.b16 %v2322
        %v2362 = vunpack.c.h.b16 %v2322
        %v2363 = vunpack.c.l.b16 %v2323
        %v2364 = vunpack.c.h.b16 %v2323
        %v2365 = vunpack.c.l.b16 %v2324
        %v2366 = vunpack.c.h.b16 %v2324
        %v2367 = vunpack.c.l.b16 %v2325
        %v2368 = vunpack.c.h.b16 %v2325
        %v2369 = vunpack.c.l.b16 %v2326
        %v2370 = vunpack.c.h.b16 %v2326
        %v2371 = vunpack.c.l.b16 %v2327
        %v2372 = vunpack.c.h.b16 %v2327
        %v2373 = vunpack.c.l.b16 %v2328
        %v2374 = vunpack.c.h.b16 %v2328
        %v2375 = vunpack.c.l.b16 %v2329
        %v2376 = vunpack.c.h.b16 %v2329
        %v2377 = vunpack.c.l.b16 %v2330
        %v2378 = vunpack.c.h.b16 %v2330
        %v2379 = vunpack.c.l.b16 %v2331
        %v2380 = vunpack.c.h.b16 %v2331
        %v2381 = vunpack.c.l.b16 %v2332
        %v2382 = vunpack.c.h.b16 %v2332
        %v2383 = vunpack.c.l.b16 %v2333
        %v2384 = vunpack.c.h.b16 %v2333
        %v2385 = vunpack.c.l.b16 %v2334
        %v2386 = vunpack.c.h.b16 %v2334
        %v2387 = vunpack.c.l.b16 %v2335
        %v2388 = vunpack.c.h.b16 %v2335
        %v2389 = vunpack.c.l.b16 %v2336
        %v2390 = vunpack.c.h.b16 %v2336
        %v2391 = vpack.c.b16 %v2361, %v2359
        %v2392 = vpack.c.b16 %v2362, %v2360
        %v2393 = vpack.c.b16 %v2365, %v2363
        %v2394 = vpack.c.b16 %v2366, %v2364
        %v2395 = vpack.c.b16 %v2369, %v2367
        %v2396 = vpack.c.b16 %v2370, %v2368
        %v2397 = vpack.c.b16 %v2373, %v2371
        %v2398 = vpack.c.b16 %v2374, %v2372
        %v2399 = vpack.c.b16 %v2377, %v2375
        %v2400 = vpack.c.b16 %v2378, %v2376
        %v2401 = vpack.c.b16 %v2381, %v2379
        %v2402 = vpack.c.b16 %v2382, %v2380
        %v2403 = vpack.c.b16 %v2385, %v2383
        %v2404 = vpack.c.b16 %v2386, %v2384
        %v2405 = vpack.c.b16 %v2389, %v2387
        %v2406 = vpack.c.b16 %v2390, %v2388
        %2423 = vmatpush.bf16.msra.mxu0 %v2405
        %2424 = vmatpush.bf16.msra.mxu0 %v2403
        %2425 = vmatpush.bf16.msra.mxu0 %v2401
        %2426 = vmatpush.bf16.msra.mxu0 %v2399
        %2427 = vmatpush.bf16.msra.mxu0 %v2397
        %2428 = vmatpush.bf16.msra.mxu0 %v2395
        %2429 = vmatpush.bf16.msra.mxu0 %v2393
        %2430 = vmatpush.bf16.msra.mxu0 %v2391
        %2431 = vmatmul.bf16.gmra.mxu0 %v2320
        %v2432 = vpop.f32.mrf.mxu0
        %v2433 = vadd.f32 %v2339, %v2432
        %v2434 = vpop.f32.mrf.mxu0
        %2435 = vdwg.mxu0
        %2436 = vmatpush.bf16.msra.mxu0 %v2406
        %2437 = vmatpush.bf16.msra.mxu0 %v2404
        %2438 = vmatpush.bf16.msra.mxu0 %v2402
        %2439 = vmatpush.bf16.msra.mxu0 %v2400
        %2440 = vmatpush.bf16.msra.mxu0 %v2398
        %2441 = vmatpush.bf16.msra.mxu0 %v2396
        %2442 = vmatpush.bf16.msra.mxu0 %v2394
        %2443 = vmatpush.bf16.msra.mxu0 %v2392
        %2444 = vmatmul.bf16.gmra.mxu0 %v2320
        %v2445 = vpop.f32.mrf.mxu0
        %v2446 = vadd.f32 %v2340, %v2445
        %v2447 = vpop.f32.mrf.mxu0
        %2448 = vdwg.mxu0
        %v2449 = vmul.f32 %v2433, 0.5
        %v2450 = vmul.f32 %v2446, 0.5
        %v2451 = vmul.f32 %v2433, 0.70710677
        %v2452 = vmul.f32 %v2446, 0.70710677
        %vm2453 = vcmp.ge.f32.partialorder %v2451, 0.0
        %vm2454 = vcmp.ge.f32.partialorder %v2452, 0.0
        %v2455 = vsel %vm2453, 1.0, -1.0
        %v2456 = vsel %vm2454, 1.0, -1.0
        %v2457 = vand.u32 2147483647, %v2451
        %v2458 = vand.u32 2147483647, %v2452
        %v2459 = vmul.f32 %v2457, 0.3275911
        %v2460 = vmul.f32 %v2458, 0.3275911
        %v2461 = vadd.f32 %v2459, 1.0
        %v2462 = vadd.f32 %v2460, 1.0
        %v2463 = vrcp.pop %v2461
        %v2464 = vmul.f32 %v2461, %v2463
        %v2465 = vsub.f32 1.0, %v2464
        %v2466 = vmul.f32 %v2463, %v2465
        %v2467 = vadd.f32 %v2463, %v2466
        %vm2468 = vweird.f32 %v2461
        %vm2469 = vweird.f32 %v2463
        %vm2470 = vmor %vm2468, %vm2469
        %v2471 = vsel %vm2470, %v2463, %v2467
        %v2472 = vand.u32 2147483647, %v2461
        %vm2473 = vcmp.eq.f32.partialorder %v2472, 8.507059e+37
        %v2474 = vand.u32 %v2461, 2147483648
        %v2475 = vor.u32 1.1754944e-38, %v2474
        %v2476 = vsel %vm2473, %v2475, %v2471
        %v2477 = vmul.f32 1.0, %v2476
        %v2478 = vrcp.pop %v2462
        %v2479 = vmul.f32 %v2462, %v2478
        %v2480 = vsub.f32 1.0, %v2479
        %v2481 = vmul.f32 %v2478, %v2480
        %v2482 = vadd.f32 %v2478, %v2481
        %vm2483 = vweird.f32 %v2462
        %vm2484 = vweird.f32 %v2478
        %vm2485 = vmor %vm2483, %vm2484
        %v2486 = vsel %vm2485, %v2478, %v2482
        %v2487 = vand.u32 2147483647, %v2462
        %vm2488 = vcmp.eq.f32.partialorder %v2487, 8.507059e+37
        %v2489 = vand.u32 %v2462, 2147483648
        %v2490 = vor.u32 1.1754944e-38, %v2489
        %v2491 = vsel %vm2488, %v2490, %v2486
        %v2492 = vmul.f32 1.0, %v2491
        %v2493 = vmul.f32 %v2477, 1.0614054
        %v2494 = vmul.f32 %v2492, 1.0614054
        %v2495 = vadd.f32 %v2493, -1.4531521
        %v2496 = vadd.f32 %v2494, -1.4531521
        %v2497 = vmul.f32 %v2495, %v2477
        %v2498 = vmul.f32 %v2496, %v2492
        %v2499 = vadd.f32 %v2497, 1.4214138
        %v2500 = vadd.f32 %v2498, 1.4214138
        %v2501 = vmul.f32 %v2499, %v2477
        %v2502 = vmul.f32 %v2500, %v2492
        %v2503 = vadd.f32 %v2501, -0.28449672
        %v2504 = vadd.f32 %v2502, -0.28449672
        %v2505 = vmul.f32 %v2503, %v2477
        %v2506 = vmul.f32 %v2504, %v2492
        %v2507 = vadd.f32 %v2505, 0.2548296
        %v2508 = vadd.f32 %v2506, 0.2548296
        %v2509 = vmul.f32 %v2507, %v2477
        %v2510 = vmul.f32 %v2508, %v2492
        %v2511 = vsub.f32 0.0, %v2457
        %v2512 = vsub.f32 0.0, %v2458
        %v2513 = vmul.f32 %v2511, %v2457
        %v2514 = vmul.f32 %v2512, %v2458
        %v2515 = vmul.f32 %v2513, 1.442695
        %v2516 = vpow.pop %v2515
        %v2517 = vmul.f32 %v2514, 1.442695
        %v2518 = vpow.pop %v2517
        %v2519 = vmul.f32 %v2509, %v2516
        %v2520 = vmul.f32 %v2510, %v2518
        %v2521 = vsub.f32 1.0, %v2519
        %v2522 = vsub.f32 1.0, %v2520
        %v2523 = vmul.f32 %v2455, %v2521
        %v2524 = vmul.f32 %v2456, %v2522
        %v2525 = vadd.f32 %v2523, 1.0
        %v2526 = vadd.f32 %v2524, 1.0
        %v2527 = vmul.f32 %v2449, %v2525
        %v2528 = vmul.f32 %v2450, %v2526
        %v2529 = vpack.c.bf16 %v2527, %v2527
        %v2530 = vpack.c.bf16 %v2528, %v2528
        %v2531 = vld [vmem:[%s773] sm:$0xf]
        %v2532 = vld [vmem:[%s773 + $0x4] sm:$0xf]
        %v2533 = vld [vmem:[%s773 + $0x8] sm:$0xf]
        %v2534 = vld [vmem:[%s773 + $0xc] sm:$0xf]
        %v2535 = vld [vmem:[%s773 + $0x10] sm:$0xf]
        %v2536 = vld [vmem:[%s773 + $0x14] sm:$0xf]
        %v2537 = vld [vmem:[%s773 + $0x18] sm:$0xf]
        %v2538 = vld [vmem:[%s773 + $0x1c] sm:$0xf]
        %v2539 = vld [vmem:[%s773 + $0x20] sm:$0xf]
        %v2540 = vld [vmem:[%s773 + $0x24] sm:$0xf]
        %v2541 = vld [vmem:[%s773 + $0x28] sm:$0xf]
        %v2542 = vld [vmem:[%s773 + $0x2c] sm:$0xf]
        %v2543 = vld [vmem:[%s773 + $0x30] sm:$0xf]
        %v2544 = vld [vmem:[%s773 + $0x34] sm:$0xf]
        %v2545 = vld [vmem:[%s773 + $0x38] sm:$0xf]
        %v2546 = vld [vmem:[%s773 + $0x3c] sm:$0xf]
        %v2547 = vld [vmem:[%s773 + $0x40] sm:$0xf]
        %v2548 = vld [vmem:[%s773 + $0x44] sm:$0xf]
        %v2549 = vld [vmem:[%s773 + $0x48] sm:$0xf]
        %v2550 = vld [vmem:[%s773 + $0x4c] sm:$0xf]
        %v2551 = vld [vmem:[%s773 + $0x50] sm:$0xf]
        %v2552 = vld [vmem:[%s773 + $0x54] sm:$0xf]
        %v2553 = vld [vmem:[%s773 + $0x58] sm:$0xf]
        %v2554 = vld [vmem:[%s773 + $0x5c] sm:$0xf]
        %v2555 = vld [vmem:[%s773 + $0x60] sm:$0xf]
        %v2556 = vld [vmem:[%s773 + $0x64] sm:$0xf]
        %v2557 = vld [vmem:[%s773 + $0x68] sm:$0xf]
        %v2558 = vld [vmem:[%s773 + $0x6c] sm:$0xf]
        %v2559 = vld [vmem:[%s773 + $0x70] sm:$0xf]
        %v2560 = vld [vmem:[%s773 + $0x74] sm:$0xf]
        %v2561 = vld [vmem:[%s773 + $0x78] sm:$0xf]
        %v2562 = vld [vmem:[%s773 + $0x7c] sm:$0xf]
        %v2563 = vld [vmem:[%s943] sm:$0x1]
        %v2565 = vperm.slane %v2563, 0
        %v2599 = vunpack.c.l.b16 %v2531
        %v2600 = vunpack.c.l.b16 %v2532
        %v2601 = vunpack.c.l.b16 %v2533
        %v2602 = vunpack.c.l.b16 %v2534
        %v2603 = vunpack.c.l.b16 %v2535
        %v2604 = vunpack.c.l.b16 %v2536
        %v2605 = vunpack.c.l.b16 %v2537
        %v2606 = vunpack.c.l.b16 %v2538
        %v2607 = vunpack.c.l.b16 %v2539
        %v2608 = vunpack.c.l.b16 %v2540
        %v2609 = vunpack.c.l.b16 %v2541
        %v2610 = vunpack.c.l.b16 %v2542
        %v2611 = vunpack.c.l.b16 %v2543
        %v2612 = vunpack.c.l.b16 %v2544
        %v2613 = vunpack.c.l.b16 %v2545
        %v2614 = vunpack.c.l.b16 %v2546
        %v2615 = vunpack.c.l.b16 %v2547
        %v2616 = vunpack.c.l.b16 %v2548
        %v2617 = vunpack.c.l.b16 %v2549
        %v2618 = vunpack.c.l.b16 %v2550
        %v2619 = vunpack.c.l.b16 %v2551
        %v2620 = vunpack.c.l.b16 %v2552
        %v2621 = vunpack.c.l.b16 %v2553
        %v2622 = vunpack.c.l.b16 %v2554
        %v2623 = vunpack.c.l.b16 %v2555
        %v2624 = vunpack.c.l.b16 %v2556
        %v2625 = vunpack.c.l.b16 %v2557
        %v2626 = vunpack.c.l.b16 %v2558
        %v2627 = vunpack.c.l.b16 %v2559
        %v2628 = vunpack.c.l.b16 %v2560
        %v2629 = vunpack.c.l.b16 %v2561
        %v2630 = vunpack.c.l.b16 %v2562
        %v2631 = vpack.c.b16 %v2600, %v2599
        %v2632 = vpack.c.b16 %v2602, %v2601
        %v2633 = vpack.c.b16 %v2604, %v2603
        %v2634 = vpack.c.b16 %v2606, %v2605
        %v2635 = vpack.c.b16 %v2608, %v2607
        %v2636 = vpack.c.b16 %v2610, %v2609
        %v2637 = vpack.c.b16 %v2612, %v2611
        %v2638 = vpack.c.b16 %v2614, %v2613
        %v2639 = vpack.c.b16 %v2616, %v2615
        %v2640 = vpack.c.b16 %v2618, %v2617
        %v2641 = vpack.c.b16 %v2620, %v2619
        %v2642 = vpack.c.b16 %v2622, %v2621
        %v2643 = vpack.c.b16 %v2624, %v2623
        %v2644 = vpack.c.b16 %v2626, %v2625
        %v2645 = vpack.c.b16 %v2628, %v2627
        %v2646 = vpack.c.b16 %v2630, %v2629
        %2663 = vmatpush.bf16.msra.mxu0 %v2638
        %2664 = vmatpush.bf16.msra.mxu0 %v2637
        %2665 = vmatpush.bf16.msra.mxu0 %v2636
        %2666 = vmatpush.bf16.msra.mxu0 %v2635
        %2667 = vmatpush.bf16.msra.mxu0 %v2634
        %2668 = vmatpush.bf16.msra.mxu0 %v2633
        %2669 = vmatpush.bf16.msra.mxu0 %v2632
        %2670 = vmatpush.bf16.msra.mxu0 %v2631
        %2671 = vmatmul.bf16.gmra.mxu0 %v2529
        %v2672 = vpop.f32.mrf.mxu0
        %v2673 = vadd.f32 %v2565, %v2672
        %v2674 = vpop.f32.mrf.mxu0
        %2675 = vdwg.mxu0
        %2676 = vmatpush.bf16.msra.mxu0 %v2646
        %2677 = vmatpush.bf16.msra.mxu0 %v2645
        %2678 = vmatpush.bf16.msra.mxu0 %v2644
        %2679 = vmatpush.bf16.msra.mxu0 %v2643
        %2680 = vmatpush.bf16.msra.mxu0 %v2642
        %2681 = vmatpush.bf16.msra.mxu0 %v2641
        %2682 = vmatpush.bf16.msra.mxu0 %v2640
        %2683 = vmatpush.bf16.msra.mxu0 %v2639
        %2684 = vmatmul.bf16.gmra.mxu0 %v2530
        %v2685 = vpop.f32.mrf.mxu0
        %v2686 = vadd.f32 %v2673, %v2685
        %v2687 = vpop.f32.mrf.mxu0
        %2688 = vdwg.mxu0
        %v2689 = vadd.f32 %v2287, %v2686
        %2690 = vst [vmem:[#allocation2] sm:$0x1f] %v2689
        %p2691 = scmp.eq.s32.totalorder %s44, 1
        // Predicated region
        $region113: #{_lambda_.3} parent=95 // pred_check
          %p2692 = pneg %p2691
        $region114: #{_lambda_.3} parent=95 // pred_check_branch
          %2694 = sbr.rel (%p2692) target = $region116
        $region115: #{_lambda_.3} parent=95 // pred_region
          %v2695 = vld [vmem:[%s17] sm:$0x1]
          %v2696 = vld [vmem:[%s18] sm:$0x1]
          %vm2697 = vcmask 1040384
          %v2698 = vsel %vm2697, %v2689, 0.0
          %2699 = vadd.xlane.f32.xlu0 %v2698
          %v2700 = vpop.xlane.xlu0 %2699
          %v2701 = vmul.f32 %v2700, %v964
          %v2702 = vsub.f32 %v2689, %v2701
          %v2703 = vmul.f32 %v2702, %v2702
          %v2704 = vsel %vm2697, %v2703, 0.0
          %2705 = vadd.xlane.f32.xlu0 %v2704
          %v2706 = vpop.xlane.xlu0 %2705
          %v2707 = vmul.f32 %v2706, %v964
          %v2708 = vadd.f32 %v2707, 1e-06
          %v2709 = vrsqrt.pop %v2708
          %v2710 = vmul.f32 %v2709, %v2708
          %v2711 = vmul.f32 %v2710, %v2709
          %v2712 = vmul.f32 0.5, %v2711
          %v2713 = vsub.f32 1.5, %v2712
          %v2714 = vmul.f32 %v2709, %v2713
          %vm2715 = vweird.f32 %v2708
          %vm2716 = vweird.f32 %v2709
          %vm2717 = vmor %vm2715, %vm2716
          %v2718 = vsel %vm2717, %v2709, %v2714
          %v2719 = vmul.f32 %v2702, %v2718
          %v2720 = vmul.f32 %v2719, %v2695
          %v2721 = vadd.f32 %v2720, %v2696
          %2722 = vst [vmem:[%s890] sm:$0x1] %v2721
        $region116: #{_lambda_.3} parent=95 // pred_fallthru
          _
        %s2723 = sand.u32 %s543, 1
        %s2724 = scalar_lea.sflag [#allocation5], %s2723
        %s2725 = sand.u32 %s543, 1
        %s2726 = scalar_lea.vmem [#allocation9], %s2725
        // Predicated region
        $region117: #{_lambda_.3} parent=95 // pred_check
          %p2727 = pneg %p553
        $region118: #{_lambda_.3} parent=95 // pred_check_branch
          %2729 = sbr.rel (%p2727) target = $region120
        $region119: #{_lambda_.3} parent=95 // pred_region
          %2731 = vsyncadd %s2724, 0
          %s2732 = scalar_lea.hbm %s19, %s43
          %s2734 = sshll.u32 %s2726, 4
          %s2735 = int_to_ptr.vmem [resolvable:$true] %s2734
          %s2736 = sshll.u32 %s2732, 4
          %s2737 = int_to_ptr.hbm [resolvable:$true] %s2736
          %2739 = dma.vmem_to_hbm [thread:$0]  %s2735, 16, %s2737, %s2724
        $region120: #{_lambda_.3} parent=95 // pred_fallthru
          _
      $region96: #{_lambda_.3} parent=5 // pred_fallthru
        _
      %p2740 = scmp.le.s32.totalorder 2, %s34
      // Predicated region
      $region121: #{_lambda_.3} parent=5 // pred_check
        %p2741 = pneg %p2740
      $region122: #{_lambda_.3} parent=5 // pred_check_branch
        %2743 = sbr.rel (%p2741) target = $region124
      $region123: #{_lambda_.3} parent=5 // pred_region
        %s2744 = ssub.s32 %s34, 2
        // Predicated region
        $region125: #{_lambda_.3} parent=123 // pred_check
          %p2745 = pneg %p559
        $region126: #{_lambda_.3} parent=123 // pred_check_branch
          %2747 = sbr.rel (%p2745) target = $region128
        $region127: #{_lambda_.3} parent=123 // pred_region
          %s2748 = sand.u32 %s544, 1
          %s2749 = scalar_lea.sflag [#allocation5], %s2748
          %s2750 = sand.u32 %s544, 1
          %s2751 = scalar_lea.vmem [#allocation9], %s2750
          %2753 = dma.done %s2749, 16
        $region128: #{_lambda_.3} parent=123 // pred_fallthru
          _
      $region124: #{_lambda_.3} parent=5 // pred_fallthru
        _
    $region6: #{_lambda_.3} parent=1 // loop_footer
      %s38 = sadd.s32 1, %s34
    $region7: #{_lambda_.3} parent=1 // loop_footer_branch
      %33 = sbr.rel target = $region3
    $region8: #{_lambda_.3} parent=1 // loop_exit
      _
    %2754 = vsyncpa [#allocation4], 1
    %s2755 = scalar_lea.sflag [#allocation4], 1
    %2756 = vsyncpa %s2755, 1
    %2757 = vsyncpa [#allocation7], 1
    %s2758 = scalar_lea.sflag [#allocation7], 1
    %2759 = vsyncpa %s2758, 1
    %2760 = vsyncpa [#allocation5], 1
    %s2761 = scalar_lea.sflag [#allocation5], 1
    %2762 = vsyncpa %s2761, 1

</llo_original>
